<compile_context>
chip_gen: v7x
topology: tpu7x:2x2x1
jax: 0.10.0
libtpu: 0.0.40
codegen_flags: <defaults>
</compile_context>

<pallas_src>
import functools

import numpy as np
import jax
import jax.numpy as jnp
from jax.experimental import pallas as pl
from jax.experimental.pallas import tpu as pltpu


_VMEM = pl.BlockSpec(memory_space=pltpu.MemorySpace.VMEM)


# ----------------------------------------------------------------------------
# Fused kernel: avgpool5x5/s2 -> conv1x1+BN+ReLU -> conv2x2+BN+ReLU -> GAP -> FC
# ----------------------------------------------------------------------------
def _aux_head_kernel(x_ref, pool_ref, w1_ref, b1_ref, w2_ref, b2_ref,
                     gsel_ref, wc_ref, bc_ref, o_ref, *, m1, wo):
    """All refs are whole-array VMEM blocks.

    x_ref    : (B*H*W, F)          input rows, channel-last (f32)
    pool_ref : (m1 + wo + 1, B*H*W) constant 5x5/s2 avg-pool matrix (f32);
                                    trailing wo+1 rows are zero padding so the
                                    conv2 row-shift taps stay in-bounds
    w1_ref   : (F, 2F)             1x1 conv weight, BN scale folded (bf16)
    b1_ref   : (1, 2F)             folded BN bias (f32)
    w2_ref   : (4, 2F, 6F)         2x2 conv taps (dy,dx)=(t//2,t%2), BN folded (bf16)
    b2_ref   : (1, 6F)             folded BN bias (f32)
    gsel_ref : (B, m1)             GAP selector: 1/((Ho-1)*(Wo-1)) on rows that
                                    are valid 2x2-conv outputs, 0 elsewhere (f32)
    wc_ref   : (6F, num_classes)   classifier weight (bf16)
    bc_ref   : (1, num_classes)    classifier bias (f32)
    o_ref    : (B, num_classes)    logits (f32)
    """
    # --- Stage 1: 5x5 stride-2 average pool as one MXU matmul (f32). --------
    pooled = jnp.dot(pool_ref[...], x_ref[...],
                     preferred_element_type=jnp.float32)        # (m1+wo+1, F)

    # --- Stage 2: 1x1 conv (+folded BN) + ReLU. ------------------------------
    h1 = jnp.dot(pooled.astype(jnp.bfloat16), w1_ref[...],
                 preferred_element_type=jnp.float32)            # (m1+wo+1, 2F)
    h1 = jnp.maximum(h1 + b1_ref[...], 0.0)

    # --- Stage 3: 2x2 conv (+folded BN) + ReLU via 4 row-shifted matmuls. ----
    # Row r encodes (b, oh, ow) of the pooled grid; tap (dy, dx) is the same
    # rows shifted by dy*Wo + dx.  Rows whose (oh, ow) fall outside the valid
    # 2x2-conv output range are computed but masked by the GAP selector below.
    acc = None
    for t, s in enumerate((0, 1, wo, wo + 1)):
        part = jnp.dot(h1[s:s + m1, :].astype(jnp.bfloat16), w2_ref[t],
                       preferred_element_type=jnp.float32)      # (m1, 6F)
        acc = part if acc is None else acc + part
    h2 = jnp.maximum(acc + b2_ref[...], 0.0)                    # (m1, 6F)

    # --- Stage 4: global average pool as a selector matmul (masks bad rows). -
    gap = jnp.dot(gsel_ref[...], h2,
                  preferred_element_type=jnp.float32)           # (B, 6F)

    # --- Stage 5: classifier. -------------------------------------------------
    o_ref[...] = jnp.dot(gap.astype(jnp.bfloat16), wc_ref[...],
                         preferred_element_type=jnp.float32) + bc_ref[...]


# ----------------------------------------------------------------------------
# Trace-time constants (pure layout / index arithmetic, no data blow-up)
# ----------------------------------------------------------------------------
def _pool_matrix(batch, h, w, k=5, stride=2):
    """P such that pooled_rows = P @ x_rows, rows flattened over (b, h, w)."""
    ho = (h - k) // stride + 1
    wo = (w - k) // stride + 1
    m1 = batch * ho * wo
    p = np.zeros((m1 + wo + 1, batch * h * w), np.float32)      # zero pad rows
    inv = 1.0 / (k * k)
    for b in range(batch):
        for oh in range(ho):
            for ow in range(wo):
                r = (b * ho + oh) * wo + ow
                for dy in range(k):
                    for dx in range(k):
                        col = (b * h + (stride * oh + dy)) * w + (stride * ow + dx)
                        p[r, col] = inv
    return p, ho, wo


def _gap_selector(batch, ho, wo):
    """S such that gap = S @ h2 (averages the valid 2x2-conv output rows)."""
    h2, w2 = ho - 1, wo - 1
    s = np.zeros((batch, batch * ho * wo), np.float32)
    inv = 1.0 / (h2 * w2)
    for b in range(batch):
        for oh in range(h2):
            for ow in range(w2):
                s[b, (b * ho + oh) * wo + ow] = inv
    return s


# ----------------------------------------------------------------------------
# Deterministic parameter construction (eval-mode BN as running stats)
# ----------------------------------------------------------------------------
def _bn_affine(key, c):
    kg, kb, km, kv = jax.random.split(key, 4)
    gamma = 1.0 + 0.2 * jax.random.uniform(kg, (c,), minval=-1.0, maxval=1.0)
    beta = 0.1 * jax.random.normal(kb, (c,))
    mean = 0.1 * jax.random.normal(km, (c,))
    var = 1.0 + 0.5 * jax.random.uniform(kv, (c,), minval=-1.0, maxval=1.0)
    scale = gamma / jnp.sqrt(var + 1e-5)
    bias = beta - mean * scale
    return scale.astype(jnp.float32), bias.astype(jnp.float32)


def make_aux_head_params(key, filters=96, num_classes=10):
    c1, c2, c6 = filters, 2 * filters, 6 * filters
    ks = jax.random.split(key, 6)
    w1 = jax.random.normal(ks[0], (c1, c2), jnp.float32) / np.sqrt(c1)
    s1, b1 = _bn_affine(ks[1], c2)
    w2 = jax.random.normal(ks[2], (4, c2, c6), jnp.float32) / np.sqrt(4 * c2)
    s2, b2 = _bn_affine(ks[3], c6)
    wc = jax.random.normal(ks[4], (c6, num_classes), jnp.float32) / np.sqrt(c6)
    bc = 0.02 * jax.random.normal(ks[5], (num_classes,), jnp.float32)
    return {'w1': w1, 's1': s1, 'b1': b1,
            'w2': w2, 's2': s2, 'b2': b2,
            'wc': wc, 'bc': bc}


# ----------------------------------------------------------------------------
# Forward wrapper
# ----------------------------------------------------------------------------
@jax.jit
def auxiliary_head_forward(params, x_nchw):
    """AuxiliaryHead forward (eval mode).  NCHW in -> (B, num_classes) logits."""
    b, c1, h, w = x_nchw.shape
    num_classes = params['wc'].shape[1]

    # NCHW -> NHWC -> (B*H*W, F): channel-last rows (lane axis = channels).
    x2d = jnp.transpose(x_nchw, (0, 2, 3, 1)).reshape(b * h * w, c1)
    x2d = x2d.astype(jnp.float32)

    pool_np, ho, wo = _pool_matrix(b, h, w, k=5, stride=2)
    gsel_np = _gap_selector(b, ho, wo)
    m1 = b * ho * wo

    # Fold eval-mode BatchNorm into the conv weights; bf16 matmul operands.
    w1 = (params['w1'] * params['s1'][None, :]).astype(jnp.bfloat16)
    b1 = params['b1'].reshape(1, -1).astype(jnp.float32)
    w2 = (params['w2'] * params['s2'][None, None, :]).astype(jnp.bfloat16)
    b2 = params['b2'].reshape(1, -1).astype(jnp.float32)
    wc = params['wc'].astype(jnp.bfloat16)
    bc = params['bc'].reshape(1, -1).astype(jnp.float32)

    kernel = functools.partial(_aux_head_kernel, m1=m1, wo=wo)
    return pl.pallas_call(
        kernel,
        out_shape=jax.ShapeDtypeStruct((b, num_classes), jnp.float32),
        in_specs=[_VMEM] * 9,
        out_specs=_VMEM,
    )(x2d, jnp.asarray(pool_np), w1, b1, w2, b2, jnp.asarray(gsel_np), wc, bc)


# ----------------------------------------------------------------------------
# Pure-JAX/XLA reference (same folded bf16 weights, f32 compute)
# ----------------------------------------------------------------------------
def reference_forward(params, x_nchw):
    x = x_nchw.astype(jnp.float32)
    w1 = (params['w1'] * params['s1'][None, :]).astype(jnp.bfloat16).astype(jnp.float32)
    w2 = (params['w2'] * params['s2'][None, None, :]).astype(jnp.bfloat16).astype(jnp.float32)
    wc = params['wc'].astype(jnp.bfloat16).astype(jnp.float32)
    b1, b2, bc = params['b1'], params['b2'], params['bc']

    p = jax.lax.reduce_window(x, 0.0, jax.lax.add,
                              (1, 1, 5, 5), (1, 1, 2, 2), 'VALID') / 25.0
    k1 = jnp.transpose(w1, (1, 0))[:, :, None, None]             # (2F, F, 1, 1)
    y = jax.lax.conv_general_dilated(p, k1, (1, 1), 'VALID',
                                     dimension_numbers=('NCHW', 'OIHW', 'NCHW'))
    y = jnp.maximum(y + b1.reshape(1, -1, 1, 1), 0.0)
    c2, c6 = w2.shape[1], w2.shape[2]
    k2 = jnp.transpose(w2.reshape(2, 2, c2, c6), (3, 2, 0, 1))   # (6F, 2F, 2, 2)
    y = jax.lax.conv_general_dilated(y, k2, (1, 1), 'VALID',
                                     dimension_numbers=('NCHW', 'OIHW', 'NCHW'))
    y = jnp.maximum(y + b2.reshape(1, -1, 1, 1), 0.0)
    gap = jnp.mean(y, axis=(2, 3))
    return gap @ wc + bc.reshape(1, -1)


# ----------------------------------------------------------------------------
if __name__ == "__main__":
    filters, num_classes = 96, 10
    B, H, W = 2, 14, 14

    key = jax.random.PRNGKey(0)
    kx, kp = jax.random.split(key)
    x = jax.random.normal(kx, (B, filters, H, W), jnp.float32)
    params = make_aux_head_params(kp, filters=filters, num_classes=num_classes)

    out = jax.block_until_ready(auxiliary_head_forward(params, x))

    assert out.shape == (B, num_classes), out.shape
    assert bool(jnp.all(jnp.isfinite(out)))

    ref = jax.block_until_ready(reference_forward(params, x))
    np.testing.assert_allclose(np.asarray(out), np.asarray(ref),
                               rtol=5e-2, atol=5e-2)
    print("KERNEL_OK")
</pallas_src>

<mosaic_0001>
module attributes {stable_mosaic.version = 11 : i64} {
  func.func @_aux_head_kernel(%arg0: memref<392x96xf32, #tpu.memory_space<vmem>>, %arg1: memref<56x392xf32, #tpu.memory_space<vmem>>, %arg2: memref<96x192xbf16, #tpu.memory_space<vmem>>, %arg3: memref<1x192xf32, #tpu.memory_space<vmem>>, %arg4: memref<4x192x576xbf16, #tpu.memory_space<vmem>>, %arg5: memref<1x576xf32, #tpu.memory_space<vmem>>, %arg6: memref<2x50xf32, #tpu.memory_space<vmem>>, %arg7: memref<576x10xbf16, #tpu.memory_space<vmem>>, %arg8: memref<1x10xf32, #tpu.memory_space<vmem>>, %arg9: memref<2x10xf32, #tpu.memory_space<vmem>>) attributes {dimension_semantics = [], scalar_prefetch = 0 : i64, scratch_operands = 0 : i64, tpu.core_type = #tpu.core_type<tc>} {
    %c0 = arith.constant 0 : index
    %c0_0 = arith.constant 0 : index
    %0 = vector.load %arg1[%c0, %c0_0] : memref<56x392xf32, #tpu.memory_space<vmem>>, vector<56x392xf32>
    %c0_1 = arith.constant 0 : index
    %c0_2 = arith.constant 0 : index
    %1 = vector.load %arg0[%c0_1, %c0_2] : memref<392x96xf32, #tpu.memory_space<vmem>>, vector<392x96xf32>
    %cst = arith.constant dense<0.000000e+00> : vector<56x96xf32>
    %2 = tpu.matmul %0, %1, %cst {dimension_numbers = #tpu.dot_dimension_numbers<[1], [0], [0], [1], [0, 0, 1, 1], [], []>} : vector<56x392xf32>, vector<392x96xf32>, vector<56x96xf32> -> vector<56x96xf32>
    %3 = arith.truncf %2 : vector<56x96xf32> to vector<56x96xbf16>
    %c0_3 = arith.constant 0 : index
    %c0_4 = arith.constant 0 : index
    %4 = vector.load %arg2[%c0_3, %c0_4] : memref<96x192xbf16, #tpu.memory_space<vmem>>, vector<96x192xbf16>
    %cst_5 = arith.constant dense<0.000000e+00> : vector<56x192xf32>
    %5 = tpu.matmul %3, %4, %cst_5 {dimension_numbers = #tpu.dot_dimension_numbers<[1], [0], [0], [1], [0, 0, 1, 1], [], []>} : vector<56x96xbf16>, vector<96x192xbf16>, vector<56x192xf32> -> vector<56x192xf32>
    %c0_6 = arith.constant 0 : index
    %c0_7 = arith.constant 0 : index
    %6 = vector.load %arg3[%c0_6, %c0_7] : memref<1x192xf32, #tpu.memory_space<vmem>>, vector<1x192xf32>
    %7 = vector.broadcast %6 : vector<1x192xf32> to vector<56x192xf32>
    %8 = arith.addf %5, %7 : vector<56x192xf32>
    %cst_8 = arith.constant 0.000000e+00 : f32
    %9 = vector.broadcast %cst_8 : f32 to vector<56x192xf32>
    %10 = arith.maximumf %8, %9 : vector<56x192xf32>
    %11 = vector.extract_strided_slice %10 {offsets = [0, 0], sizes = [50, 192], strides = [1, 1]} : vector<56x192xf32> to vector<50x192xf32>
    %12 = arith.truncf %11 : vector<50x192xf32> to vector<50x192xbf16>
    %c0_9 = arith.constant 0 : index
    %c0_10 = arith.constant 0 : index
    %c0_11 = arith.constant 0 : index
    %13 = vector.load %arg4[%c0_9, %c0_10, %c0_11] : memref<4x192x576xbf16, #tpu.memory_space<vmem>>, vector<1x192x576xbf16>
    %14 = vector.shape_cast %13 : vector<1x192x576xbf16> to vector<192x576xbf16>
    %cst_12 = arith.constant dense<0.000000e+00> : vector<50x576xf32>
    %15 = tpu.matmul %12, %14, %cst_12 {dimension_numbers = #tpu.dot_dimension_numbers<[1], [0], [0], [1], [0, 0, 1, 1], [], []>} : vector<50x192xbf16>, vector<192x576xbf16>, vector<50x576xf32> -> vector<50x576xf32>
    %16 = vector.extract_strided_slice %10 {offsets = [1, 0], sizes = [50, 192], strides = [1, 1]} : vector<56x192xf32> to vector<50x192xf32>
    %17 = arith.truncf %16 : vector<50x192xf32> to vector<50x192xbf16>
    %c1 = arith.constant 1 : index
    %c0_13 = arith.constant 0 : index
    %c0_14 = arith.constant 0 : index
    %18 = vector.load %arg4[%c1, %c0_13, %c0_14] : memref<4x192x576xbf16, #tpu.memory_space<vmem>>, vector<1x192x576xbf16>
    %19 = vector.shape_cast %18 : vector<1x192x576xbf16> to vector<192x576xbf16>
    %cst_15 = arith.constant dense<0.000000e+00> : vector<50x576xf32>
    %20 = tpu.matmul %17, %19, %cst_15 {dimension_numbers = #tpu.dot_dimension_numbers<[1], [0], [0], [1], [0, 0, 1, 1], [], []>} : vector<50x192xbf16>, vector<192x576xbf16>, vector<50x576xf32> -> vector<50x576xf32>
    %21 = arith.addf %15, %20 : vector<50x576xf32>
    %22 = vector.extract_strided_slice %10 {offsets = [5, 0], sizes = [50, 192], strides = [1, 1]} : vector<56x192xf32> to vector<50x192xf32>
    %23 = arith.truncf %22 : vector<50x192xf32> to vector<50x192xbf16>
    %c2 = arith.constant 2 : index
    %c0_16 = arith.constant 0 : index
    %c0_17 = arith.constant 0 : index
    %24 = vector.load %arg4[%c2, %c0_16, %c0_17] : memref<4x192x576xbf16, #tpu.memory_space<vmem>>, vector<1x192x576xbf16>
    %25 = vector.shape_cast %24 : vector<1x192x576xbf16> to vector<192x576xbf16>
    %cst_18 = arith.constant dense<0.000000e+00> : vector<50x576xf32>
    %26 = tpu.matmul %23, %25, %cst_18 {dimension_numbers = #tpu.dot_dimension_numbers<[1], [0], [0], [1], [0, 0, 1, 1], [], []>} : vector<50x192xbf16>, vector<192x576xbf16>, vector<50x576xf32> -> vector<50x576xf32>
    %27 = arith.addf %21, %26 : vector<50x576xf32>
    %28 = vector.extract_strided_slice %10 {offsets = [6, 0], sizes = [50, 192], strides = [1, 1]} : vector<56x192xf32> to vector<50x192xf32>
    %29 = arith.truncf %28 : vector<50x192xf32> to vector<50x192xbf16>
    %c3 = arith.constant 3 : index
    %c0_19 = arith.constant 0 : index
    %c0_20 = arith.constant 0 : index
    %30 = vector.load %arg4[%c3, %c0_19, %c0_20] : memref<4x192x576xbf16, #tpu.memory_space<vmem>>, vector<1x192x576xbf16>
    %31 = vector.shape_cast %30 : vector<1x192x576xbf16> to vector<192x576xbf16>
    %cst_21 = arith.constant dense<0.000000e+00> : vector<50x576xf32>
    %32 = tpu.matmul %29, %31, %cst_21 {dimension_numbers = #tpu.dot_dimension_numbers<[1], [0], [0], [1], [0, 0, 1, 1], [], []>} : vector<50x192xbf16>, vector<192x576xbf16>, vector<50x576xf32> -> vector<50x576xf32>
    %33 = arith.addf %27, %32 : vector<50x576xf32>
    %c0_22 = arith.constant 0 : index
    %c0_23 = arith.constant 0 : index
    %34 = vector.load %arg5[%c0_22, %c0_23] : memref<1x576xf32, #tpu.memory_space<vmem>>, vector<1x576xf32>
    %35 = vector.broadcast %34 : vector<1x576xf32> to vector<50x576xf32>
    %36 = arith.addf %33, %35 : vector<50x576xf32>
    %cst_24 = arith.constant 0.000000e+00 : f32
    %37 = vector.broadcast %cst_24 : f32 to vector<50x576xf32>
    %38 = arith.maximumf %36, %37 : vector<50x576xf32>
    %c0_25 = arith.constant 0 : index
    %c0_26 = arith.constant 0 : index
    %39 = vector.load %arg6[%c0_25, %c0_26] : memref<2x50xf32, #tpu.memory_space<vmem>>, vector<2x50xf32>
    %cst_27 = arith.constant dense<0.000000e+00> : vector<2x576xf32>
    %40 = tpu.matmul %39, %38, %cst_27 {dimension_numbers = #tpu.dot_dimension_numbers<[1], [0], [0], [1], [0, 0, 1, 1], [], []>} : vector<2x50xf32>, vector<50x576xf32>, vector<2x576xf32> -> vector<2x576xf32>
    %41 = arith.truncf %40 : vector<2x576xf32> to vector<2x576xbf16>
    %c0_28 = arith.constant 0 : index
    %c0_29 = arith.constant 0 : index
    %42 = vector.load %arg7[%c0_28, %c0_29] : memref<576x10xbf16, #tpu.memory_space<vmem>>, vector<576x10xbf16>
    %cst_30 = arith.constant dense<0.000000e+00> : vector<2x10xf32>
    %43 = tpu.matmul %41, %42, %cst_30 {dimension_numbers = #tpu.dot_dimension_numbers<[1], [0], [0], [1], [0, 0, 1, 1], [], []>} : vector<2x576xbf16>, vector<576x10xbf16>, vector<2x10xf32> -> vector<2x10xf32>
    %c0_31 = arith.constant 0 : index
    %c0_32 = arith.constant 0 : index
    %44 = vector.load %arg8[%c0_31, %c0_32] : memref<1x10xf32, #tpu.memory_space<vmem>>, vector<1x10xf32>
    %45 = vector.broadcast %44 : vector<1x10xf32> to vector<2x10xf32>
    %46 = arith.addf %43, %45 : vector<2x10xf32>
    %c0_33 = arith.constant 0 : index
    %c0_34 = arith.constant 0 : index
    %47 = vector.load %arg9[%c0_33, %c0_34] : memref<2x10xf32, #tpu.memory_space<vmem>>, vector<2x10xf32>
    tpu.vector_store %arg9[%c0_33, %c0_34], %46 {strides = array<i32>} : memref<2x10xf32, #tpu.memory_space<vmem>>, vector<2x10xf32>,
    return
  }
}

</mosaic_0001>

<llo_original>
// kernel: auxiliary_head_forward.1
$region0: #{auxiliary_head_forward.1}
  #allocation0 [shape = 'u32[]', space=smem, size = 0x4, offset = 0x4, fixed_abs, tag = 'smem constant byte address 0x4 - core index']
  #allocation1 [shape = 'u32[144,128]{1,0:T(1,128)}', space=vmem, size = 0x12000, scoped, tag = 'internal scratch']
  %s0 = inlined_call_operand.vmem [shape: f32[392,96], index: 0, kind: input, shape index: {}]
  %s1 = inlined_call_operand.vmem [shape: f32[56,392], index: 1, kind: input, shape index: {}]
  %s2 = inlined_call_operand.vmem [shape: bf16[96,192], index: 2, kind: input, shape index: {}]
  %s3 = inlined_call_operand.vmem [shape: f32[1,192], index: 3, kind: input, shape index: {}]
  %s4 = inlined_call_operand.vmem [shape: bf16[4,192,576], index: 4, kind: input, shape index: {}]
  %s5 = inlined_call_operand.vmem [shape: f32[1,576], index: 5, kind: input, shape index: {}]
  %s6 = inlined_call_operand.vmem [shape: f32[2,50], index: 6, kind: input, shape index: {}]
  %s7 = inlined_call_operand.vmem [shape: bf16[576,10], index: 7, kind: input, shape index: {}]
  %s8 = inlined_call_operand.vmem [shape: f32[1,10], index: 8, kind: input, shape index: {}]
  %s9 = inlined_call_operand.hbm [shape: f32[2,10], index: 9, kind: output, shape index: {}]
  %s10 = sld [smem:[#allocation0]]
  $region46: #{auxiliary_head_forward.1} parent=0
    _
  %s12 = ssub.s32 1, %s10
  %s13 = scalar_select 0, %s12, %s10
  $region1: #{auxiliary_head_forward.1} parent=0
    #allocation2 [shape = 'u8[1024]{0}', space=vmem, size = 0x400, scoped, tag = 'output window, operand 0, single buffered']
    #allocation3 [shape = 's32[1]{0}', space=sflag, size = 0x4, scoped, tag = 'scoped memory for auxiliary_head_forward.1']
    %14 = vsyncpa [#allocation3], 0
    // Predicated region
    $region2: #{auxiliary_head_forward.1} parent=1 // pred_check
      _
    $region3: #{auxiliary_head_forward.1} parent=1 // pred_check_branch
      %16 = sbr.rel (0) target = $region5
    $region4: #{auxiliary_head_forward.1} parent=1 // pred_region
      _
    $region5: #{auxiliary_head_forward.1} parent=1 // pred_fallthru
      _
    // Predicated region
    $region6: #{auxiliary_head_forward.1} parent=1 // pred_check
      _
    $region7: #{auxiliary_head_forward.1} parent=1 // pred_check_branch
      %18 = sbr.rel (0) target = $region9
    $region8: #{auxiliary_head_forward.1} parent=1 // pred_region
      _
    $region9: #{auxiliary_head_forward.1} parent=1 // pred_fallthru
      _
    // Predicated region
    $region10: #{auxiliary_head_forward.1} parent=1 // pred_check
      _
    $region11: #{auxiliary_head_forward.1} parent=1 // pred_check_branch
      %20 = sbr.rel (0) target = $region13
    $region12: #{auxiliary_head_forward.1} parent=1 // pred_region
      _
    $region13: #{auxiliary_head_forward.1} parent=1 // pred_fallthru
      _
    // Predicated region
    $region14: #{auxiliary_head_forward.1} parent=1 // pred_check
      _
    $region15: #{auxiliary_head_forward.1} parent=1 // pred_check_branch
      %22 = sbr.rel (0) target = $region17
    $region16: #{auxiliary_head_forward.1} parent=1 // pred_region
      _
    $region17: #{auxiliary_head_forward.1} parent=1 // pred_fallthru
      _
    // Predicated region
    $region18: #{auxiliary_head_forward.1} parent=1 // pred_check
      _
    $region19: #{auxiliary_head_forward.1} parent=1 // pred_check_branch
      %24 = sbr.rel (0) target = $region21
    $region20: #{auxiliary_head_forward.1} parent=1 // pred_region
      _
    $region21: #{auxiliary_head_forward.1} parent=1 // pred_fallthru
      _
    // Predicated region
    $region22: #{auxiliary_head_forward.1} parent=1 // pred_check
      _
    $region23: #{auxiliary_head_forward.1} parent=1 // pred_check_branch
      %26 = sbr.rel (0) target = $region25
    $region24: #{auxiliary_head_forward.1} parent=1 // pred_region
      _
    $region25: #{auxiliary_head_forward.1} parent=1 // pred_fallthru
      _
    // Predicated region
    $region26: #{auxiliary_head_forward.1} parent=1 // pred_check
      _
    $region27: #{auxiliary_head_forward.1} parent=1 // pred_check_branch
      %28 = sbr.rel (0) target = $region29
    $region28: #{auxiliary_head_forward.1} parent=1 // pred_region
      _
    $region29: #{auxiliary_head_forward.1} parent=1 // pred_fallthru
      _
    // Predicated region
    $region30: #{auxiliary_head_forward.1} parent=1 // pred_check
      _
    $region31: #{auxiliary_head_forward.1} parent=1 // pred_check_branch
      %30 = sbr.rel (0) target = $region33
    $region32: #{auxiliary_head_forward.1} parent=1 // pred_region
      _
    $region33: #{auxiliary_head_forward.1} parent=1 // pred_fallthru
      _
    // Predicated region
    $region34: #{auxiliary_head_forward.1} parent=1 // pred_check
      _
    $region35: #{auxiliary_head_forward.1} parent=1 // pred_check_branch
      %32 = sbr.rel (0) target = $region37
    $region36: #{auxiliary_head_forward.1} parent=1 // pred_region
      _
    $region37: #{auxiliary_head_forward.1} parent=1 // pred_fallthru
      _
    %v34 = vld [vmem:[%s1] sm:$0xff]
    %v35 = vld [vmem:[%s1 + $0x8] sm:$0xff]
    %v36 = vld [vmem:[%s1 + $0x10] sm:$0xff]
    %v37 = vld [vmem:[%s1 + $0x18] sm:$0xff]
    %v38 = vld [vmem:[%s1 + $0x20] sm:$0xff]
    %v39 = vld [vmem:[%s1 + $0x28] sm:$0xff]
    %v40 = vld [vmem:[%s1 + $0x30] sm:$0xff]
    %v41 = vld [vmem:[%s1 + $0x38] sm:$0xff]
    %v42 = vld [vmem:[%s1 + $0x40] sm:$0xff]
    %v43 = vld [vmem:[%s1 + $0x48] sm:$0xff]
    %v44 = vld [vmem:[%s1 + $0x50] sm:$0xff]
    %v45 = vld [vmem:[%s1 + $0x58] sm:$0xff]
    %v46 = vld [vmem:[%s1 + $0x60] sm:$0xff]
    %v47 = vld [vmem:[%s1 + $0x68] sm:$0xff]
    %v48 = vld [vmem:[%s1 + $0x70] sm:$0xff]
    %v49 = vld [vmem:[%s1 + $0x78] sm:$0xff]
    %v50 = vld [vmem:[%s1 + $0x80] sm:$0xff]
    %v51 = vld [vmem:[%s1 + $0x88] sm:$0xff]
    %v52 = vld [vmem:[%s1 + $0x90] sm:$0xff]
    %v53 = vld [vmem:[%s1 + $0x98] sm:$0xff]
    %v54 = vld [vmem:[%s1 + $0xa0] sm:$0xff]
    %v55 = vld [vmem:[%s1 + $0xa8] sm:$0xff]
    %v56 = vld [vmem:[%s1 + $0xb0] sm:$0xff]
    %v57 = vld [vmem:[%s1 + $0xb8] sm:$0xff]
    %v58 = vld [vmem:[%s1 + $0xc0] sm:$0xff]
    %v59 = vld [vmem:[%s1 + $0xc8] sm:$0xff]
    %v60 = vld [vmem:[%s1 + $0xd0] sm:$0xff]
    %v61 = vld [vmem:[%s1 + $0xd8] sm:$0xff]
    %v62 = vld [vmem:[%s0] sm:$0xff]
    %v63 = vld [vmem:[%s0 + $0x8] sm:$0xff]
    %v64 = vld [vmem:[%s0 + $0x10] sm:$0xff]
    %v65 = vld [vmem:[%s0 + $0x18] sm:$0xff]
    %v66 = vld [vmem:[%s0 + $0x20] sm:$0xff]
    %v67 = vld [vmem:[%s0 + $0x28] sm:$0xff]
    %v68 = vld [vmem:[%s0 + $0x30] sm:$0xff]
    %v69 = vld [vmem:[%s0 + $0x38] sm:$0xff]
    %v70 = vld [vmem:[%s0 + $0x40] sm:$0xff]
    %v71 = vld [vmem:[%s0 + $0x48] sm:$0xff]
    %v72 = vld [vmem:[%s0 + $0x50] sm:$0xff]
    %v73 = vld [vmem:[%s0 + $0x58] sm:$0xff]
    %v74 = vld [vmem:[%s0 + $0x60] sm:$0xff]
    %v75 = vld [vmem:[%s0 + $0x68] sm:$0xff]
    %v76 = vld [vmem:[%s0 + $0x70] sm:$0xff]
    %v77 = vld [vmem:[%s0 + $0x78] sm:$0xff]
    %v78 = vld [vmem:[%s0 + $0x80] sm:$0xff]
    %v79 = vld [vmem:[%s0 + $0x88] sm:$0xff]
    %v80 = vld [vmem:[%s0 + $0x90] sm:$0xff]
    %v81 = vld [vmem:[%s0 + $0x98] sm:$0xff]
    %v82 = vld [vmem:[%s0 + $0xa0] sm:$0xff]
    %v83 = vld [vmem:[%s0 + $0xa8] sm:$0xff]
    %v84 = vld [vmem:[%s0 + $0xb0] sm:$0xff]
    %v85 = vld [vmem:[%s0 + $0xb8] sm:$0xff]
    %v86 = vld [vmem:[%s0 + $0xc0] sm:$0xff]
    %v87 = vld [vmem:[%s0 + $0xc8] sm:$0xff]
    %v88 = vld [vmem:[%s0 + $0xd0] sm:$0xff]
    %v89 = vld [vmem:[%s0 + $0xd8] sm:$0xff]
    %v90 = vld [vmem:[%s0 + $0xe0] sm:$0xff]
    %v91 = vld [vmem:[%s0 + $0xe8] sm:$0xff]
    %v92 = vld [vmem:[%s0 + $0xf0] sm:$0xff]
    %v93 = vld [vmem:[%s0 + $0xf8] sm:$0xff]
    %v94 = vld [vmem:[%s0 + $0x100] sm:$0xff]
    %v95 = vld [vmem:[%s0 + $0x108] sm:$0xff]
    %v96 = vld [vmem:[%s0 + $0x110] sm:$0xff]
    %v97 = vld [vmem:[%s0 + $0x118] sm:$0xff]
    %v98 = vld [vmem:[%s0 + $0x120] sm:$0xff]
    %v99 = vld [vmem:[%s0 + $0x128] sm:$0xff]
    %v100 = vld [vmem:[%s0 + $0x130] sm:$0xff]
    %v101 = vld [vmem:[%s0 + $0x138] sm:$0xff]
    %v102 = vld [vmem:[%s0 + $0x140] sm:$0xff]
    %v103 = vld [vmem:[%s0 + $0x148] sm:$0xff]
    %v104 = vld [vmem:[%s0 + $0x150] sm:$0xff]
    %v105 = vld [vmem:[%s0 + $0x158] sm:$0xff]
    %v106 = vld [vmem:[%s0 + $0x160] sm:$0xff]
    %v107 = vld [vmem:[%s0 + $0x168] sm:$0xff]
    %v108 = vld [vmem:[%s0 + $0x170] sm:$0xff]
    %v109 = vld [vmem:[%s0 + $0x178] sm:$0xff]
    %v110 = vld [vmem:[%s0 + $0x180] sm:$0xff]
    %vm111 = vcmask 64512
    %v113 = vsel %vm111, %v37, 0
    %v116 = vsel %vm111, %v41, 0
    %v119 = vsel %vm111, %v45, 0
    %v122 = vsel %vm111, %v49, 0
    %v125 = vsel %vm111, %v53, 0
    %v128 = vsel %vm111, %v57, 0
    %v131 = vsel %vm111, %v61, 0
    %133 = vmatprep.subr.mxu0 0.0
    %134 = vmatpush1.msra.mxu0 %v62
    %135 = vmatprep.subr.mxu0 0.0
    %136 = vmatpush1.msra.mxu0 %v63
    %137 = vmatprep.subr.mxu0 0.0
    %138 = vmatpush1.msra.mxu0 %v64
    %139 = vmatprep.subr.mxu0 0.0
    %140 = vmatpush1.msra.mxu0 %v65
    %141 = vmatprep.subr.mxu0 0.0
    %142 = vmatpush1.msra.mxu0 %v66
    %143 = vmatprep.subr.mxu0 0.0
    %144 = vmatpush1.msra.mxu0 %v67
    %145 = vmatprep.subr.mxu0 0.0
    %146 = vmatpush1.msra.mxu0 %v68
    %147 = vmatprep.subr.mxu0 0.0
    %148 = vmatpush1.msra.mxu0 %v69
    %149 = vmatprep.subr.mxu0 0.0
    %150 = vmatpush1.msra.mxu0 %v70
    %151 = vmatprep.subr.mxu0 0.0
    %152 = vmatpush1.msra.mxu0 %v71
    %153 = vmatprep.subr.mxu0 0.0
    %154 = vmatpush1.msra.mxu0 %v72
    %155 = vmatprep.subr.mxu0 0.0
    %156 = vmatpush1.msra.mxu0 %v73
    %157 = vmatprep.subr.mxu0 0.0
    %158 = vmatpush1.msra.mxu0 %v74
    %159 = vmatprep.subr.mxu0 0.0
    %160 = vmatpush1.msra.mxu0 %v75
    %161 = vmatprep.subr.mxu0 0.0
    %162 = vmatpush1.msra.mxu0 %v76
    %163 = vmatprep.subr.mxu0 0.0
    %164 = vmatpush1.msra.mxu0 %v77
    %165 = vmatprep.subr.mxu0 0.0
    %166 = vmatpush1.msra.mxu0 %v78
    %167 = vmatprep.subr.mxu0 0.0
    %168 = vmatpush1.msra.mxu0 %v79
    %169 = vmatprep.subr.mxu0 0.0
    %170 = vmatpush1.msra.mxu0 %v80
    %171 = vmatprep.subr.mxu0 0.0
    %172 = vmatpush1.msra.mxu0 %v81
    %173 = vmatprep.subr.mxu0 0.0
    %174 = vmatpush1.msra.mxu0 %v82
    %175 = vmatprep.subr.mxu0 0.0
    %176 = vmatpush1.msra.mxu0 %v83
    %177 = vmatprep.subr.mxu0 0.0
    %178 = vmatpush1.msra.mxu0 %v84
    %179 = vmatprep.subr.mxu0 0.0
    %180 = vmatpush1.msra.mxu0 %v85
    %181 = vmatprep.subr.mxu0 0.0
    %182 = vmatpush1.msra.mxu0 %v86
    %183 = vmatprep.subr.mxu0 0.0
    %184 = vmatpush1.msra.mxu0 %v87
    %185 = vmatprep.subr.mxu0 0.0
    %186 = vmatpush1.msra.mxu0 %v88
    %187 = vmatprep.subr.mxu0 0.0
    %188 = vmatpush1.msra.mxu0 %v89
    %189 = vmatprep.subr.mxu0 0.0
    %190 = vmatpush1.msra.mxu0 %v90
    %191 = vmatprep.subr.mxu0 0.0
    %192 = vmatpush1.msra.mxu0 %v91
    %193 = vmatprep.subr.mxu0 0.0
    %194 = vmatpush1.msra.mxu0 %v92
    %195 = vmatprep.subr.mxu0 0.0
    %196 = vmatpush1.msra.mxu0 %v93
    %197 = vmatprep.mubr.f32.mxu0 %v35
    %198 = vmatmul.mubr.f32.gmra.mrb[0].mxu0 %v34
    %v199 = vpop.f32.mrb[0].mxu0
    %v200 = vadd.f32 0.0, %v199
    %v201 = vpop.f32.mrb[0].mxu0
    %202 = vmatprep.mubr.f32.mxu0 %v39
    %203 = vmatmul.mubr.f32.gmra.mrb[0].mxu0 %v38
    %v204 = vpop.f32.mrb[0].mxu0
    %v205 = vadd.f32 0.0, %v204
    %v206 = vpop.f32.mrb[0].mxu0
    %207 = vmatprep.mubr.f32.mxu0 %v43
    %208 = vmatmul.mubr.f32.gmra.mrb[0].mxu0 %v42
    %v209 = vpop.f32.mrb[0].mxu0
    %v210 = vadd.f32 0.0, %v209
    %v211 = vpop.f32.mrb[0].mxu0
    %212 = vmatprep.mubr.f32.mxu0 %v47
    %213 = vmatmul.mubr.f32.gmra.mrb[0].mxu0 %v46
    %v214 = vpop.f32.mrb[0].mxu0
    %v215 = vadd.f32 0.0, %v214
    %v216 = vpop.f32.mrb[0].mxu0
    %217 = vmatprep.mubr.f32.mxu0 %v51
    %218 = vmatmul.mubr.f32.gmra.mrb[0].mxu0 %v50
    %v219 = vpop.f32.mrb[0].mxu0
    %v220 = vadd.f32 0.0, %v219
    %v221 = vpop.f32.mrb[0].mxu0
    %222 = vmatprep.mubr.f32.mxu0 %v55
    %223 = vmatmul.mubr.f32.gmra.mrb[0].mxu0 %v54
    %v224 = vpop.f32.mrb[0].mxu0
    %v225 = vadd.f32 0.0, %v224
    %v226 = vpop.f32.mrb[0].mxu0
    %227 = vmatprep.mubr.f32.mxu0 %v59
    %228 = vmatmul.mubr.f32.gmra.mrb[0].mxu0 %v58
    %v229 = vpop.f32.mrb[0].mxu0
    %v230 = vadd.f32 0.0, %v229
    %v231 = vpop.f32.mrb[0].mxu0
    %232 = vdwg.mxu0
    %233 = vmatprep.subr.mxu0 0.0
    %234 = vmatpush1.msra.mxu0 %v94
    %235 = vmatprep.subr.mxu0 0.0
    %236 = vmatpush1.msra.mxu0 %v95
    %237 = vmatprep.subr.mxu0 0.0
    %238 = vmatpush1.msra.mxu0 %v96
    %239 = vmatprep.subr.mxu0 0.0
    %240 = vmatpush1.msra.mxu0 %v97
    %241 = vmatprep.subr.mxu0 0.0
    %242 = vmatpush1.msra.mxu0 %v98
    %243 = vmatprep.subr.mxu0 0.0
    %244 = vmatpush1.msra.mxu0 %v99
    %245 = vmatprep.subr.mxu0 0.0
    %246 = vmatpush1.msra.mxu0 %v100
    %247 = vmatprep.subr.mxu0 0.0
    %248 = vmatpush1.msra.mxu0 %v101
    %249 = vmatprep.subr.mxu0 0.0
    %250 = vmatpush1.msra.mxu0 %v102
    %251 = vmatprep.subr.mxu0 0.0
    %252 = vmatpush1.msra.mxu0 %v103
    %253 = vmatprep.subr.mxu0 0.0
    %254 = vmatpush1.msra.mxu0 %v104
    %255 = vmatprep.subr.mxu0 0.0
    %256 = vmatpush1.msra.mxu0 %v105
    %257 = vmatprep.subr.mxu0 0.0
    %258 = vmatpush1.msra.mxu0 %v106
    %259 = vmatprep.subr.mxu0 0.0
    %260 = vmatpush1.msra.mxu0 %v107
    %261 = vmatprep.subr.mxu0 0.0
    %262 = vmatpush1.msra.mxu0 %v108
    %263 = vmatprep.subr.mxu0 0.0
    %264 = vmatpush1.msra.mxu0 %v109
    %265 = vmatprep.subr.mxu0 0.0
    %266 = vmatpush1.msra.mxu0 %v110
    %267 = vmatprep.subr.mxu0 0.0
    %268 = vmatpush1.msra.mxu0 0.0
    %269 = vmatprep.subr.mxu0 0.0
    %270 = vmatpush1.msra.mxu0 0.0
    %271 = vmatprep.subr.mxu0 0.0
    %272 = vmatpush1.msra.mxu0 0.0
    %273 = vmatprep.subr.mxu0 0.0
    %274 = vmatpush1.msra.mxu0 0.0
    %275 = vmatprep.subr.mxu0 0.0
    %276 = vmatpush1.msra.mxu0 0.0
    %277 = vmatprep.subr.mxu0 0.0
    %278 = vmatpush1.msra.mxu0 0.0
    %279 = vmatprep.subr.mxu0 0.0
    %280 = vmatpush1.msra.mxu0 0.0
    %281 = vmatprep.subr.mxu0 0.0
    %282 = vmatpush1.msra.mxu0 0.0
    %283 = vmatprep.subr.mxu0 0.0
    %284 = vmatpush1.msra.mxu0 0.0
    %285 = vmatprep.subr.mxu0 0.0
    %286 = vmatpush1.msra.mxu0 0.0
    %287 = vmatprep.subr.mxu0 0.0
    %288 = vmatpush1.msra.mxu0 0.0
    %289 = vmatprep.subr.mxu0 0.0
    %290 = vmatpush1.msra.mxu0 0.0
    %291 = vmatprep.subr.mxu0 0.0
    %292 = vmatpush1.msra.mxu0 0.0
    %293 = vmatprep.subr.mxu0 0.0
    %294 = vmatpush1.msra.mxu0 0.0
    %295 = vmatprep.subr.mxu0 0.0
    %296 = vmatpush1.msra.mxu0 0.0
    %297 = vmatprep.mubr.f32.mxu0 %v113
    %298 = vmatmul.mubr.f32.gmra.mrb[0].mxu0 %v36
    %v299 = vpop.f32.mrb[0].mxu0
    %v300 = vadd.f32 %v200, %v299
    %v301 = vpop.f32.mrb[0].mxu0
    %302 = vmatprep.mubr.f32.mxu0 %v116
    %303 = vmatmul.mubr.f32.gmra.mrb[0].mxu0 %v40
    %v304 = vpop.f32.mrb[0].mxu0
    %v305 = vadd.f32 %v205, %v304
    %v306 = vpop.f32.mrb[0].mxu0
    %307 = vmatprep.mubr.f32.mxu0 %v119
    %308 = vmatmul.mubr.f32.gmra.mrb[0].mxu0 %v44
    %v309 = vpop.f32.mrb[0].mxu0
    %v310 = vadd.f32 %v210, %v309
    %v311 = vpop.f32.mrb[0].mxu0
    %312 = vmatprep.mubr.f32.mxu0 %v122
    %313 = vmatmul.mubr.f32.gmra.mrb[0].mxu0 %v48
    %v314 = vpop.f32.mrb[0].mxu0
    %v315 = vadd.f32 %v215, %v314
    %v316 = vpop.f32.mrb[0].mxu0
    %317 = vmatprep.mubr.f32.mxu0 %v125
    %318 = vmatmul.mubr.f32.gmra.mrb[0].mxu0 %v52
    %v319 = vpop.f32.mrb[0].mxu0
    %v320 = vadd.f32 %v220, %v319
    %v321 = vpop.f32.mrb[0].mxu0
    %322 = vmatprep.mubr.f32.mxu0 %v128
    %323 = vmatmul.mubr.f32.gmra.mrb[0].mxu0 %v56
    %v324 = vpop.f32.mrb[0].mxu0
    %v325 = vadd.f32 %v225, %v324
    %v326 = vpop.f32.mrb[0].mxu0
    %327 = vmatprep.mubr.f32.mxu0 %v131
    %328 = vmatmul.mubr.f32.gmra.mrb[0].mxu0 %v60
    %v329 = vpop.f32.mrb[0].mxu0
    %v330 = vadd.f32 %v230, %v329
    %v331 = vpop.f32.mrb[0].mxu0
    %332 = vdwg.mxu0
    %v333 = vpack.c.bf16 %v305, %v300
    %v334 = vpack.c.bf16 %v315, %v310
    %v335 = vpack.c.bf16 %v325, %v320
    %v336 = vpack.c.bf16 %v330, %v330
    %v337 = vld [vmem:[%s2] sm:$0xff]
    %v338 = vld [vmem:[%s2 + $0x8] sm:$0xff]
    %v339 = vld [vmem:[%s2 + $0x10] sm:$0xff]
    %v340 = vld [vmem:[%s2 + $0x18] sm:$0xff]
    %v341 = vld [vmem:[%s2 + $0x20] sm:$0xff]
    %v342 = vld [vmem:[%s2 + $0x28] sm:$0xff]
    %v343 = vld [vmem:[%s2 + $0x30] sm:$0xff]
    %v344 = vld [vmem:[%s2 + $0x38] sm:$0xff]
    %v345 = vld [vmem:[%s2 + $0x40] sm:$0xff]
    %v346 = vld [vmem:[%s2 + $0x48] sm:$0xff]
    %v347 = vld [vmem:[%s2 + $0x50] sm:$0xff]
    %v348 = vld [vmem:[%s2 + $0x58] sm:$0xff]
    %v349 = vld [vmem:[%s3] sm:$0x3]
    %v351 = vlaneseq
    %v352 = vshrl.u32 %v351, 7
    %v353 = vsub.s32 0, %v352
    %v354 = vrot.slane %v349, %v353
    %v355 = vlaneseq
    %v356 = vshrl.u32 %v355, 7
    %v357 = vsub.s32 1, %v356
    %v358 = vrot.slane %v349, %v357
    %v373 = vunpack.c.l.b16 %v337
    %v374 = vunpack.c.h.b16 %v337
    %v375 = vunpack.c.l.b16 %v338
    %v376 = vunpack.c.h.b16 %v338
    %v377 = vunpack.c.l.b16 %v339
    %v378 = vunpack.c.h.b16 %v339
    %v379 = vunpack.c.l.b16 %v340
    %v380 = vunpack.c.h.b16 %v340
    %v381 = vunpack.c.l.b16 %v341
    %v382 = vunpack.c.h.b16 %v341
    %v383 = vunpack.c.l.b16 %v342
    %v384 = vunpack.c.h.b16 %v342
    %v385 = vunpack.c.l.b16 %v343
    %v386 = vunpack.c.h.b16 %v343
    %v387 = vunpack.c.l.b16 %v344
    %v388 = vunpack.c.h.b16 %v344
    %v389 = vunpack.c.l.b16 %v345
    %v390 = vunpack.c.h.b16 %v345
    %v391 = vunpack.c.l.b16 %v346
    %v392 = vunpack.c.h.b16 %v346
    %v393 = vunpack.c.l.b16 %v347
    %v394 = vunpack.c.h.b16 %v347
    %v395 = vunpack.c.l.b16 %v348
    %v396 = vunpack.c.h.b16 %v348
    %v397 = vpack.c.b16 %v375, %v373
    %v398 = vpack.c.b16 %v376, %v374
    %v399 = vpack.c.b16 %v379, %v377
    %v400 = vpack.c.b16 %v380, %v378
    %v401 = vpack.c.b16 %v383, %v381
    %v402 = vpack.c.b16 %v384, %v382
    %v403 = vpack.c.b16 %v387, %v385
    %v404 = vpack.c.b16 %v388, %v386
    %v405 = vpack.c.b16 %v391, %v389
    %v406 = vpack.c.b16 %v392, %v390
    %v407 = vpack.c.b16 %v395, %v393
    %v408 = vpack.c.b16 %v396, %v394
    %vm421 = vcmask 785408
    %v423 = vsel %vm421, %v333, 0
    %v426 = vsel %vm421, %v334, 0
    %v429 = vsel %vm421, %v335, 0
    %v432 = vsel %vm421, %v336, 0
    %434 = vmatprep.subr.bf16.mxu0 %v398
    %435 = vmatpush1.bf16.msra.mxu0 %v397
    %436 = vmatprep.subr.bf16.mxu0 %v400
    %437 = vmatpush1.bf16.msra.mxu0 %v399
    %438 = vmatprep.subr.bf16.mxu0 %v402
    %439 = vmatpush1.bf16.msra.mxu0 %v401
    %440 = vmatprep.subr.bf16.mxu0 %v404
    %441 = vmatpush1.bf16.msra.mxu0 %v403
    %442 = vmatprep.subr.bf16.mxu0 %v406
    %443 = vmatpush1.bf16.msra.mxu0 %v405
    %444 = vmatprep.subr.bf16.mxu0 %v408
    %445 = vmatpush1.bf16.msra.mxu0 %v407
    %446 = vmatprep.subr.bf16.mxu0 0
    %447 = vmatpush1.bf16.msra.mxu0 0
    %448 = vmatprep.subr.bf16.mxu0 0
    %449 = vmatpush1.bf16.msra.mxu0 0
    %450 = vmatprep.subr.bf16.mxu0 0
    %451 = vmatpush1.bf16.msra.mxu0 0
    %452 = vmatprep.subr.bf16.mxu0 0
    %453 = vmatpush1.bf16.msra.mxu0 0
    %454 = vmatprep.subr.bf16.mxu0 0
    %455 = vmatpush1.bf16.msra.mxu0 0
    %456 = vmatprep.subr.bf16.mxu0 0
    %457 = vmatpush1.bf16.msra.mxu0 0
    %458 = vmatprep.subr.bf16.mxu0 0
    %459 = vmatpush1.bf16.msra.mxu0 0
    %460 = vmatprep.subr.bf16.mxu0 0
    %461 = vmatpush1.bf16.msra.mxu0 0
    %462 = vmatprep.subr.bf16.mxu0 0
    %463 = vmatpush1.bf16.msra.mxu0 0
    %464 = vmatprep.subr.bf16.mxu0 0
    %465 = vmatpush1.bf16.msra.mxu0 0
    %466 = vmatprep.mubr.bf16.mxu0 0
    %467 = vmatmul.mubr.bf16.gmra.mrb[0].mxu0 %v423
    %v468 = vpop.f32.mrb[0].mxu0
    %v469 = vadd.f32 %v354, %v468
    %v470 = vpop.f32.mrb[0].mxu0
    %v471 = vadd.f32 %v358, %v470
    %v472 = vpop.f32.mrb[0].mxu0
    %v473 = vadd.f32 %v354, %v472
    %v474 = vpop.f32.mrb[0].mxu0
    %v475 = vadd.f32 %v358, %v474
    %476 = vmatprep.mubr.bf16.mxu0 0
    %477 = vmatmul.mubr.bf16.gmra.mrb[0].mxu0 %v426
    %v478 = vpop.f32.mrb[0].mxu0
    %v479 = vadd.f32 %v354, %v478
    %v480 = vpop.f32.mrb[0].mxu0
    %v481 = vadd.f32 %v358, %v480
    %v482 = vpop.f32.mrb[0].mxu0
    %v483 = vadd.f32 %v354, %v482
    %v484 = vpop.f32.mrb[0].mxu0
    %v485 = vadd.f32 %v358, %v484
    %486 = vmatprep.mubr.bf16.mxu0 0
    %487 = vmatmul.mubr.bf16.gmra.mrb[0].mxu0 %v429
    %v488 = vpop.f32.mrb[0].mxu0
    %v489 = vadd.f32 %v354, %v488
    %v490 = vpop.f32.mrb[0].mxu0
    %v491 = vadd.f32 %v358, %v490
    %v492 = vpop.f32.mrb[0].mxu0
    %v493 = vadd.f32 %v354, %v492
    %v494 = vpop.f32.mrb[0].mxu0
    %v495 = vadd.f32 %v358, %v494
    %496 = vmatprep.mubr.bf16.mxu0 0
    %497 = vmatmul.mubr.bf16.gmra.mrb[0].mxu0 %v432
    %v498 = vpop.f32.mrb[0].mxu0
    %v499 = vadd.f32 %v354, %v498
    %v500 = vpop.f32.mrb[0].mxu0
    %v501 = vadd.f32 %v358, %v500
    %v502 = vpop.f32.mrb[0].mxu0
    %v503 = vpop.f32.mrb[0].mxu0
    %504 = vdwg.mxu0
    %v505 = vmax.f32 %v469, 0.0
    %v506 = vmax.f32 %v471, 0.0
    %v507 = vmax.f32 %v473, 0.0
    %v508 = vmax.f32 %v475, 0.0
    %v509 = vmax.f32 %v479, 0.0
    %v510 = vmax.f32 %v481, 0.0
    %v511 = vmax.f32 %v483, 0.0
    %v512 = vmax.f32 %v485, 0.0
    %v513 = vmax.f32 %v489, 0.0
    %v514 = vmax.f32 %v491, 0.0
    %v515 = vmax.f32 %v493, 0.0
    %v516 = vmax.f32 %v495, 0.0
    %v517 = vmax.f32 %v499, 0.0
    %v518 = vmax.f32 %v501, 0.0
    %v519 = vpack.c.bf16 %v507, %v505
    %v520 = vpack.c.bf16 %v508, %v506
    %v521 = vpack.c.bf16 %v511, %v509
    %v522 = vpack.c.bf16 %v512, %v510
    %v523 = vpack.c.bf16 %v515, %v513
    %v524 = vpack.c.bf16 %v516, %v514
    %v525 = vpack.c.bf16 %v517, %v517
    %v526 = vpack.c.bf16 %v518, %v518
    %v527 = vld [vmem:[%s4] sm:$0xff]
    %v528 = vld [vmem:[%s4 + $0x8] sm:$0xff]
    %v529 = vld [vmem:[%s4 + $0x10] sm:$0xf]
    %v530 = vld [vmem:[%s4 + $0x14] sm:$0xff]
    %v531 = vld [vmem:[%s4 + $0x1c] sm:$0xff]
    %v532 = vld [vmem:[%s4 + $0x24] sm:$0xf]
    %v533 = vld [vmem:[%s4 + $0x28] sm:$0xff]
    %v534 = vld [vmem:[%s4 + $0x30] sm:$0xff]
    %v535 = vld [vmem:[%s4 + $0x38] sm:$0xf]
    %v536 = vld [vmem:[%s4 + $0x3c] sm:$0xff]
    %v537 = vld [vmem:[%s4 + $0x44] sm:$0xff]
    %v538 = vld [vmem:[%s4 + $0x4c] sm:$0xf]
    %v539 = vld [vmem:[%s4 + $0x50] sm:$0xff]
    %v540 = vld [vmem:[%s4 + $0x58] sm:$0xff]
    %v541 = vld [vmem:[%s4 + $0x60] sm:$0xf]
    %v542 = vld [vmem:[%s4 + $0x64] sm:$0xff]
    %v543 = vld [vmem:[%s4 + $0x6c] sm:$0xff]
    %v544 = vld [vmem:[%s4 + $0x74] sm:$0xf]
    %v545 = vld [vmem:[%s4 + $0x78] sm:$0xff]
    %v546 = vld [vmem:[%s4 + $0x80] sm:$0xff]
    %v547 = vld [vmem:[%s4 + $0x88] sm:$0xf]
    %v548 = vld [vmem:[%s4 + $0x8c] sm:$0xff]
    %v549 = vld [vmem:[%s4 + $0x94] sm:$0xff]
    %v550 = vld [vmem:[%s4 + $0x9c] sm:$0xf]
    %v551 = vld [vmem:[%s4 + $0xa0] sm:$0xff]
    %v552 = vld [vmem:[%s4 + $0xa8] sm:$0xff]
    %v553 = vld [vmem:[%s4 + $0xb0] sm:$0xf]
    %v554 = vld [vmem:[%s4 + $0xb4] sm:$0xff]
    %v555 = vld [vmem:[%s4 + $0xbc] sm:$0xff]
    %v556 = vld [vmem:[%s4 + $0xc4] sm:$0xf]
    %v557 = vld [vmem:[%s4 + $0xc8] sm:$0xff]
    %v558 = vld [vmem:[%s4 + $0xd0] sm:$0xff]
    %v559 = vld [vmem:[%s4 + $0xd8] sm:$0xf]
    %v560 = vld [vmem:[%s4 + $0xdc] sm:$0xff]
    %v561 = vld [vmem:[%s4 + $0xe4] sm:$0xff]
    %v562 = vld [vmem:[%s4 + $0xec] sm:$0xf]
    %v563 = vld [vmem:[%s4 + $0xf0] sm:$0xff]
    %v564 = vld [vmem:[%s4 + $0xf8] sm:$0xff]
    %v565 = vld [vmem:[%s4 + $0x100] sm:$0xf]
    %v566 = vld [vmem:[%s4 + $0x104] sm:$0xff]
    %v567 = vld [vmem:[%s4 + $0x10c] sm:$0xff]
    %v568 = vld [vmem:[%s4 + $0x114] sm:$0xf]
    %v569 = vld [vmem:[%s4 + $0x118] sm:$0xff]
    %v570 = vld [vmem:[%s4 + $0x120] sm:$0xff]
    %v571 = vld [vmem:[%s4 + $0x128] sm:$0xf]
    %v572 = vld [vmem:[%s4 + $0x12c] sm:$0xff]
    %v573 = vld [vmem:[%s4 + $0x134] sm:$0xff]
    %v574 = vld [vmem:[%s4 + $0x13c] sm:$0xf]
    %v575 = vld [vmem:[%s4 + $0x140] sm:$0xff]
    %v576 = vld [vmem:[%s4 + $0x148] sm:$0xff]
    %v577 = vld [vmem:[%s4 + $0x150] sm:$0xf]
    %v578 = vld [vmem:[%s4 + $0x154] sm:$0xff]
    %v579 = vld [vmem:[%s4 + $0x15c] sm:$0xff]
    %v580 = vld [vmem:[%s4 + $0x164] sm:$0xf]
    %v581 = vld [vmem:[%s4 + $0x168] sm:$0xff]
    %v582 = vld [vmem:[%s4 + $0x170] sm:$0xff]
    %v583 = vld [vmem:[%s4 + $0x178] sm:$0xf]
    %v584 = vld [vmem:[%s4 + $0x17c] sm:$0xff]
    %v585 = vld [vmem:[%s4 + $0x184] sm:$0xff]
    %v586 = vld [vmem:[%s4 + $0x18c] sm:$0xf]
    %v587 = vld [vmem:[%s4 + $0x190] sm:$0xff]
    %v588 = vld [vmem:[%s4 + $0x198] sm:$0xff]
    %v589 = vld [vmem:[%s4 + $0x1a0] sm:$0xf]
    %v590 = vld [vmem:[%s4 + $0x1a4] sm:$0xff]
    %v591 = vld [vmem:[%s4 + $0x1ac] sm:$0xff]
    %v592 = vld [vmem:[%s4 + $0x1b4] sm:$0xf]
    %v593 = vld [vmem:[%s4 + $0x1b8] sm:$0xff]
    %v594 = vld [vmem:[%s4 + $0x1c0] sm:$0xff]
    %v595 = vld [vmem:[%s4 + $0x1c8] sm:$0xf]
    %v596 = vld [vmem:[%s4 + $0x1cc] sm:$0xff]
    %v597 = vld [vmem:[%s4 + $0x1d4] sm:$0xff]
    %v598 = vld [vmem:[%s4 + $0x1dc] sm:$0xf]
    %s599 = scalar_lea.vmem %s4, 480
    %v600 = vld [vmem:[%s599] sm:$0xff]
    %v601 = vld [vmem:[%s599 + $0x8] sm:$0xff]
    %v602 = vld [vmem:[%s599 + $0x10] sm:$0xf]
    %v603 = vld [vmem:[%s599 + $0x14] sm:$0xff]
    %v604 = vld [vmem:[%s599 + $0x1c] sm:$0xff]
    %v605 = vld [vmem:[%s599 + $0x24] sm:$0xf]
    %v606 = vld [vmem:[%s599 + $0x28] sm:$0xff]
    %v607 = vld [vmem:[%s599 + $0x30] sm:$0xff]
    %v608 = vld [vmem:[%s599 + $0x38] sm:$0xf]
    %v609 = vld [vmem:[%s599 + $0x3c] sm:$0xff]
    %v610 = vld [vmem:[%s599 + $0x44] sm:$0xff]
    %v611 = vld [vmem:[%s599 + $0x4c] sm:$0xf]
    %v612 = vld [vmem:[%s599 + $0x50] sm:$0xff]
    %v613 = vld [vmem:[%s599 + $0x58] sm:$0xff]
    %v614 = vld [vmem:[%s599 + $0x60] sm:$0xf]
    %v615 = vld [vmem:[%s599 + $0x64] sm:$0xff]
    %v616 = vld [vmem:[%s599 + $0x6c] sm:$0xff]
    %v617 = vld [vmem:[%s599 + $0x74] sm:$0xf]
    %v618 = vld [vmem:[%s599 + $0x78] sm:$0xff]
    %v619 = vld [vmem:[%s599 + $0x80] sm:$0xff]
    %v620 = vld [vmem:[%s599 + $0x88] sm:$0xf]
    %v621 = vld [vmem:[%s599 + $0x8c] sm:$0xff]
    %v622 = vld [vmem:[%s599 + $0x94] sm:$0xff]
    %v623 = vld [vmem:[%s599 + $0x9c] sm:$0xf]
    %v624 = vld [vmem:[%s599 + $0xa0] sm:$0xff]
    %v625 = vld [vmem:[%s599 + $0xa8] sm:$0xff]
    %v626 = vld [vmem:[%s599 + $0xb0] sm:$0xf]
    %v627 = vld [vmem:[%s599 + $0xb4] sm:$0xff]
    %v628 = vld [vmem:[%s599 + $0xbc] sm:$0xff]
    %v629 = vld [vmem:[%s599 + $0xc4] sm:$0xf]
    %v630 = vld [vmem:[%s599 + $0xc8] sm:$0xff]
    %v631 = vld [vmem:[%s599 + $0xd0] sm:$0xff]
    %v632 = vld [vmem:[%s599 + $0xd8] sm:$0xf]
    %v633 = vld [vmem:[%s599 + $0xdc] sm:$0xff]
    %v634 = vld [vmem:[%s599 + $0xe4] sm:$0xff]
    %v635 = vld [vmem:[%s599 + $0xec] sm:$0xf]
    %v636 = vld [vmem:[%s599 + $0xf0] sm:$0xff]
    %v637 = vld [vmem:[%s599 + $0xf8] sm:$0xff]
    %v638 = vld [vmem:[%s599 + $0x100] sm:$0xf]
    %v639 = vld [vmem:[%s599 + $0x104] sm:$0xff]
    %v640 = vld [vmem:[%s599 + $0x10c] sm:$0xff]
    %v641 = vld [vmem:[%s599 + $0x114] sm:$0xf]
    %v642 = vld [vmem:[%s599 + $0x118] sm:$0xff]
    %v643 = vld [vmem:[%s599 + $0x120] sm:$0xff]
    %v644 = vld [vmem:[%s599 + $0x128] sm:$0xf]
    %v645 = vld [vmem:[%s599 + $0x12c] sm:$0xff]
    %v646 = vld [vmem:[%s599 + $0x134] sm:$0xff]
    %v647 = vld [vmem:[%s599 + $0x13c] sm:$0xf]
    %v648 = vld [vmem:[%s599 + $0x140] sm:$0xff]
    %v649 = vld [vmem:[%s599 + $0x148] sm:$0xff]
    %v650 = vld [vmem:[%s599 + $0x150] sm:$0xf]
    %v651 = vld [vmem:[%s599 + $0x154] sm:$0xff]
    %v652 = vld [vmem:[%s599 + $0x15c] sm:$0xff]
    %v653 = vld [vmem:[%s599 + $0x164] sm:$0xf]
    %v654 = vld [vmem:[%s599 + $0x168] sm:$0xff]
    %v655 = vld [vmem:[%s599 + $0x170] sm:$0xff]
    %v656 = vld [vmem:[%s599 + $0x178] sm:$0xf]
    %v657 = vld [vmem:[%s599 + $0x17c] sm:$0xff]
    %v658 = vld [vmem:[%s599 + $0x184] sm:$0xff]
    %v659 = vld [vmem:[%s599 + $0x18c] sm:$0xf]
    %v660 = vld [vmem:[%s599 + $0x190] sm:$0xff]
    %v661 = vld [vmem:[%s599 + $0x198] sm:$0xff]
    %v662 = vld [vmem:[%s599 + $0x1a0] sm:$0xf]
    %v663 = vld [vmem:[%s599 + $0x1a4] sm:$0xff]
    %v664 = vld [vmem:[%s599 + $0x1ac] sm:$0xff]
    %v665 = vld [vmem:[%s599 + $0x1b4] sm:$0xf]
    %v666 = vld [vmem:[%s599 + $0x1b8] sm:$0xff]
    %v667 = vld [vmem:[%s599 + $0x1c0] sm:$0xff]
    %v668 = vld [vmem:[%s599 + $0x1c8] sm:$0xf]
    %v669 = vld [vmem:[%s599 + $0x1cc] sm:$0xff]
    %v670 = vld [vmem:[%s599 + $0x1d4] sm:$0xff]
    %v671 = vld [vmem:[%s599 + $0x1dc] sm:$0xf]
    %vm672 = vsmask.f32 7424
    %v674 = vshrl.u32 %v519, 16
    %v676 = vshll.u32 %v519, 16
    %v678 = vrot.slane %v676, 1
    %v679 = vor.u32 %v674, %v678
    %v681 = vshll.u32 %v521, 16
    %v683 = vrot.slane %v681, 1
    %v684 = vsel %vm672, %v679, %v683
    %v686 = vshrl.u32 %v520, 16
    %v688 = vshll.u32 %v520, 16
    %v690 = vrot.slane %v688, 1
    %v691 = vor.u32 %v686, %v690
    %v693 = vshll.u32 %v522, 16
    %v695 = vrot.slane %v693, 1
    %v696 = vsel %vm672, %v691, %v695
    %v697 = vshrl.u32 %v521, 16
    %v699 = vor.u32 %v697, %v683
    %v701 = vshll.u32 %v523, 16
    %v703 = vrot.slane %v701, 1
    %v704 = vsel %vm672, %v699, %v703
    %v705 = vshrl.u32 %v522, 16
    %v707 = vor.u32 %v705, %v695
    %v709 = vshll.u32 %v524, 16
    %v711 = vrot.slane %v709, 1
    %v712 = vsel %vm672, %v707, %v711
    %v713 = vshrl.u32 %v523, 16
    %v715 = vor.u32 %v713, %v703
    %v717 = vshll.u32 %v525, 16
    %v719 = vrot.slane %v717, 1
    %v720 = vsel %vm672, %v715, %v719
    %v721 = vshrl.u32 %v524, 16
    %v723 = vor.u32 %v721, %v711
    %v725 = vshll.u32 %v526, 16
    %v727 = vrot.slane %v725, 1
    %v728 = vsel %vm672, %v723, %v727
    %v729 = vshrl.u32 %v525, 16
    %v731 = vor.u32 %v729, %v719
    %v732 = vshrl.u32 %v526, 16
    %v734 = vor.u32 %v732, %v727
    %v811 = vunpack.c.l.b16 %v600
    %v812 = vunpack.c.h.b16 %v600
    %v813 = vunpack.c.l.b16 %v601
    %v814 = vunpack.c.h.b16 %v601
    %v815 = vunpack.c.l.b16 %v602
    %v816 = vunpack.c.l.b16 %v603
    %v817 = vunpack.c.h.b16 %v603
    %v818 = vunpack.c.l.b16 %v604
    %v819 = vunpack.c.h.b16 %v604
    %v820 = vunpack.c.l.b16 %v605
    %v821 = vunpack.c.l.b16 %v606
    %v822 = vunpack.c.h.b16 %v606
    %v823 = vunpack.c.l.b16 %v607
    %v824 = vunpack.c.h.b16 %v607
    %v825 = vunpack.c.l.b16 %v608
    %v826 = vunpack.c.l.b16 %v609
    %v827 = vunpack.c.h.b16 %v609
    %v828 = vunpack.c.l.b16 %v610
    %v829 = vunpack.c.h.b16 %v610
    %v830 = vunpack.c.l.b16 %v611
    %v831 = vunpack.c.l.b16 %v612
    %v832 = vunpack.c.h.b16 %v612
    %v833 = vunpack.c.l.b16 %v613
    %v834 = vunpack.c.h.b16 %v613
    %v835 = vunpack.c.l.b16 %v614
    %v836 = vunpack.c.l.b16 %v615
    %v837 = vunpack.c.h.b16 %v615
    %v838 = vunpack.c.l.b16 %v616
    %v839 = vunpack.c.h.b16 %v616
    %v840 = vunpack.c.l.b16 %v617
    %v841 = vunpack.c.l.b16 %v618
    %v842 = vunpack.c.h.b16 %v618
    %v843 = vunpack.c.l.b16 %v619
    %v844 = vunpack.c.h.b16 %v619
    %v845 = vunpack.c.l.b16 %v620
    %v846 = vunpack.c.l.b16 %v621
    %v847 = vunpack.c.h.b16 %v621
    %v848 = vunpack.c.l.b16 %v622
    %v849 = vunpack.c.h.b16 %v622
    %v850 = vunpack.c.l.b16 %v623
    %v851 = vunpack.c.l.b16 %v624
    %v852 = vunpack.c.h.b16 %v624
    %v853 = vunpack.c.l.b16 %v625
    %v854 = vunpack.c.h.b16 %v625
    %v855 = vunpack.c.l.b16 %v626
    %v856 = vunpack.c.l.b16 %v627
    %v857 = vunpack.c.h.b16 %v627
    %v858 = vunpack.c.l.b16 %v628
    %v859 = vunpack.c.h.b16 %v628
    %v860 = vunpack.c.l.b16 %v629
    %v861 = vunpack.c.l.b16 %v630
    %v862 = vunpack.c.h.b16 %v630
    %v863 = vunpack.c.l.b16 %v631
    %v864 = vunpack.c.h.b16 %v631
    %v865 = vunpack.c.l.b16 %v632
    %v866 = vunpack.c.l.b16 %v633
    %v867 = vunpack.c.h.b16 %v633
    %v868 = vunpack.c.l.b16 %v634
    %v869 = vunpack.c.h.b16 %v634
    %v870 = vunpack.c.l.b16 %v635
    %v871 = vunpack.c.l.b16 %v636
    %v872 = vunpack.c.h.b16 %v636
    %v873 = vunpack.c.l.b16 %v637
    %v874 = vunpack.c.h.b16 %v637
    %v875 = vunpack.c.l.b16 %v638
    %v876 = vunpack.c.l.b16 %v639
    %v877 = vunpack.c.h.b16 %v639
    %v878 = vunpack.c.l.b16 %v640
    %v879 = vunpack.c.h.b16 %v640
    %v880 = vunpack.c.l.b16 %v641
    %v881 = vunpack.c.l.b16 %v642
    %v882 = vunpack.c.h.b16 %v642
    %v883 = vunpack.c.l.b16 %v643
    %v884 = vunpack.c.h.b16 %v643
    %v885 = vunpack.c.l.b16 %v644
    %v886 = vunpack.c.l.b16 %v645
    %v887 = vunpack.c.h.b16 %v645
    %v888 = vunpack.c.l.b16 %v646
    %v889 = vunpack.c.h.b16 %v646
    %v890 = vunpack.c.l.b16 %v647
    %v891 = vunpack.c.l.b16 %v648
    %v892 = vunpack.c.h.b16 %v648
    %v893 = vunpack.c.l.b16 %v649
    %v894 = vunpack.c.h.b16 %v649
    %v895 = vunpack.c.l.b16 %v650
    %v896 = vunpack.c.l.b16 %v651
    %v897 = vunpack.c.h.b16 %v651
    %v898 = vunpack.c.l.b16 %v652
    %v899 = vunpack.c.h.b16 %v652
    %v900 = vunpack.c.l.b16 %v653
    %v901 = vunpack.c.l.b16 %v654
    %v902 = vunpack.c.h.b16 %v654
    %v903 = vunpack.c.l.b16 %v655
    %v904 = vunpack.c.h.b16 %v655
    %v905 = vunpack.c.l.b16 %v656
    %v906 = vunpack.c.l.b16 %v657
    %v907 = vunpack.c.h.b16 %v657
    %v908 = vunpack.c.l.b16 %v658
    %v909 = vunpack.c.h.b16 %v658
    %v910 = vunpack.c.l.b16 %v659
    %v911 = vunpack.c.l.b16 %v660
    %v912 = vunpack.c.h.b16 %v660
    %v913 = vunpack.c.l.b16 %v661
    %v914 = vunpack.c.h.b16 %v661
    %v915 = vunpack.c.l.b16 %v662
    %v916 = vunpack.c.l.b16 %v663
    %v917 = vunpack.c.h.b16 %v663
    %v918 = vunpack.c.l.b16 %v664
    %v919 = vunpack.c.h.b16 %v664
    %v920 = vunpack.c.l.b16 %v665
    %v921 = vunpack.c.l.b16 %v666
    %v922 = vunpack.c.h.b16 %v666
    %v923 = vunpack.c.l.b16 %v667
    %v924 = vunpack.c.h.b16 %v667
    %v925 = vunpack.c.l.b16 %v668
    %v926 = vunpack.c.l.b16 %v669
    %v927 = vunpack.c.h.b16 %v669
    %v928 = vunpack.c.l.b16 %v670
    %v929 = vunpack.c.h.b16 %v670
    %v930 = vunpack.c.l.b16 %v671
    %v931 = vpack.c.b16 %v816, %v811
    %v932 = vpack.c.b16 %v817, %v812
    %v933 = vpack.c.b16 %v818, %v813
    %v934 = vpack.c.b16 %v819, %v814
    %v935 = vpack.c.b16 %v820, %v815
    %v936 = vpack.c.b16 %v826, %v821
    %v937 = vpack.c.b16 %v827, %v822
    %v938 = vpack.c.b16 %v828, %v823
    %v939 = vpack.c.b16 %v829, %v824
    %v940 = vpack.c.b16 %v830, %v825
    %v941 = vpack.c.b16 %v836, %v831
    %v942 = vpack.c.b16 %v837, %v832
    %v943 = vpack.c.b16 %v838, %v833
    %v944 = vpack.c.b16 %v839, %v834
    %v945 = vpack.c.b16 %v840, %v835
    %v946 = vpack.c.b16 %v846, %v841
    %v947 = vpack.c.b16 %v847, %v842
    %v948 = vpack.c.b16 %v848, %v843
    %v949 = vpack.c.b16 %v849, %v844
    %v950 = vpack.c.b16 %v850, %v845
    %v951 = vpack.c.b16 %v856, %v851
    %v952 = vpack.c.b16 %v857, %v852
    %v953 = vpack.c.b16 %v858, %v853
    %v954 = vpack.c.b16 %v859, %v854
    %v955 = vpack.c.b16 %v860, %v855
    %v956 = vpack.c.b16 %v866, %v861
    %v957 = vpack.c.b16 %v867, %v862
    %v958 = vpack.c.b16 %v868, %v863
    %v959 = vpack.c.b16 %v869, %v864
    %v960 = vpack.c.b16 %v870, %v865
    %v961 = vpack.c.b16 %v876, %v871
    %v962 = vpack.c.b16 %v877, %v872
    %v963 = vpack.c.b16 %v878, %v873
    %v964 = vpack.c.b16 %v879, %v874
    %v965 = vpack.c.b16 %v880, %v875
    %v966 = vpack.c.b16 %v886, %v881
    %v967 = vpack.c.b16 %v887, %v882
    %v968 = vpack.c.b16 %v888, %v883
    %v969 = vpack.c.b16 %v889, %v884
    %v970 = vpack.c.b16 %v890, %v885
    %v971 = vpack.c.b16 %v896, %v891
    %v972 = vpack.c.b16 %v897, %v892
    %v973 = vpack.c.b16 %v898, %v893
    %v974 = vpack.c.b16 %v899, %v894
    %v975 = vpack.c.b16 %v900, %v895
    %v976 = vpack.c.b16 %v906, %v901
    %v977 = vpack.c.b16 %v907, %v902
    %v978 = vpack.c.b16 %v908, %v903
    %v979 = vpack.c.b16 %v909, %v904
    %v980 = vpack.c.b16 %v910, %v905
    %v981 = vpack.c.b16 %v916, %v911
    %v982 = vpack.c.b16 %v917, %v912
    %v983 = vpack.c.b16 %v918, %v913
    %v984 = vpack.c.b16 %v919, %v914
    %v985 = vpack.c.b16 %v920, %v915
    %v986 = vpack.c.b16 %v926, %v921
    %v987 = vpack.c.b16 %v927, %v922
    %v988 = vpack.c.b16 %v928, %v923
    %v989 = vpack.c.b16 %v929, %v924
    %v990 = vpack.c.b16 %v930, %v925
    %vm1051 = vcmask 523264
    %v1053 = vsel %vm1051, %v696, 0
    %v1056 = vsel %vm1051, %v712, 0
    %v1059 = vsel %vm1051, %v728, 0
    %v1062 = vsel %vm1051, %v734, 0
    %1064 = vmatprep.subr.bf16.mxu0 %v932
    %1065 = vmatpush1.bf16.msra.mxu0 %v931
    %1066 = vmatprep.subr.bf16.mxu0 %v937
    %1067 = vmatpush1.bf16.msra.mxu0 %v936
    %1068 = vmatprep.subr.bf16.mxu0 %v942
    %1069 = vmatpush1.bf16.msra.mxu0 %v941
    %1070 = vmatprep.subr.bf16.mxu0 %v947
    %1071 = vmatpush1.bf16.msra.mxu0 %v946
    %1072 = vmatprep.subr.bf16.mxu0 %v952
    %1073 = vmatpush1.bf16.msra.mxu0 %v951
    %1074 = vmatprep.subr.bf16.mxu0 %v957
    %1075 = vmatpush1.bf16.msra.mxu0 %v956
    %1076 = vmatprep.subr.bf16.mxu0 %v962
    %1077 = vmatpush1.bf16.msra.mxu0 %v961
    %1078 = vmatprep.subr.bf16.mxu0 %v967
    %1079 = vmatpush1.bf16.msra.mxu0 %v966
    %1080 = vmatprep.subr.bf16.mxu0 %v972
    %1081 = vmatpush1.bf16.msra.mxu0 %v971
    %1082 = vmatprep.subr.bf16.mxu0 %v977
    %1083 = vmatpush1.bf16.msra.mxu0 %v976
    %1084 = vmatprep.subr.bf16.mxu0 %v982
    %1085 = vmatpush1.bf16.msra.mxu0 %v981
    %1086 = vmatprep.subr.bf16.mxu0 %v987
    %1087 = vmatpush1.bf16.msra.mxu0 %v986
    %1088 = vmatprep.subr.bf16.mxu0 0
    %1089 = vmatpush1.bf16.msra.mxu0 0
    %1090 = vmatprep.subr.bf16.mxu0 0
    %1091 = vmatpush1.bf16.msra.mxu0 0
    %1092 = vmatprep.subr.bf16.mxu0 0
    %1093 = vmatpush1.bf16.msra.mxu0 0
    %1094 = vmatprep.subr.bf16.mxu0 0
    %1095 = vmatpush1.bf16.msra.mxu0 0
    %1096 = vmatprep.mubr.bf16.mxu0 %v1053
    %1097 = vmatmul.mubr.bf16.gmra.mrb[0].mxu0 %v684
    %v1098 = vpop.f32.mrb[0].mxu0
    %v1099 = vadd.f32 0.0, %v1098
    %v1100 = vpop.f32.mrb[0].mxu0
    %v1101 = vadd.f32 0.0, %v1100
    %v1102 = vpop.f32.mrb[0].mxu0
    %v1103 = vadd.f32 0.0, %v1102
    %v1104 = vpop.f32.mrb[0].mxu0
    %v1105 = vadd.f32 0.0, %v1104
    %1106 = vmatprep.mubr.bf16.mxu0 %v1056
    %1107 = vmatmul.mubr.bf16.gmra.mrb[0].mxu0 %v704
    %v1108 = vpop.f32.mrb[0].mxu0
    %v1109 = vadd.f32 0.0, %v1108
    %v1110 = vpop.f32.mrb[0].mxu0
    %v1111 = vadd.f32 0.0, %v1110
    %v1112 = vpop.f32.mrb[0].mxu0
    %v1113 = vadd.f32 0.0, %v1112
    %v1114 = vpop.f32.mrb[0].mxu0
    %v1115 = vadd.f32 0.0, %v1114
    %1116 = vmatprep.mubr.bf16.mxu0 %v1059
    %1117 = vmatmul.mubr.bf16.gmra.mrb[0].mxu0 %v720
    %v1118 = vpop.f32.mrb[0].mxu0
    %v1119 = vadd.f32 0.0, %v1118
    %v1120 = vpop.f32.mrb[0].mxu0
    %v1121 = vadd.f32 0.0, %v1120
    %v1122 = vpop.f32.mrb[0].mxu0
    %v1123 = vadd.f32 0.0, %v1122
    %v1124 = vpop.f32.mrb[0].mxu0
    %v1125 = vadd.f32 0.0, %v1124
    %1126 = vmatprep.mubr.bf16.mxu0 %v1062
    %1127 = vmatmul.mubr.bf16.gmra.mrb[0].mxu0 %v731
    %v1128 = vpop.f32.mrb[0].mxu0
    %v1129 = vadd.f32 0.0, %v1128
    %v1130 = vpop.f32.mrb[0].mxu0
    %v1131 = vadd.f32 0.0, %v1130
    %v1132 = vpop.f32.mrb[0].mxu0
    %v1133 = vpop.f32.mrb[0].mxu0
    %1134 = vdwg.mxu0
    %1135 = vmatprep.subr.bf16.mxu0 %v934
    %1136 = vmatpush1.bf16.msra.mxu0 %v933
    %1137 = vmatprep.subr.bf16.mxu0 %v939
    %1138 = vmatpush1.bf16.msra.mxu0 %v938
    %1139 = vmatprep.subr.bf16.mxu0 %v944
    %1140 = vmatpush1.bf16.msra.mxu0 %v943
    %1141 = vmatprep.subr.bf16.mxu0 %v949
    %1142 = vmatpush1.bf16.msra.mxu0 %v948
    %1143 = vmatprep.subr.bf16.mxu0 %v954
    %1144 = vmatpush1.bf16.msra.mxu0 %v953
    %1145 = vmatprep.subr.bf16.mxu0 %v959
    %1146 = vmatpush1.bf16.msra.mxu0 %v958
    %1147 = vmatprep.subr.bf16.mxu0 %v964
    %1148 = vmatpush1.bf16.msra.mxu0 %v963
    %1149 = vmatprep.subr.bf16.mxu0 %v969
    %1150 = vmatpush1.bf16.msra.mxu0 %v968
    %1151 = vmatprep.subr.bf16.mxu0 %v974
    %1152 = vmatpush1.bf16.msra.mxu0 %v973
    %1153 = vmatprep.subr.bf16.mxu0 %v979
    %1154 = vmatpush1.bf16.msra.mxu0 %v978
    %1155 = vmatprep.subr.bf16.mxu0 %v984
    %1156 = vmatpush1.bf16.msra.mxu0 %v983
    %1157 = vmatprep.subr.bf16.mxu0 %v989
    %1158 = vmatpush1.bf16.msra.mxu0 %v988
    %1159 = vmatprep.subr.bf16.mxu0 0
    %1160 = vmatpush1.bf16.msra.mxu0 0
    %1161 = vmatprep.subr.bf16.mxu0 0
    %1162 = vmatpush1.bf16.msra.mxu0 0
    %1163 = vmatprep.subr.bf16.mxu0 0
    %1164 = vmatpush1.bf16.msra.mxu0 0
    %1165 = vmatprep.subr.bf16.mxu0 0
    %1166 = vmatpush1.bf16.msra.mxu0 0
    %1167 = vmatprep.mubr.bf16.mxu0 %v1053
    %1168 = vmatmul.mubr.bf16.gmra.mrb[0].mxu0 %v684
    %v1169 = vpop.f32.mrb[0].mxu0
    %v1170 = vadd.f32 0.0, %v1169
    %v1171 = vpop.f32.mrb[0].mxu0
    %v1172 = vadd.f32 0.0, %v1171
    %v1173 = vpop.f32.mrb[0].mxu0
    %v1174 = vadd.f32 0.0, %v1173
    %v1175 = vpop.f32.mrb[0].mxu0
    %v1176 = vadd.f32 0.0, %v1175
    %1177 = vmatprep.mubr.bf16.mxu0 %v1056
    %1178 = vmatmul.mubr.bf16.gmra.mrb[0].mxu0 %v704
    %v1179 = vpop.f32.mrb[0].mxu0
    %v1180 = vadd.f32 0.0, %v1179
    %v1181 = vpop.f32.mrb[0].mxu0
    %v1182 = vadd.f32 0.0, %v1181
    %v1183 = vpop.f32.mrb[0].mxu0
    %v1184 = vadd.f32 0.0, %v1183
    %v1185 = vpop.f32.mrb[0].mxu0
    %v1186 = vadd.f32 0.0, %v1185
    %1187 = vmatprep.mubr.bf16.mxu0 %v1059
    %1188 = vmatmul.mubr.bf16.gmra.mrb[0].mxu0 %v720
    %v1189 = vpop.f32.mrb[0].mxu0
    %v1190 = vadd.f32 0.0, %v1189
    %v1191 = vpop.f32.mrb[0].mxu0
    %v1192 = vadd.f32 0.0, %v1191
    %v1193 = vpop.f32.mrb[0].mxu0
    %v1194 = vadd.f32 0.0, %v1193
    %v1195 = vpop.f32.mrb[0].mxu0
    %v1196 = vadd.f32 0.0, %v1195
    %1197 = vmatprep.mubr.bf16.mxu0 %v1062
    %1198 = vmatmul.mubr.bf16.gmra.mrb[0].mxu0 %v731
    %v1199 = vpop.f32.mrb[0].mxu0
    %v1200 = vadd.f32 0.0, %v1199
    %v1201 = vpop.f32.mrb[0].mxu0
    %v1202 = vadd.f32 0.0, %v1201
    %v1203 = vpop.f32.mrb[0].mxu0
    %v1204 = vpop.f32.mrb[0].mxu0
    %1205 = vdwg.mxu0
    %1206 = vmatprep.subr.bf16.mxu0 0
    %1207 = vmatpush1.bf16.msra.mxu0 %v935
    %1208 = vmatprep.subr.bf16.mxu0 0
    %1209 = vmatpush1.bf16.msra.mxu0 %v940
    %1210 = vmatprep.subr.bf16.mxu0 0
    %1211 = vmatpush1.bf16.msra.mxu0 %v945
    %1212 = vmatprep.subr.bf16.mxu0 0
    %1213 = vmatpush1.bf16.msra.mxu0 %v950
    %1214 = vmatprep.subr.bf16.mxu0 0
    %1215 = vmatpush1.bf16.msra.mxu0 %v955
    %1216 = vmatprep.subr.bf16.mxu0 0
    %1217 = vmatpush1.bf16.msra.mxu0 %v960
    %1218 = vmatprep.subr.bf16.mxu0 0
    %1219 = vmatpush1.bf16.msra.mxu0 %v965
    %1220 = vmatprep.subr.bf16.mxu0 0
    %1221 = vmatpush1.bf16.msra.mxu0 %v970
    %1222 = vmatprep.subr.bf16.mxu0 0
    %1223 = vmatpush1.bf16.msra.mxu0 %v975
    %1224 = vmatprep.subr.bf16.mxu0 0
    %1225 = vmatpush1.bf16.msra.mxu0 %v980
    %1226 = vmatprep.subr.bf16.mxu0 0
    %1227 = vmatpush1.bf16.msra.mxu0 %v985
    %1228 = vmatprep.subr.bf16.mxu0 0
    %1229 = vmatpush1.bf16.msra.mxu0 %v990
    %1230 = vmatprep.subr.bf16.mxu0 0
    %1231 = vmatpush1.bf16.msra.mxu0 0
    %1232 = vmatprep.subr.bf16.mxu0 0
    %1233 = vmatpush1.bf16.msra.mxu0 0
    %1234 = vmatprep.subr.bf16.mxu0 0
    %1235 = vmatpush1.bf16.msra.mxu0 0
    %1236 = vmatprep.subr.bf16.mxu0 0
    %1237 = vmatpush1.bf16.msra.mxu0 0
    %1238 = vmatprep.mubr.bf16.mxu0 %v1053
    %1239 = vmatmul.mubr.bf16.gmra.mrb[0].mxu0 %v684
    %v1240 = vpop.f32.mrb[0].mxu0
    %v1241 = vadd.f32 0.0, %v1240
    %v1242 = vpop.f32.mrb[0].mxu0
    %v1243 = vpop.f32.mrb[0].mxu0
    %v1244 = vadd.f32 0.0, %v1243
    %v1245 = vpop.f32.mrb[0].mxu0
    %1246 = vmatprep.mubr.bf16.mxu0 %v1056
    %1247 = vmatmul.mubr.bf16.gmra.mrb[0].mxu0 %v704
    %v1248 = vpop.f32.mrb[0].mxu0
    %v1249 = vadd.f32 0.0, %v1248
    %v1250 = vpop.f32.mrb[0].mxu0
    %v1251 = vpop.f32.mrb[0].mxu0
    %v1252 = vadd.f32 0.0, %v1251
    %v1253 = vpop.f32.mrb[0].mxu0
    %1254 = vmatprep.mubr.bf16.mxu0 %v1059
    %1255 = vmatmul.mubr.bf16.gmra.mrb[0].mxu0 %v720
    %v1256 = vpop.f32.mrb[0].mxu0
    %v1257 = vadd.f32 0.0, %v1256
    %v1258 = vpop.f32.mrb[0].mxu0
    %v1259 = vpop.f32.mrb[0].mxu0
    %v1260 = vadd.f32 0.0, %v1259
    %v1261 = vpop.f32.mrb[0].mxu0
    %1262 = vmatprep.mubr.bf16.mxu0 %v1062
    %1263 = vmatmul.mubr.bf16.gmra.mrb[0].mxu0 %v731
    %v1264 = vpop.f32.mrb[0].mxu0
    %v1265 = vadd.f32 0.0, %v1264
    %v1266 = vpop.f32.mrb[0].mxu0
    %v1267 = vpop.f32.mrb[0].mxu0
    %v1268 = vpop.f32.mrb[0].mxu0
    %1269 = vdwg.mxu0
    %v1342 = vunpack.c.l.b16 %v527
    %v1343 = vunpack.c.h.b16 %v527
    %v1344 = vunpack.c.l.b16 %v528
    %v1345 = vunpack.c.h.b16 %v528
    %v1346 = vunpack.c.l.b16 %v529
    %v1347 = vunpack.c.l.b16 %v530
    %v1348 = vunpack.c.h.b16 %v530
    %v1349 = vunpack.c.l.b16 %v531
    %v1350 = vunpack.c.h.b16 %v531
    %v1351 = vunpack.c.l.b16 %v532
    %v1352 = vunpack.c.l.b16 %v533
    %v1353 = vunpack.c.h.b16 %v533
    %v1354 = vunpack.c.l.b16 %v534
    %v1355 = vunpack.c.h.b16 %v534
    %v1356 = vunpack.c.l.b16 %v535
    %v1357 = vunpack.c.l.b16 %v536
    %v1358 = vunpack.c.h.b16 %v536
    %v1359 = vunpack.c.l.b16 %v537
    %v1360 = vunpack.c.h.b16 %v537
    %v1361 = vunpack.c.l.b16 %v538
    %v1362 = vunpack.c.l.b16 %v539
    %v1363 = vunpack.c.h.b16 %v539
    %v1364 = vunpack.c.l.b16 %v540
    %v1365 = vunpack.c.h.b16 %v540
    %v1366 = vunpack.c.l.b16 %v541
    %v1367 = vunpack.c.l.b16 %v542
    %v1368 = vunpack.c.h.b16 %v542
    %v1369 = vunpack.c.l.b16 %v543
    %v1370 = vunpack.c.h.b16 %v543
    %v1371 = vunpack.c.l.b16 %v544
    %v1372 = vunpack.c.l.b16 %v545
    %v1373 = vunpack.c.h.b16 %v545
    %v1374 = vunpack.c.l.b16 %v546
    %v1375 = vunpack.c.h.b16 %v546
    %v1376 = vunpack.c.l.b16 %v547
    %v1377 = vunpack.c.l.b16 %v548
    %v1378 = vunpack.c.h.b16 %v548
    %v1379 = vunpack.c.l.b16 %v549
    %v1380 = vunpack.c.h.b16 %v549
    %v1381 = vunpack.c.l.b16 %v550
    %v1382 = vunpack.c.l.b16 %v551
    %v1383 = vunpack.c.h.b16 %v551
    %v1384 = vunpack.c.l.b16 %v552
    %v1385 = vunpack.c.h.b16 %v552
    %v1386 = vunpack.c.l.b16 %v553
    %v1387 = vunpack.c.l.b16 %v554
    %v1388 = vunpack.c.h.b16 %v554
    %v1389 = vunpack.c.l.b16 %v555
    %v1390 = vunpack.c.h.b16 %v555
    %v1391 = vunpack.c.l.b16 %v556
    %v1392 = vunpack.c.l.b16 %v557
    %v1393 = vunpack.c.h.b16 %v557
    %v1394 = vunpack.c.l.b16 %v558
    %v1395 = vunpack.c.h.b16 %v558
    %v1396 = vunpack.c.l.b16 %v559
    %v1397 = vunpack.c.l.b16 %v560
    %v1398 = vunpack.c.h.b16 %v560
    %v1399 = vunpack.c.l.b16 %v561
    %v1400 = vunpack.c.h.b16 %v561
    %v1401 = vunpack.c.l.b16 %v562
    %v1402 = vunpack.c.l.b16 %v563
    %v1403 = vunpack.c.h.b16 %v563
    %v1404 = vunpack.c.l.b16 %v564
    %v1405 = vunpack.c.h.b16 %v564
    %v1406 = vunpack.c.l.b16 %v565
    %v1407 = vunpack.c.l.b16 %v566
    %v1408 = vunpack.c.h.b16 %v566
    %v1409 = vunpack.c.l.b16 %v567
    %v1410 = vunpack.c.h.b16 %v567
    %v1411 = vunpack.c.l.b16 %v568
    %v1412 = vunpack.c.l.b16 %v569
    %v1413 = vunpack.c.h.b16 %v569
    %v1414 = vunpack.c.l.b16 %v570
    %v1415 = vunpack.c.h.b16 %v570
    %v1416 = vunpack.c.l.b16 %v571
    %v1417 = vunpack.c.l.b16 %v572
    %v1418 = vunpack.c.h.b16 %v572
    %v1419 = vunpack.c.l.b16 %v573
    %v1420 = vunpack.c.h.b16 %v573
    %v1421 = vunpack.c.l.b16 %v574
    %v1422 = vunpack.c.l.b16 %v575
    %v1423 = vunpack.c.h.b16 %v575
    %v1424 = vunpack.c.l.b16 %v576
    %v1425 = vunpack.c.h.b16 %v576
    %v1426 = vunpack.c.l.b16 %v577
    %v1427 = vunpack.c.l.b16 %v578
    %v1428 = vunpack.c.h.b16 %v578
    %v1429 = vunpack.c.l.b16 %v579
    %v1430 = vunpack.c.h.b16 %v579
    %v1431 = vunpack.c.l.b16 %v580
    %v1432 = vunpack.c.l.b16 %v581
    %v1433 = vunpack.c.h.b16 %v581
    %v1434 = vunpack.c.l.b16 %v582
    %v1435 = vunpack.c.h.b16 %v582
    %v1436 = vunpack.c.l.b16 %v583
    %v1437 = vunpack.c.l.b16 %v584
    %v1438 = vunpack.c.h.b16 %v584
    %v1439 = vunpack.c.l.b16 %v585
    %v1440 = vunpack.c.h.b16 %v585
    %v1441 = vunpack.c.l.b16 %v586
    %v1442 = vunpack.c.l.b16 %v587
    %v1443 = vunpack.c.h.b16 %v587
    %v1444 = vunpack.c.l.b16 %v588
    %v1445 = vunpack.c.h.b16 %v588
    %v1446 = vunpack.c.l.b16 %v589
    %v1447 = vunpack.c.l.b16 %v590
    %v1448 = vunpack.c.h.b16 %v590
    %v1449 = vunpack.c.l.b16 %v591
    %v1450 = vunpack.c.h.b16 %v591
    %v1451 = vunpack.c.l.b16 %v592
    %v1452 = vunpack.c.l.b16 %v593
    %v1453 = vunpack.c.h.b16 %v593
    %v1454 = vunpack.c.l.b16 %v594
    %v1455 = vunpack.c.h.b16 %v594
    %v1456 = vunpack.c.l.b16 %v595
    %v1457 = vunpack.c.l.b16 %v596
    %v1458 = vunpack.c.h.b16 %v596
    %v1459 = vunpack.c.l.b16 %v597
    %v1460 = vunpack.c.h.b16 %v597
    %v1461 = vunpack.c.l.b16 %v598
    %v1462 = vpack.c.b16 %v1347, %v1342
    %v1463 = vpack.c.b16 %v1348, %v1343
    %v1464 = vpack.c.b16 %v1349, %v1344
    %v1465 = vpack.c.b16 %v1350, %v1345
    %v1466 = vpack.c.b16 %v1351, %v1346
    %v1467 = vpack.c.b16 %v1357, %v1352
    %v1468 = vpack.c.b16 %v1358, %v1353
    %v1469 = vpack.c.b16 %v1359, %v1354
    %v1470 = vpack.c.b16 %v1360, %v1355
    %v1471 = vpack.c.b16 %v1361, %v1356
    %v1472 = vpack.c.b16 %v1367, %v1362
    %v1473 = vpack.c.b16 %v1368, %v1363
    %v1474 = vpack.c.b16 %v1369, %v1364
    %v1475 = vpack.c.b16 %v1370, %v1365
    %v1476 = vpack.c.b16 %v1371, %v1366
    %v1477 = vpack.c.b16 %v1377, %v1372
    %v1478 = vpack.c.b16 %v1378, %v1373
    %v1479 = vpack.c.b16 %v1379, %v1374
    %v1480 = vpack.c.b16 %v1380, %v1375
    %v1481 = vpack.c.b16 %v1381, %v1376
    %v1482 = vpack.c.b16 %v1387, %v1382
    %v1483 = vpack.c.b16 %v1388, %v1383
    %v1484 = vpack.c.b16 %v1389, %v1384
    %v1485 = vpack.c.b16 %v1390, %v1385
    %v1486 = vpack.c.b16 %v1391, %v1386
    %v1487 = vpack.c.b16 %v1397, %v1392
    %v1488 = vpack.c.b16 %v1398, %v1393
    %v1489 = vpack.c.b16 %v1399, %v1394
    %v1490 = vpack.c.b16 %v1400, %v1395
    %v1491 = vpack.c.b16 %v1401, %v1396
    %v1492 = vpack.c.b16 %v1407, %v1402
    %v1493 = vpack.c.b16 %v1408, %v1403
    %v1494 = vpack.c.b16 %v1409, %v1404
    %v1495 = vpack.c.b16 %v1410, %v1405
    %v1496 = vpack.c.b16 %v1411, %v1406
    %v1497 = vpack.c.b16 %v1417, %v1412
    %v1498 = vpack.c.b16 %v1418, %v1413
    %v1499 = vpack.c.b16 %v1419, %v1414
    %v1500 = vpack.c.b16 %v1420, %v1415
    %v1501 = vpack.c.b16 %v1421, %v1416
    %v1502 = vpack.c.b16 %v1427, %v1422
    %v1503 = vpack.c.b16 %v1428, %v1423
    %v1504 = vpack.c.b16 %v1429, %v1424
    %v1505 = vpack.c.b16 %v1430, %v1425
    %v1506 = vpack.c.b16 %v1431, %v1426
    %v1507 = vpack.c.b16 %v1437, %v1432
    %v1508 = vpack.c.b16 %v1438, %v1433
    %v1509 = vpack.c.b16 %v1439, %v1434
    %v1510 = vpack.c.b16 %v1440, %v1435
    %v1511 = vpack.c.b16 %v1441, %v1436
    %v1512 = vpack.c.b16 %v1447, %v1442
    %v1513 = vpack.c.b16 %v1448, %v1443
    %v1514 = vpack.c.b16 %v1449, %v1444
    %v1515 = vpack.c.b16 %v1450, %v1445
    %v1516 = vpack.c.b16 %v1451, %v1446
    %v1517 = vpack.c.b16 %v1457, %v1452
    %v1518 = vpack.c.b16 %v1458, %v1453
    %v1519 = vpack.c.b16 %v1459, %v1454
    %v1520 = vpack.c.b16 %v1460, %v1455
    %v1521 = vpack.c.b16 %v1461, %v1456
    %v1582 = vsel %vm1051, %v520, 0
    %v1584 = vsel %vm1051, %v522, 0
    %v1586 = vsel %vm1051, %v524, 0
    %v1588 = vsel %vm1051, %v526, 0
    %1590 = vmatprep.subr.bf16.mxu0 %v1463
    %1591 = vmatpush1.bf16.msra.mxu0 %v1462
    %1592 = vmatprep.subr.bf16.mxu0 %v1468
    %1593 = vmatpush1.bf16.msra.mxu0 %v1467
    %1594 = vmatprep.subr.bf16.mxu0 %v1473
    %1595 = vmatpush1.bf16.msra.mxu0 %v1472
    %1596 = vmatprep.subr.bf16.mxu0 %v1478
    %1597 = vmatpush1.bf16.msra.mxu0 %v1477
    %1598 = vmatprep.subr.bf16.mxu0 %v1483
    %1599 = vmatpush1.bf16.msra.mxu0 %v1482
    %1600 = vmatprep.subr.bf16.mxu0 %v1488
    %1601 = vmatpush1.bf16.msra.mxu0 %v1487
    %1602 = vmatprep.subr.bf16.mxu0 %v1493
    %1603 = vmatpush1.bf16.msra.mxu0 %v1492
    %1604 = vmatprep.subr.bf16.mxu0 %v1498
    %1605 = vmatpush1.bf16.msra.mxu0 %v1497
    %1606 = vmatprep.subr.bf16.mxu0 %v1503
    %1607 = vmatpush1.bf16.msra.mxu0 %v1502
    %1608 = vmatprep.subr.bf16.mxu0 %v1508
    %1609 = vmatpush1.bf16.msra.mxu0 %v1507
    %1610 = vmatprep.subr.bf16.mxu0 %v1513
    %1611 = vmatpush1.bf16.msra.mxu0 %v1512
    %1612 = vmatprep.subr.bf16.mxu0 %v1518
    %1613 = vmatpush1.bf16.msra.mxu0 %v1517
    %1614 = vmatprep.subr.bf16.mxu0 0
    %1615 = vmatpush1.bf16.msra.mxu0 0
    %1616 = vmatprep.subr.bf16.mxu0 0
    %1617 = vmatpush1.bf16.msra.mxu0 0
    %1618 = vmatprep.subr.bf16.mxu0 0
    %1619 = vmatpush1.bf16.msra.mxu0 0
    %1620 = vmatprep.subr.bf16.mxu0 0
    %1621 = vmatpush1.bf16.msra.mxu0 0
    %1622 = vmatprep.mubr.bf16.mxu0 %v1582
    %1623 = vmatmul.mubr.bf16.gmra.mrb[0].mxu0 %v519
    %v1624 = vpop.f32.mrb[0].mxu0
    %v1625 = vadd.f32 %v1099, %v1624
    %v1626 = vpop.f32.mrb[0].mxu0
    %v1627 = vadd.f32 %v1101, %v1626
    %v1628 = vpop.f32.mrb[0].mxu0
    %v1629 = vadd.f32 %v1103, %v1628
    %v1630 = vpop.f32.mrb[0].mxu0
    %v1631 = vadd.f32 %v1105, %v1630
    %1632 = vmatprep.mubr.bf16.mxu0 %v1584
    %1633 = vmatmul.mubr.bf16.gmra.mrb[0].mxu0 %v521
    %v1634 = vpop.f32.mrb[0].mxu0
    %v1635 = vadd.f32 %v1109, %v1634
    %v1636 = vpop.f32.mrb[0].mxu0
    %v1637 = vadd.f32 %v1111, %v1636
    %v1638 = vpop.f32.mrb[0].mxu0
    %v1639 = vadd.f32 %v1113, %v1638
    %v1640 = vpop.f32.mrb[0].mxu0
    %v1641 = vadd.f32 %v1115, %v1640
    %1642 = vmatprep.mubr.bf16.mxu0 %v1586
    %1643 = vmatmul.mubr.bf16.gmra.mrb[0].mxu0 %v523
    %v1644 = vpop.f32.mrb[0].mxu0
    %v1645 = vadd.f32 %v1119, %v1644
    %v1646 = vpop.f32.mrb[0].mxu0
    %v1647 = vadd.f32 %v1121, %v1646
    %v1648 = vpop.f32.mrb[0].mxu0
    %v1649 = vadd.f32 %v1123, %v1648
    %v1650 = vpop.f32.mrb[0].mxu0
    %v1651 = vadd.f32 %v1125, %v1650
    %1652 = vmatprep.mubr.bf16.mxu0 %v1588
    %1653 = vmatmul.mubr.bf16.gmra.mrb[0].mxu0 %v525
    %v1654 = vpop.f32.mrb[0].mxu0
    %v1655 = vadd.f32 %v1129, %v1654
    %v1656 = vpop.f32.mrb[0].mxu0
    %v1657 = vadd.f32 %v1131, %v1656
    %v1658 = vpop.f32.mrb[0].mxu0
    %v1659 = vpop.f32.mrb[0].mxu0
    %1660 = vdwg.mxu0
    %1661 = vmatprep.subr.bf16.mxu0 %v1465
    %1662 = vmatpush1.bf16.msra.mxu0 %v1464
    %1663 = vmatprep.subr.bf16.mxu0 %v1470
    %1664 = vmatpush1.bf16.msra.mxu0 %v1469
    %1665 = vmatprep.subr.bf16.mxu0 %v1475
    %1666 = vmatpush1.bf16.msra.mxu0 %v1474
    %1667 = vmatprep.subr.bf16.mxu0 %v1480
    %1668 = vmatpush1.bf16.msra.mxu0 %v1479
    %1669 = vmatprep.subr.bf16.mxu0 %v1485
    %1670 = vmatpush1.bf16.msra.mxu0 %v1484
    %1671 = vmatprep.subr.bf16.mxu0 %v1490
    %1672 = vmatpush1.bf16.msra.mxu0 %v1489
    %1673 = vmatprep.subr.bf16.mxu0 %v1495
    %1674 = vmatpush1.bf16.msra.mxu0 %v1494
    %1675 = vmatprep.subr.bf16.mxu0 %v1500
    %1676 = vmatpush1.bf16.msra.mxu0 %v1499
    %1677 = vmatprep.subr.bf16.mxu0 %v1505
    %1678 = vmatpush1.bf16.msra.mxu0 %v1504
    %1679 = vmatprep.subr.bf16.mxu0 %v1510
    %1680 = vmatpush1.bf16.msra.mxu0 %v1509
    %1681 = vmatprep.subr.bf16.mxu0 %v1515
    %1682 = vmatpush1.bf16.msra.mxu0 %v1514
    %1683 = vmatprep.subr.bf16.mxu0 %v1520
    %1684 = vmatpush1.bf16.msra.mxu0 %v1519
    %1685 = vmatprep.subr.bf16.mxu0 0
    %1686 = vmatpush1.bf16.msra.mxu0 0
    %1687 = vmatprep.subr.bf16.mxu0 0
    %1688 = vmatpush1.bf16.msra.mxu0 0
    %1689 = vmatprep.subr.bf16.mxu0 0
    %1690 = vmatpush1.bf16.msra.mxu0 0
    %1691 = vmatprep.subr.bf16.mxu0 0
    %1692 = vmatpush1.bf16.msra.mxu0 0
    %1693 = vmatprep.mubr.bf16.mxu0 %v1582
    %1694 = vmatmul.mubr.bf16.gmra.mrb[0].mxu0 %v519
    %v1695 = vpop.f32.mrb[0].mxu0
    %v1696 = vadd.f32 %v1170, %v1695
    %v1697 = vpop.f32.mrb[0].mxu0
    %v1698 = vadd.f32 %v1172, %v1697
    %v1699 = vpop.f32.mrb[0].mxu0
    %v1700 = vadd.f32 %v1174, %v1699
    %v1701 = vpop.f32.mrb[0].mxu0
    %v1702 = vadd.f32 %v1176, %v1701
    %1703 = vmatprep.mubr.bf16.mxu0 %v1584
    %1704 = vmatmul.mubr.bf16.gmra.mrb[0].mxu0 %v521
    %v1705 = vpop.f32.mrb[0].mxu0
    %v1706 = vadd.f32 %v1180, %v1705
    %v1707 = vpop.f32.mrb[0].mxu0
    %v1708 = vadd.f32 %v1182, %v1707
    %v1709 = vpop.f32.mrb[0].mxu0
    %v1710 = vadd.f32 %v1184, %v1709
    %v1711 = vpop.f32.mrb[0].mxu0
    %v1712 = vadd.f32 %v1186, %v1711
    %1713 = vmatprep.mubr.bf16.mxu0 %v1586
    %1714 = vmatmul.mubr.bf16.gmra.mrb[0].mxu0 %v523
    %v1715 = vpop.f32.mrb[0].mxu0
    %v1716 = vadd.f32 %v1190, %v1715
    %v1717 = vpop.f32.mrb[0].mxu0
    %v1718 = vadd.f32 %v1192, %v1717
    %v1719 = vpop.f32.mrb[0].mxu0
    %v1720 = vadd.f32 %v1194, %v1719
    %v1721 = vpop.f32.mrb[0].mxu0
    %v1722 = vadd.f32 %v1196, %v1721
    %1723 = vmatprep.mubr.bf16.mxu0 %v1588
    %1724 = vmatmul.mubr.bf16.gmra.mrb[0].mxu0 %v525
    %v1725 = vpop.f32.mrb[0].mxu0
    %v1726 = vadd.f32 %v1200, %v1725
    %v1727 = vpop.f32.mrb[0].mxu0
    %v1728 = vadd.f32 %v1202, %v1727
    %v1729 = vpop.f32.mrb[0].mxu0
    %v1730 = vpop.f32.mrb[0].mxu0
    %1731 = vdwg.mxu0
    %1732 = vmatprep.subr.bf16.mxu0 0
    %1733 = vmatpush1.bf16.msra.mxu0 %v1466
    %1734 = vmatprep.subr.bf16.mxu0 0
    %1735 = vmatpush1.bf16.msra.mxu0 %v1471
    %1736 = vmatprep.subr.bf16.mxu0 0
    %1737 = vmatpush1.bf16.msra.mxu0 %v1476
    %1738 = vmatprep.subr.bf16.mxu0 0
    %1739 = vmatpush1.bf16.msra.mxu0 %v1481
    %1740 = vmatprep.subr.bf16.mxu0 0
    %1741 = vmatpush1.bf16.msra.mxu0 %v1486
    %1742 = vmatprep.subr.bf16.mxu0 0
    %1743 = vmatpush1.bf16.msra.mxu0 %v1491
    %1744 = vmatprep.subr.bf16.mxu0 0
    %1745 = vmatpush1.bf16.msra.mxu0 %v1496
    %1746 = vmatprep.subr.bf16.mxu0 0
    %1747 = vmatpush1.bf16.msra.mxu0 %v1501
    %1748 = vmatprep.subr.bf16.mxu0 0
    %1749 = vmatpush1.bf16.msra.mxu0 %v1506
    %1750 = vmatprep.subr.bf16.mxu0 0
    %1751 = vmatpush1.bf16.msra.mxu0 %v1511
    %1752 = vmatprep.subr.bf16.mxu0 0
    %1753 = vmatpush1.bf16.msra.mxu0 %v1516
    %1754 = vmatprep.subr.bf16.mxu0 0
    %1755 = vmatpush1.bf16.msra.mxu0 %v1521
    %1756 = vmatprep.subr.bf16.mxu0 0
    %1757 = vmatpush1.bf16.msra.mxu0 0
    %1758 = vmatprep.subr.bf16.mxu0 0
    %1759 = vmatpush1.bf16.msra.mxu0 0
    %1760 = vmatprep.subr.bf16.mxu0 0
    %1761 = vmatpush1.bf16.msra.mxu0 0
    %1762 = vmatprep.subr.bf16.mxu0 0
    %1763 = vmatpush1.bf16.msra.mxu0 0
    %1764 = vmatprep.mubr.bf16.mxu0 %v1582
    %1765 = vmatmul.mubr.bf16.gmra.mrb[0].mxu0 %v519
    %v1766 = vpop.f32.mrb[0].mxu0
    %v1767 = vadd.f32 %v1241, %v1766
    %v1768 = vpop.f32.mrb[0].mxu0
    %v1769 = vpop.f32.mrb[0].mxu0
    %v1770 = vadd.f32 %v1244, %v1769
    %v1771 = vpop.f32.mrb[0].mxu0
    %1772 = vmatprep.mubr.bf16.mxu0 %v1584
    %1773 = vmatmul.mubr.bf16.gmra.mrb[0].mxu0 %v521
    %v1774 = vpop.f32.mrb[0].mxu0
    %v1775 = vadd.f32 %v1249, %v1774
    %v1776 = vpop.f32.mrb[0].mxu0
    %v1777 = vpop.f32.mrb[0].mxu0
    %v1778 = vadd.f32 %v1252, %v1777
    %v1779 = vpop.f32.mrb[0].mxu0
    %1780 = vmatprep.mubr.bf16.mxu0 %v1586
    %1781 = vmatmul.mubr.bf16.gmra.mrb[0].mxu0 %v523
    %v1782 = vpop.f32.mrb[0].mxu0
    %v1783 = vadd.f32 %v1257, %v1782
    %v1784 = vpop.f32.mrb[0].mxu0
    %v1785 = vpop.f32.mrb[0].mxu0
    %v1786 = vadd.f32 %v1260, %v1785
    %v1787 = vpop.f32.mrb[0].mxu0
    %1788 = vmatprep.mubr.bf16.mxu0 %v1588
    %1789 = vmatmul.mubr.bf16.gmra.mrb[0].mxu0 %v525
    %v1790 = vpop.f32.mrb[0].mxu0
    %v1791 = vadd.f32 %v1265, %v1790
    %v1792 = vpop.f32.mrb[0].mxu0
    %v1793 = vpop.f32.mrb[0].mxu0
    %v1794 = vpop.f32.mrb[0].mxu0
    %1795 = vdwg.mxu0
    %s1796 = scalar_lea.vmem %s4, 960
    %v1797 = vld [vmem:[%s1796] sm:$0xff]
    %v1798 = vld [vmem:[%s1796 + $0x8] sm:$0xff]
    %v1799 = vld [vmem:[%s1796 + $0x10] sm:$0xf]
    %v1800 = vld [vmem:[%s1796 + $0x14] sm:$0xff]
    %v1801 = vld [vmem:[%s1796 + $0x1c] sm:$0xff]
    %v1802 = vld [vmem:[%s1796 + $0x24] sm:$0xf]
    %v1803 = vld [vmem:[%s1796 + $0x28] sm:$0xff]
    %v1804 = vld [vmem:[%s1796 + $0x30] sm:$0xff]
    %v1805 = vld [vmem:[%s1796 + $0x38] sm:$0xf]
    %v1806 = vld [vmem:[%s1796 + $0x3c] sm:$0xff]
    %v1807 = vld [vmem:[%s1796 + $0x44] sm:$0xff]
    %v1808 = vld [vmem:[%s1796 + $0x4c] sm:$0xf]
    %v1809 = vld [vmem:[%s1796 + $0x50] sm:$0xff]
    %v1810 = vld [vmem:[%s1796 + $0x58] sm:$0xff]
    %v1811 = vld [vmem:[%s1796 + $0x60] sm:$0xf]
    %v1812 = vld [vmem:[%s1796 + $0x64] sm:$0xff]
    %v1813 = vld [vmem:[%s1796 + $0x6c] sm:$0xff]
    %v1814 = vld [vmem:[%s1796 + $0x74] sm:$0xf]
    %v1815 = vld [vmem:[%s1796 + $0x78] sm:$0xff]
    %v1816 = vld [vmem:[%s1796 + $0x80] sm:$0xff]
    %v1817 = vld [vmem:[%s1796 + $0x88] sm:$0xf]
    %v1818 = vld [vmem:[%s1796 + $0x8c] sm:$0xff]
    %v1819 = vld [vmem:[%s1796 + $0x94] sm:$0xff]
    %v1820 = vld [vmem:[%s1796 + $0x9c] sm:$0xf]
    %v1821 = vld [vmem:[%s1796 + $0xa0] sm:$0xff]
    %v1822 = vld [vmem:[%s1796 + $0xa8] sm:$0xff]
    %v1823 = vld [vmem:[%s1796 + $0xb0] sm:$0xf]
    %v1824 = vld [vmem:[%s1796 + $0xb4] sm:$0xff]
    %v1825 = vld [vmem:[%s1796 + $0xbc] sm:$0xff]
    %v1826 = vld [vmem:[%s1796 + $0xc4] sm:$0xf]
    %v1827 = vld [vmem:[%s1796 + $0xc8] sm:$0xff]
    %v1828 = vld [vmem:[%s1796 + $0xd0] sm:$0xff]
    %v1829 = vld [vmem:[%s1796 + $0xd8] sm:$0xf]
    %v1830 = vld [vmem:[%s1796 + $0xdc] sm:$0xff]
    %v1831 = vld [vmem:[%s1796 + $0xe4] sm:$0xff]
    %v1832 = vld [vmem:[%s1796 + $0xec] sm:$0xf]
    %v1833 = vld [vmem:[%s1796 + $0xf0] sm:$0xff]
    %v1834 = vld [vmem:[%s1796 + $0xf8] sm:$0xff]
    %v1835 = vld [vmem:[%s1796 + $0x100] sm:$0xf]
    %v1836 = vld [vmem:[%s1796 + $0x104] sm:$0xff]
    %v1837 = vld [vmem:[%s1796 + $0x10c] sm:$0xff]
    %v1838 = vld [vmem:[%s1796 + $0x114] sm:$0xf]
    %v1839 = vld [vmem:[%s1796 + $0x118] sm:$0xff]
    %v1840 = vld [vmem:[%s1796 + $0x120] sm:$0xff]
    %v1841 = vld [vmem:[%s1796 + $0x128] sm:$0xf]
    %v1842 = vld [vmem:[%s1796 + $0x12c] sm:$0xff]
    %v1843 = vld [vmem:[%s1796 + $0x134] sm:$0xff]
    %v1844 = vld [vmem:[%s1796 + $0x13c] sm:$0xf]
    %v1845 = vld [vmem:[%s1796 + $0x140] sm:$0xff]
    %v1846 = vld [vmem:[%s1796 + $0x148] sm:$0xff]
    %v1847 = vld [vmem:[%s1796 + $0x150] sm:$0xf]
    %v1848 = vld [vmem:[%s1796 + $0x154] sm:$0xff]
    %v1849 = vld [vmem:[%s1796 + $0x15c] sm:$0xff]
    %v1850 = vld [vmem:[%s1796 + $0x164] sm:$0xf]
    %v1851 = vld [vmem:[%s1796 + $0x168] sm:$0xff]
    %v1852 = vld [vmem:[%s1796 + $0x170] sm:$0xff]
    %v1853 = vld [vmem:[%s1796 + $0x178] sm:$0xf]
    %v1854 = vld [vmem:[%s1796 + $0x17c] sm:$0xff]
    %v1855 = vld [vmem:[%s1796 + $0x184] sm:$0xff]
    %v1856 = vld [vmem:[%s1796 + $0x18c] sm:$0xf]
    %v1857 = vld [vmem:[%s1796 + $0x190] sm:$0xff]
    %v1858 = vld [vmem:[%s1796 + $0x198] sm:$0xff]
    %v1859 = vld [vmem:[%s1796 + $0x1a0] sm:$0xf]
    %v1860 = vld [vmem:[%s1796 + $0x1a4] sm:$0xff]
    %v1861 = vld [vmem:[%s1796 + $0x1ac] sm:$0xff]
    %v1862 = vld [vmem:[%s1796 + $0x1b4] sm:$0xf]
    %v1863 = vld [vmem:[%s1796 + $0x1b8] sm:$0xff]
    %v1864 = vld [vmem:[%s1796 + $0x1c0] sm:$0xff]
    %v1865 = vld [vmem:[%s1796 + $0x1c8] sm:$0xf]
    %v1866 = vld [vmem:[%s1796 + $0x1cc] sm:$0xff]
    %v1867 = vld [vmem:[%s1796 + $0x1d4] sm:$0xff]
    %v1868 = vld [vmem:[%s1796 + $0x1dc] sm:$0xf]
    %vm1869 = vsmask.f32 5376
    %v1870 = vrot.slane %v674, 2
    %v1871 = vrot.slane %v676, 3
    %v1872 = vor.u32 %v1870, %v1871
    %v1873 = vrot.slane %v697, 2
    %v1874 = vrot.slane %v681, 3
    %v1875 = vor.u32 %v1873, %v1874
    %v1876 = vsel %vm1869, %v1872, %v1875
    %v1877 = vrot.slane %v686, 2
    %v1878 = vrot.slane %v688, 3
    %v1879 = vor.u32 %v1877, %v1878
    %v1880 = vrot.slane %v705, 2
    %v1881 = vrot.slane %v693, 3
    %v1882 = vor.u32 %v1880, %v1881
    %v1883 = vsel %vm1869, %v1879, %v1882
    %v1884 = vrot.slane %v713, 2
    %v1885 = vrot.slane %v701, 3
    %v1886 = vor.u32 %v1884, %v1885
    %v1887 = vsel %vm1869, %v1875, %v1886
    %v1888 = vrot.slane %v721, 2
    %v1889 = vrot.slane %v709, 3
    %v1890 = vor.u32 %v1888, %v1889
    %v1891 = vsel %vm1869, %v1882, %v1890
    %v1892 = vrot.slane %v729, 2
    %v1893 = vrot.slane %v717, 3
    %v1894 = vor.u32 %v1892, %v1893
    %v1895 = vsel %vm1869, %v1886, %v1894
    %v1896 = vrot.slane %v732, 2
    %v1897 = vrot.slane %v725, 3
    %v1898 = vor.u32 %v1896, %v1897
    %v1899 = vsel %vm1869, %v1890, %v1898
    %v1976 = vunpack.c.l.b16 %v1797
    %v1977 = vunpack.c.h.b16 %v1797
    %v1978 = vunpack.c.l.b16 %v1798
    %v1979 = vunpack.c.h.b16 %v1798
    %v1980 = vunpack.c.l.b16 %v1799
    %v1981 = vunpack.c.l.b16 %v1800
    %v1982 = vunpack.c.h.b16 %v1800
    %v1983 = vunpack.c.l.b16 %v1801
    %v1984 = vunpack.c.h.b16 %v1801
    %v1985 = vunpack.c.l.b16 %v1802
    %v1986 = vunpack.c.l.b16 %v1803
    %v1987 = vunpack.c.h.b16 %v1803
    %v1988 = vunpack.c.l.b16 %v1804
    %v1989 = vunpack.c.h.b16 %v1804
    %v1990 = vunpack.c.l.b16 %v1805
    %v1991 = vunpack.c.l.b16 %v1806
    %v1992 = vunpack.c.h.b16 %v1806
    %v1993 = vunpack.c.l.b16 %v1807
    %v1994 = vunpack.c.h.b16 %v1807
    %v1995 = vunpack.c.l.b16 %v1808
    %v1996 = vunpack.c.l.b16 %v1809
    %v1997 = vunpack.c.h.b16 %v1809
    %v1998 = vunpack.c.l.b16 %v1810
    %v1999 = vunpack.c.h.b16 %v1810
    %v2000 = vunpack.c.l.b16 %v1811
    %v2001 = vunpack.c.l.b16 %v1812
    %v2002 = vunpack.c.h.b16 %v1812
    %v2003 = vunpack.c.l.b16 %v1813
    %v2004 = vunpack.c.h.b16 %v1813
    %v2005 = vunpack.c.l.b16 %v1814
    %v2006 = vunpack.c.l.b16 %v1815
    %v2007 = vunpack.c.h.b16 %v1815
    %v2008 = vunpack.c.l.b16 %v1816
    %v2009 = vunpack.c.h.b16 %v1816
    %v2010 = vunpack.c.l.b16 %v1817
    %v2011 = vunpack.c.l.b16 %v1818
    %v2012 = vunpack.c.h.b16 %v1818
    %v2013 = vunpack.c.l.b16 %v1819
    %v2014 = vunpack.c.h.b16 %v1819
    %v2015 = vunpack.c.l.b16 %v1820
    %v2016 = vunpack.c.l.b16 %v1821
    %v2017 = vunpack.c.h.b16 %v1821
    %v2018 = vunpack.c.l.b16 %v1822
    %v2019 = vunpack.c.h.b16 %v1822
    %v2020 = vunpack.c.l.b16 %v1823
    %v2021 = vunpack.c.l.b16 %v1824
    %v2022 = vunpack.c.h.b16 %v1824
    %v2023 = vunpack.c.l.b16 %v1825
    %v2024 = vunpack.c.h.b16 %v1825
    %v2025 = vunpack.c.l.b16 %v1826
    %v2026 = vunpack.c.l.b16 %v1827
    %v2027 = vunpack.c.h.b16 %v1827
    %v2028 = vunpack.c.l.b16 %v1828
    %v2029 = vunpack.c.h.b16 %v1828
    %v2030 = vunpack.c.l.b16 %v1829
    %v2031 = vunpack.c.l.b16 %v1830
    %v2032 = vunpack.c.h.b16 %v1830
    %v2033 = vunpack.c.l.b16 %v1831
    %v2034 = vunpack.c.h.b16 %v1831
    %v2035 = vunpack.c.l.b16 %v1832
    %v2036 = vunpack.c.l.b16 %v1833
    %v2037 = vunpack.c.h.b16 %v1833
    %v2038 = vunpack.c.l.b16 %v1834
    %v2039 = vunpack.c.h.b16 %v1834
    %v2040 = vunpack.c.l.b16 %v1835
    %v2041 = vunpack.c.l.b16 %v1836
    %v2042 = vunpack.c.h.b16 %v1836
    %v2043 = vunpack.c.l.b16 %v1837
    %v2044 = vunpack.c.h.b16 %v1837
    %v2045 = vunpack.c.l.b16 %v1838
    %v2046 = vunpack.c.l.b16 %v1839
    %v2047 = vunpack.c.h.b16 %v1839
    %v2048 = vunpack.c.l.b16 %v1840
    %v2049 = vunpack.c.h.b16 %v1840
    %v2050 = vunpack.c.l.b16 %v1841
    %v2051 = vunpack.c.l.b16 %v1842
    %v2052 = vunpack.c.h.b16 %v1842
    %v2053 = vunpack.c.l.b16 %v1843
    %v2054 = vunpack.c.h.b16 %v1843
    %v2055 = vunpack.c.l.b16 %v1844
    %v2056 = vunpack.c.l.b16 %v1845
    %v2057 = vunpack.c.h.b16 %v1845
    %v2058 = vunpack.c.l.b16 %v1846
    %v2059 = vunpack.c.h.b16 %v1846
    %v2060 = vunpack.c.l.b16 %v1847
    %v2061 = vunpack.c.l.b16 %v1848
    %v2062 = vunpack.c.h.b16 %v1848
    %v2063 = vunpack.c.l.b16 %v1849
    %v2064 = vunpack.c.h.b16 %v1849
    %v2065 = vunpack.c.l.b16 %v1850
    %v2066 = vunpack.c.l.b16 %v1851
    %v2067 = vunpack.c.h.b16 %v1851
    %v2068 = vunpack.c.l.b16 %v1852
    %v2069 = vunpack.c.h.b16 %v1852
    %v2070 = vunpack.c.l.b16 %v1853
    %v2071 = vunpack.c.l.b16 %v1854
    %v2072 = vunpack.c.h.b16 %v1854
    %v2073 = vunpack.c.l.b16 %v1855
    %v2074 = vunpack.c.h.b16 %v1855
    %v2075 = vunpack.c.l.b16 %v1856
    %v2076 = vunpack.c.l.b16 %v1857
    %v2077 = vunpack.c.h.b16 %v1857
    %v2078 = vunpack.c.l.b16 %v1858
    %v2079 = vunpack.c.h.b16 %v1858
    %v2080 = vunpack.c.l.b16 %v1859
    %v2081 = vunpack.c.l.b16 %v1860
    %v2082 = vunpack.c.h.b16 %v1860
    %v2083 = vunpack.c.l.b16 %v1861
    %v2084 = vunpack.c.h.b16 %v1861
    %v2085 = vunpack.c.l.b16 %v1862
    %v2086 = vunpack.c.l.b16 %v1863
    %v2087 = vunpack.c.h.b16 %v1863
    %v2088 = vunpack.c.l.b16 %v1864
    %v2089 = vunpack.c.h.b16 %v1864
    %v2090 = vunpack.c.l.b16 %v1865
    %v2091 = vunpack.c.l.b16 %v1866
    %v2092 = vunpack.c.h.b16 %v1866
    %v2093 = vunpack.c.l.b16 %v1867
    %v2094 = vunpack.c.h.b16 %v1867
    %v2095 = vunpack.c.l.b16 %v1868
    %v2096 = vpack.c.b16 %v1981, %v1976
    %v2097 = vpack.c.b16 %v1982, %v1977
    %v2098 = vpack.c.b16 %v1983, %v1978
    %v2099 = vpack.c.b16 %v1984, %v1979
    %v2100 = vpack.c.b16 %v1985, %v1980
    %v2101 = vpack.c.b16 %v1991, %v1986
    %v2102 = vpack.c.b16 %v1992, %v1987
    %v2103 = vpack.c.b16 %v1993, %v1988
    %v2104 = vpack.c.b16 %v1994, %v1989
    %v2105 = vpack.c.b16 %v1995, %v1990
    %v2106 = vpack.c.b16 %v2001, %v1996
    %v2107 = vpack.c.b16 %v2002, %v1997
    %v2108 = vpack.c.b16 %v2003, %v1998
    %v2109 = vpack.c.b16 %v2004, %v1999
    %v2110 = vpack.c.b16 %v2005, %v2000
    %v2111 = vpack.c.b16 %v2011, %v2006
    %v2112 = vpack.c.b16 %v2012, %v2007
    %v2113 = vpack.c.b16 %v2013, %v2008
    %v2114 = vpack.c.b16 %v2014, %v2009
    %v2115 = vpack.c.b16 %v2015, %v2010
    %v2116 = vpack.c.b16 %v2021, %v2016
    %v2117 = vpack.c.b16 %v2022, %v2017
    %v2118 = vpack.c.b16 %v2023, %v2018
    %v2119 = vpack.c.b16 %v2024, %v2019
    %v2120 = vpack.c.b16 %v2025, %v2020
    %v2121 = vpack.c.b16 %v2031, %v2026
    %v2122 = vpack.c.b16 %v2032, %v2027
    %v2123 = vpack.c.b16 %v2033, %v2028
    %v2124 = vpack.c.b16 %v2034, %v2029
    %v2125 = vpack.c.b16 %v2035, %v2030
    %v2126 = vpack.c.b16 %v2041, %v2036
    %v2127 = vpack.c.b16 %v2042, %v2037
    %v2128 = vpack.c.b16 %v2043, %v2038
    %v2129 = vpack.c.b16 %v2044, %v2039
    %v2130 = vpack.c.b16 %v2045, %v2040
    %v2131 = vpack.c.b16 %v2051, %v2046
    %v2132 = vpack.c.b16 %v2052, %v2047
    %v2133 = vpack.c.b16 %v2053, %v2048
    %v2134 = vpack.c.b16 %v2054, %v2049
    %v2135 = vpack.c.b16 %v2055, %v2050
    %v2136 = vpack.c.b16 %v2061, %v2056
    %v2137 = vpack.c.b16 %v2062, %v2057
    %v2138 = vpack.c.b16 %v2063, %v2058
    %v2139 = vpack.c.b16 %v2064, %v2059
    %v2140 = vpack.c.b16 %v2065, %v2060
    %v2141 = vpack.c.b16 %v2071, %v2066
    %v2142 = vpack.c.b16 %v2072, %v2067
    %v2143 = vpack.c.b16 %v2073, %v2068
    %v2144 = vpack.c.b16 %v2074, %v2069
    %v2145 = vpack.c.b16 %v2075, %v2070
    %v2146 = vpack.c.b16 %v2081, %v2076
    %v2147 = vpack.c.b16 %v2082, %v2077
    %v2148 = vpack.c.b16 %v2083, %v2078
    %v2149 = vpack.c.b16 %v2084, %v2079
    %v2150 = vpack.c.b16 %v2085, %v2080
    %v2151 = vpack.c.b16 %v2091, %v2086
    %v2152 = vpack.c.b16 %v2092, %v2087
    %v2153 = vpack.c.b16 %v2093, %v2088
    %v2154 = vpack.c.b16 %v2094, %v2089
    %v2155 = vpack.c.b16 %v2095, %v2090
    %v2217 = vsel %vm1051, %v1883, 0
    %v2220 = vsel %vm1051, %v1891, 0
    %v2223 = vsel %vm1051, %v1899, 0
    %v2226 = vsel %vm1051, %v1898, 0
    %2228 = vmatprep.subr.bf16.mxu0 %v2097
    %2229 = vmatpush1.bf16.msra.mxu0 %v2096
    %2230 = vmatprep.subr.bf16.mxu0 %v2102
    %2231 = vmatpush1.bf16.msra.mxu0 %v2101
    %2232 = vmatprep.subr.bf16.mxu0 %v2107
    %2233 = vmatpush1.bf16.msra.mxu0 %v2106
    %2234 = vmatprep.subr.bf16.mxu0 %v2112
    %2235 = vmatpush1.bf16.msra.mxu0 %v2111
    %2236 = vmatprep.subr.bf16.mxu0 %v2117
    %2237 = vmatpush1.bf16.msra.mxu0 %v2116
    %2238 = vmatprep.subr.bf16.mxu0 %v2122
    %2239 = vmatpush1.bf16.msra.mxu0 %v2121
    %2240 = vmatprep.subr.bf16.mxu0 %v2127
    %2241 = vmatpush1.bf16.msra.mxu0 %v2126
    %2242 = vmatprep.subr.bf16.mxu0 %v2132
    %2243 = vmatpush1.bf16.msra.mxu0 %v2131
    %2244 = vmatprep.subr.bf16.mxu0 %v2137
    %2245 = vmatpush1.bf16.msra.mxu0 %v2136
    %2246 = vmatprep.subr.bf16.mxu0 %v2142
    %2247 = vmatpush1.bf16.msra.mxu0 %v2141
    %2248 = vmatprep.subr.bf16.mxu0 %v2147
    %2249 = vmatpush1.bf16.msra.mxu0 %v2146
    %2250 = vmatprep.subr.bf16.mxu0 %v2152
    %2251 = vmatpush1.bf16.msra.mxu0 %v2151
    %2252 = vmatprep.subr.bf16.mxu0 0
    %2253 = vmatpush1.bf16.msra.mxu0 0
    %2254 = vmatprep.subr.bf16.mxu0 0
    %2255 = vmatpush1.bf16.msra.mxu0 0
    %2256 = vmatprep.subr.bf16.mxu0 0
    %2257 = vmatpush1.bf16.msra.mxu0 0
    %2258 = vmatprep.subr.bf16.mxu0 0
    %2259 = vmatpush1.bf16.msra.mxu0 0
    %2260 = vmatprep.mubr.bf16.mxu0 %v2217
    %2261 = vmatmul.mubr.bf16.gmra.mrb[0].mxu0 %v1876
    %v2262 = vpop.f32.mrb[0].mxu0
    %v2263 = vadd.f32 0.0, %v2262
    %v2264 = vpop.f32.mrb[0].mxu0
    %v2265 = vadd.f32 0.0, %v2264
    %v2266 = vpop.f32.mrb[0].mxu0
    %v2267 = vadd.f32 0.0, %v2266
    %v2268 = vpop.f32.mrb[0].mxu0
    %v2269 = vadd.f32 0.0, %v2268
    %2270 = vmatprep.mubr.bf16.mxu0 %v2220
    %2271 = vmatmul.mubr.bf16.gmra.mrb[0].mxu0 %v1887
    %v2272 = vpop.f32.mrb[0].mxu0
    %v2273 = vadd.f32 0.0, %v2272
    %v2274 = vpop.f32.mrb[0].mxu0
    %v2275 = vadd.f32 0.0, %v2274
    %v2276 = vpop.f32.mrb[0].mxu0
    %v2277 = vadd.f32 0.0, %v2276
    %v2278 = vpop.f32.mrb[0].mxu0
    %v2279 = vadd.f32 0.0, %v2278
    %2280 = vmatprep.mubr.bf16.mxu0 %v2223
    %2281 = vmatmul.mubr.bf16.gmra.mrb[0].mxu0 %v1895
    %v2282 = vpop.f32.mrb[0].mxu0
    %v2283 = vadd.f32 0.0, %v2282
    %v2284 = vpop.f32.mrb[0].mxu0
    %v2285 = vadd.f32 0.0, %v2284
    %v2286 = vpop.f32.mrb[0].mxu0
    %v2287 = vadd.f32 0.0, %v2286
    %v2288 = vpop.f32.mrb[0].mxu0
    %v2289 = vadd.f32 0.0, %v2288
    %2290 = vmatprep.mubr.bf16.mxu0 %v2226
    %2291 = vmatmul.mubr.bf16.gmra.mrb[0].mxu0 %v1894
    %v2292 = vpop.f32.mrb[0].mxu0
    %v2293 = vadd.f32 0.0, %v2292
    %v2294 = vpop.f32.mrb[0].mxu0
    %v2295 = vadd.f32 0.0, %v2294
    %v2296 = vpop.f32.mrb[0].mxu0
    %v2297 = vpop.f32.mrb[0].mxu0
    %2298 = vdwg.mxu0
    %2299 = vmatprep.subr.bf16.mxu0 %v2099
    %2300 = vmatpush1.bf16.msra.mxu0 %v2098
    %2301 = vmatprep.subr.bf16.mxu0 %v2104
    %2302 = vmatpush1.bf16.msra.mxu0 %v2103
    %2303 = vmatprep.subr.bf16.mxu0 %v2109
    %2304 = vmatpush1.bf16.msra.mxu0 %v2108
    %2305 = vmatprep.subr.bf16.mxu0 %v2114
    %2306 = vmatpush1.bf16.msra.mxu0 %v2113
    %2307 = vmatprep.subr.bf16.mxu0 %v2119
    %2308 = vmatpush1.bf16.msra.mxu0 %v2118
    %2309 = vmatprep.subr.bf16.mxu0 %v2124
    %2310 = vmatpush1.bf16.msra.mxu0 %v2123
    %2311 = vmatprep.subr.bf16.mxu0 %v2129
    %2312 = vmatpush1.bf16.msra.mxu0 %v2128
    %2313 = vmatprep.subr.bf16.mxu0 %v2134
    %2314 = vmatpush1.bf16.msra.mxu0 %v2133
    %2315 = vmatprep.subr.bf16.mxu0 %v2139
    %2316 = vmatpush1.bf16.msra.mxu0 %v2138
    %2317 = vmatprep.subr.bf16.mxu0 %v2144
    %2318 = vmatpush1.bf16.msra.mxu0 %v2143
    %2319 = vmatprep.subr.bf16.mxu0 %v2149
    %2320 = vmatpush1.bf16.msra.mxu0 %v2148
    %2321 = vmatprep.subr.bf16.mxu0 %v2154
    %2322 = vmatpush1.bf16.msra.mxu0 %v2153
    %2323 = vmatprep.subr.bf16.mxu0 0
    %2324 = vmatpush1.bf16.msra.mxu0 0
    %2325 = vmatprep.subr.bf16.mxu0 0
    %2326 = vmatpush1.bf16.msra.mxu0 0
    %2327 = vmatprep.subr.bf16.mxu0 0
    %2328 = vmatpush1.bf16.msra.mxu0 0
    %2329 = vmatprep.subr.bf16.mxu0 0
    %2330 = vmatpush1.bf16.msra.mxu0 0
    %2331 = vmatprep.mubr.bf16.mxu0 %v2217
    %2332 = vmatmul.mubr.bf16.gmra.mrb[0].mxu0 %v1876
    %v2333 = vpop.f32.mrb[0].mxu0
    %v2334 = vadd.f32 0.0, %v2333
    %v2335 = vpop.f32.mrb[0].mxu0
    %v2336 = vadd.f32 0.0, %v2335
    %v2337 = vpop.f32.mrb[0].mxu0
    %v2338 = vadd.f32 0.0, %v2337
    %v2339 = vpop.f32.mrb[0].mxu0
    %v2340 = vadd.f32 0.0, %v2339
    %2341 = vmatprep.mubr.bf16.mxu0 %v2220
    %2342 = vmatmul.mubr.bf16.gmra.mrb[0].mxu0 %v1887
    %v2343 = vpop.f32.mrb[0].mxu0
    %v2344 = vadd.f32 0.0, %v2343
    %v2345 = vpop.f32.mrb[0].mxu0
    %v2346 = vadd.f32 0.0, %v2345
    %v2347 = vpop.f32.mrb[0].mxu0
    %v2348 = vadd.f32 0.0, %v2347
    %v2349 = vpop.f32.mrb[0].mxu0
    %v2350 = vadd.f32 0.0, %v2349
    %2351 = vmatprep.mubr.bf16.mxu0 %v2223
    %2352 = vmatmul.mubr.bf16.gmra.mrb[0].mxu0 %v1895
    %v2353 = vpop.f32.mrb[0].mxu0
    %v2354 = vadd.f32 0.0, %v2353
    %v2355 = vpop.f32.mrb[0].mxu0
    %v2356 = vadd.f32 0.0, %v2355
    %v2357 = vpop.f32.mrb[0].mxu0
    %v2358 = vadd.f32 0.0, %v2357
    %v2359 = vpop.f32.mrb[0].mxu0
    %v2360 = vadd.f32 0.0, %v2359
    %2361 = vmatprep.mubr.bf16.mxu0 %v2226
    %2362 = vmatmul.mubr.bf16.gmra.mrb[0].mxu0 %v1894
    %v2363 = vpop.f32.mrb[0].mxu0
    %v2364 = vadd.f32 0.0, %v2363
    %v2365 = vpop.f32.mrb[0].mxu0
    %v2366 = vadd.f32 0.0, %v2365
    %v2367 = vpop.f32.mrb[0].mxu0
    %v2368 = vpop.f32.mrb[0].mxu0
    %2369 = vdwg.mxu0
    %2370 = vmatprep.subr.bf16.mxu0 0
    %2371 = vmatpush1.bf16.msra.mxu0 %v2100
    %2372 = vmatprep.subr.bf16.mxu0 0
    %2373 = vmatpush1.bf16.msra.mxu0 %v2105
    %2374 = vmatprep.subr.bf16.mxu0 0
    %2375 = vmatpush1.bf16.msra.mxu0 %v2110
    %2376 = vmatprep.subr.bf16.mxu0 0
    %2377 = vmatpush1.bf16.msra.mxu0 %v2115
    %2378 = vmatprep.subr.bf16.mxu0 0
    %2379 = vmatpush1.bf16.msra.mxu0 %v2120
    %2380 = vmatprep.subr.bf16.mxu0 0
    %2381 = vmatpush1.bf16.msra.mxu0 %v2125
    %2382 = vmatprep.subr.bf16.mxu0 0
    %2383 = vmatpush1.bf16.msra.mxu0 %v2130
    %2384 = vmatprep.subr.bf16.mxu0 0
    %2385 = vmatpush1.bf16.msra.mxu0 %v2135
    %2386 = vmatprep.subr.bf16.mxu0 0
    %2387 = vmatpush1.bf16.msra.mxu0 %v2140
    %2388 = vmatprep.subr.bf16.mxu0 0
    %2389 = vmatpush1.bf16.msra.mxu0 %v2145
    %2390 = vmatprep.subr.bf16.mxu0 0
    %2391 = vmatpush1.bf16.msra.mxu0 %v2150
    %2392 = vmatprep.subr.bf16.mxu0 0
    %2393 = vmatpush1.bf16.msra.mxu0 %v2155
    %2394 = vmatprep.subr.bf16.mxu0 0
    %2395 = vmatpush1.bf16.msra.mxu0 0
    %2396 = vmatprep.subr.bf16.mxu0 0
    %2397 = vmatpush1.bf16.msra.mxu0 0
    %2398 = vmatprep.subr.bf16.mxu0 0
    %2399 = vmatpush1.bf16.msra.mxu0 0
    %2400 = vmatprep.subr.bf16.mxu0 0
    %2401 = vmatpush1.bf16.msra.mxu0 0
    %2402 = vmatprep.mubr.bf16.mxu0 %v2217
    %2403 = vmatmul.mubr.bf16.gmra.mrb[0].mxu0 %v1876
    %v2404 = vpop.f32.mrb[0].mxu0
    %v2405 = vadd.f32 0.0, %v2404
    %v2406 = vpop.f32.mrb[0].mxu0
    %v2407 = vpop.f32.mrb[0].mxu0
    %v2408 = vadd.f32 0.0, %v2407
    %v2409 = vpop.f32.mrb[0].mxu0
    %2410 = vmatprep.mubr.bf16.mxu0 %v2220
    %2411 = vmatmul.mubr.bf16.gmra.mrb[0].mxu0 %v1887
    %v2412 = vpop.f32.mrb[0].mxu0
    %v2413 = vadd.f32 0.0, %v2412
    %v2414 = vpop.f32.mrb[0].mxu0
    %v2415 = vpop.f32.mrb[0].mxu0
    %v2416 = vadd.f32 0.0, %v2415
    %v2417 = vpop.f32.mrb[0].mxu0
    %2418 = vmatprep.mubr.bf16.mxu0 %v2223
    %2419 = vmatmul.mubr.bf16.gmra.mrb[0].mxu0 %v1895
    %v2420 = vpop.f32.mrb[0].mxu0
    %v2421 = vadd.f32 0.0, %v2420
    %v2422 = vpop.f32.mrb[0].mxu0
    %v2423 = vpop.f32.mrb[0].mxu0
    %v2424 = vadd.f32 0.0, %v2423
    %v2425 = vpop.f32.mrb[0].mxu0
    %2426 = vmatprep.mubr.bf16.mxu0 %v2226
    %2427 = vmatmul.mubr.bf16.gmra.mrb[0].mxu0 %v1894
    %v2428 = vpop.f32.mrb[0].mxu0
    %v2429 = vadd.f32 0.0, %v2428
    %v2430 = vpop.f32.mrb[0].mxu0
    %v2431 = vpop.f32.mrb[0].mxu0
    %v2432 = vpop.f32.mrb[0].mxu0
    %2433 = vdwg.mxu0
    %v2434 = vadd.f32 %v1625, %v2263
    %v2435 = vadd.f32 %v1627, %v2265
    %v2436 = vadd.f32 %v1696, %v2334
    %v2437 = vadd.f32 %v1698, %v2336
    %v2438 = vadd.f32 %v1767, %v2405
    %v2439 = vadd.f32 %v1629, %v2267
    %v2440 = vadd.f32 %v1631, %v2269
    %v2441 = vadd.f32 %v1700, %v2338
    %v2442 = vadd.f32 %v1702, %v2340
    %v2443 = vadd.f32 %v1770, %v2408
    %v2444 = vadd.f32 %v1635, %v2273
    %v2445 = vadd.f32 %v1637, %v2275
    %v2446 = vadd.f32 %v1706, %v2344
    %v2447 = vadd.f32 %v1708, %v2346
    %v2448 = vadd.f32 %v1775, %v2413
    %v2449 = vadd.f32 %v1639, %v2277
    %v2450 = vadd.f32 %v1641, %v2279
    %v2451 = vadd.f32 %v1710, %v2348
    %v2452 = vadd.f32 %v1712, %v2350
    %v2453 = vadd.f32 %v1778, %v2416
    %v2454 = vadd.f32 %v1645, %v2283
    %v2455 = vadd.f32 %v1647, %v2285
    %v2456 = vadd.f32 %v1716, %v2354
    %v2457 = vadd.f32 %v1718, %v2356
    %v2458 = vadd.f32 %v1783, %v2421
    %v2459 = vadd.f32 %v1649, %v2287
    %v2460 = vadd.f32 %v1651, %v2289
    %v2461 = vadd.f32 %v1720, %v2358
    %v2462 = vadd.f32 %v1722, %v2360
    %v2463 = vadd.f32 %v1786, %v2424
    %v2464 = vadd.f32 %v1655, %v2293
    %v2465 = vadd.f32 %v1657, %v2295
    %v2466 = vadd.f32 %v1726, %v2364
    %v2467 = vadd.f32 %v1728, %v2366
    %v2468 = vadd.f32 %v1791, %v2429
    %s2469 = scalar_lea.vmem %s4, 1440
    %v2470 = vld [vmem:[%s2469] sm:$0xff]
    %v2471 = vld [vmem:[%s2469 + $0x8] sm:$0xff]
    %v2472 = vld [vmem:[%s2469 + $0x10] sm:$0xf]
    %v2473 = vld [vmem:[%s2469 + $0x14] sm:$0xff]
    %v2474 = vld [vmem:[%s2469 + $0x1c] sm:$0xff]
    %v2475 = vld [vmem:[%s2469 + $0x24] sm:$0xf]
    %v2476 = vld [vmem:[%s2469 + $0x28] sm:$0xff]
    %v2477 = vld [vmem:[%s2469 + $0x30] sm:$0xff]
    %v2478 = vld [vmem:[%s2469 + $0x38] sm:$0xf]
    %v2479 = vld [vmem:[%s2469 + $0x3c] sm:$0xff]
    %v2480 = vld [vmem:[%s2469 + $0x44] sm:$0xff]
    %v2481 = vld [vmem:[%s2469 + $0x4c] sm:$0xf]
    %v2482 = vld [vmem:[%s2469 + $0x50] sm:$0xff]
    %v2483 = vld [vmem:[%s2469 + $0x58] sm:$0xff]
    %v2484 = vld [vmem:[%s2469 + $0x60] sm:$0xf]
    %v2485 = vld [vmem:[%s2469 + $0x64] sm:$0xff]
    %v2486 = vld [vmem:[%s2469 + $0x6c] sm:$0xff]
    %v2487 = vld [vmem:[%s2469 + $0x74] sm:$0xf]
    %v2488 = vld [vmem:[%s2469 + $0x78] sm:$0xff]
    %v2489 = vld [vmem:[%s2469 + $0x80] sm:$0xff]
    %v2490 = vld [vmem:[%s2469 + $0x88] sm:$0xf]
    %v2491 = vld [vmem:[%s2469 + $0x8c] sm:$0xff]
    %v2492 = vld [vmem:[%s2469 + $0x94] sm:$0xff]
    %v2493 = vld [vmem:[%s2469 + $0x9c] sm:$0xf]
    %v2494 = vld [vmem:[%s2469 + $0xa0] sm:$0xff]
    %v2495 = vld [vmem:[%s2469 + $0xa8] sm:$0xff]
    %v2496 = vld [vmem:[%s2469 + $0xb0] sm:$0xf]
    %v2497 = vld [vmem:[%s2469 + $0xb4] sm:$0xff]
    %v2498 = vld [vmem:[%s2469 + $0xbc] sm:$0xff]
    %v2499 = vld [vmem:[%s2469 + $0xc4] sm:$0xf]
    %v2500 = vld [vmem:[%s2469 + $0xc8] sm:$0xff]
    %v2501 = vld [vmem:[%s2469 + $0xd0] sm:$0xff]
    %v2502 = vld [vmem:[%s2469 + $0xd8] sm:$0xf]
    %v2503 = vld [vmem:[%s2469 + $0xdc] sm:$0xff]
    %v2504 = vld [vmem:[%s2469 + $0xe4] sm:$0xff]
    %v2505 = vld [vmem:[%s2469 + $0xec] sm:$0xf]
    %v2506 = vld [vmem:[%s2469 + $0xf0] sm:$0xff]
    %v2507 = vld [vmem:[%s2469 + $0xf8] sm:$0xff]
    %v2508 = vld [vmem:[%s2469 + $0x100] sm:$0xf]
    %v2509 = vld [vmem:[%s2469 + $0x104] sm:$0xff]
    %v2510 = vld [vmem:[%s2469 + $0x10c] sm:$0xff]
    %v2511 = vld [vmem:[%s2469 + $0x114] sm:$0xf]
    %v2512 = vld [vmem:[%s2469 + $0x118] sm:$0xff]
    %v2513 = vld [vmem:[%s2469 + $0x120] sm:$0xff]
    %v2514 = vld [vmem:[%s2469 + $0x128] sm:$0xf]
    %v2515 = vld [vmem:[%s2469 + $0x12c] sm:$0xff]
    %v2516 = vld [vmem:[%s2469 + $0x134] sm:$0xff]
    %v2517 = vld [vmem:[%s2469 + $0x13c] sm:$0xf]
    %v2518 = vld [vmem:[%s2469 + $0x140] sm:$0xff]
    %v2519 = vld [vmem:[%s2469 + $0x148] sm:$0xff]
    %v2520 = vld [vmem:[%s2469 + $0x150] sm:$0xf]
    %v2521 = vld [vmem:[%s2469 + $0x154] sm:$0xff]
    %v2522 = vld [vmem:[%s2469 + $0x15c] sm:$0xff]
    %v2523 = vld [vmem:[%s2469 + $0x164] sm:$0xf]
    %v2524 = vld [vmem:[%s2469 + $0x168] sm:$0xff]
    %v2525 = vld [vmem:[%s2469 + $0x170] sm:$0xff]
    %v2526 = vld [vmem:[%s2469 + $0x178] sm:$0xf]
    %v2527 = vld [vmem:[%s2469 + $0x17c] sm:$0xff]
    %v2528 = vld [vmem:[%s2469 + $0x184] sm:$0xff]
    %v2529 = vld [vmem:[%s2469 + $0x18c] sm:$0xf]
    %v2530 = vld [vmem:[%s2469 + $0x190] sm:$0xff]
    %v2531 = vld [vmem:[%s2469 + $0x198] sm:$0xff]
    %v2532 = vld [vmem:[%s2469 + $0x1a0] sm:$0xf]
    %v2533 = vld [vmem:[%s2469 + $0x1a4] sm:$0xff]
    %v2534 = vld [vmem:[%s2469 + $0x1ac] sm:$0xff]
    %v2535 = vld [vmem:[%s2469 + $0x1b4] sm:$0xf]
    %v2536 = vld [vmem:[%s2469 + $0x1b8] sm:$0xff]
    %v2537 = vld [vmem:[%s2469 + $0x1c0] sm:$0xff]
    %v2538 = vld [vmem:[%s2469 + $0x1c8] sm:$0xf]
    %v2539 = vld [vmem:[%s2469 + $0x1cc] sm:$0xff]
    %v2540 = vld [vmem:[%s2469 + $0x1d4] sm:$0xff]
    %v2541 = vld [vmem:[%s2469 + $0x1dc] sm:$0xf]
    %vm2550 = vcmask 1044480
    %v2551 = vrot.slane %v519, 3
    %v2552 = vrot.slane %v521, 3
    %v2553 = vsel %vm2550, %v2551, %v2552
    %v2554 = vrot.slane %v520, 3
    %v2555 = vrot.slane %v522, 3
    %v2556 = vsel %vm2550, %v2554, %v2555
    %v2557 = vrot.slane %v523, 3
    %v2558 = vsel %vm2550, %v2552, %v2557
    %v2559 = vrot.slane %v524, 3
    %v2560 = vsel %vm2550, %v2555, %v2559
    %v2561 = vrot.slane %v525, 3
    %v2562 = vsel %vm2550, %v2557, %v2561
    %v2563 = vrot.slane %v526, 3
    %v2564 = vsel %vm2550, %v2559, %v2563
    %v2641 = vunpack.c.l.b16 %v2470
    %v2642 = vunpack.c.h.b16 %v2470
    %v2643 = vunpack.c.l.b16 %v2471
    %v2644 = vunpack.c.h.b16 %v2471
    %v2645 = vunpack.c.l.b16 %v2472
    %v2646 = vunpack.c.l.b16 %v2473
    %v2647 = vunpack.c.h.b16 %v2473
    %v2648 = vunpack.c.l.b16 %v2474
    %v2649 = vunpack.c.h.b16 %v2474
    %v2650 = vunpack.c.l.b16 %v2475
    %v2651 = vunpack.c.l.b16 %v2476
    %v2652 = vunpack.c.h.b16 %v2476
    %v2653 = vunpack.c.l.b16 %v2477
    %v2654 = vunpack.c.h.b16 %v2477
    %v2655 = vunpack.c.l.b16 %v2478
    %v2656 = vunpack.c.l.b16 %v2479
    %v2657 = vunpack.c.h.b16 %v2479
    %v2658 = vunpack.c.l.b16 %v2480
    %v2659 = vunpack.c.h.b16 %v2480
    %v2660 = vunpack.c.l.b16 %v2481
    %v2661 = vunpack.c.l.b16 %v2482
    %v2662 = vunpack.c.h.b16 %v2482
    %v2663 = vunpack.c.l.b16 %v2483
    %v2664 = vunpack.c.h.b16 %v2483
    %v2665 = vunpack.c.l.b16 %v2484
    %v2666 = vunpack.c.l.b16 %v2485
    %v2667 = vunpack.c.h.b16 %v2485
    %v2668 = vunpack.c.l.b16 %v2486
    %v2669 = vunpack.c.h.b16 %v2486
    %v2670 = vunpack.c.l.b16 %v2487
    %v2671 = vunpack.c.l.b16 %v2488
    %v2672 = vunpack.c.h.b16 %v2488
    %v2673 = vunpack.c.l.b16 %v2489
    %v2674 = vunpack.c.h.b16 %v2489
    %v2675 = vunpack.c.l.b16 %v2490
    %v2676 = vunpack.c.l.b16 %v2491
    %v2677 = vunpack.c.h.b16 %v2491
    %v2678 = vunpack.c.l.b16 %v2492
    %v2679 = vunpack.c.h.b16 %v2492
    %v2680 = vunpack.c.l.b16 %v2493
    %v2681 = vunpack.c.l.b16 %v2494
    %v2682 = vunpack.c.h.b16 %v2494
    %v2683 = vunpack.c.l.b16 %v2495
    %v2684 = vunpack.c.h.b16 %v2495
    %v2685 = vunpack.c.l.b16 %v2496
    %v2686 = vunpack.c.l.b16 %v2497
    %v2687 = vunpack.c.h.b16 %v2497
    %v2688 = vunpack.c.l.b16 %v2498
    %v2689 = vunpack.c.h.b16 %v2498
    %v2690 = vunpack.c.l.b16 %v2499
    %v2691 = vunpack.c.l.b16 %v2500
    %v2692 = vunpack.c.h.b16 %v2500
    %v2693 = vunpack.c.l.b16 %v2501
    %v2694 = vunpack.c.h.b16 %v2501
    %v2695 = vunpack.c.l.b16 %v2502
    %v2696 = vunpack.c.l.b16 %v2503
    %v2697 = vunpack.c.h.b16 %v2503
    %v2698 = vunpack.c.l.b16 %v2504
    %v2699 = vunpack.c.h.b16 %v2504
    %v2700 = vunpack.c.l.b16 %v2505
    %v2701 = vunpack.c.l.b16 %v2506
    %v2702 = vunpack.c.h.b16 %v2506
    %v2703 = vunpack.c.l.b16 %v2507
    %v2704 = vunpack.c.h.b16 %v2507
    %v2705 = vunpack.c.l.b16 %v2508
    %v2706 = vunpack.c.l.b16 %v2509
    %v2707 = vunpack.c.h.b16 %v2509
    %v2708 = vunpack.c.l.b16 %v2510
    %v2709 = vunpack.c.h.b16 %v2510
    %v2710 = vunpack.c.l.b16 %v2511
    %v2711 = vunpack.c.l.b16 %v2512
    %v2712 = vunpack.c.h.b16 %v2512
    %v2713 = vunpack.c.l.b16 %v2513
    %v2714 = vunpack.c.h.b16 %v2513
    %v2715 = vunpack.c.l.b16 %v2514
    %v2716 = vunpack.c.l.b16 %v2515
    %v2717 = vunpack.c.h.b16 %v2515
    %v2718 = vunpack.c.l.b16 %v2516
    %v2719 = vunpack.c.h.b16 %v2516
    %v2720 = vunpack.c.l.b16 %v2517
    %v2721 = vunpack.c.l.b16 %v2518
    %v2722 = vunpack.c.h.b16 %v2518
    %v2723 = vunpack.c.l.b16 %v2519
    %v2724 = vunpack.c.h.b16 %v2519
    %v2725 = vunpack.c.l.b16 %v2520
    %v2726 = vunpack.c.l.b16 %v2521
    %v2727 = vunpack.c.h.b16 %v2521
    %v2728 = vunpack.c.l.b16 %v2522
    %v2729 = vunpack.c.h.b16 %v2522
    %v2730 = vunpack.c.l.b16 %v2523
    %v2731 = vunpack.c.l.b16 %v2524
    %v2732 = vunpack.c.h.b16 %v2524
    %v2733 = vunpack.c.l.b16 %v2525
    %v2734 = vunpack.c.h.b16 %v2525
    %v2735 = vunpack.c.l.b16 %v2526
    %v2736 = vunpack.c.l.b16 %v2527
    %v2737 = vunpack.c.h.b16 %v2527
    %v2738 = vunpack.c.l.b16 %v2528
    %v2739 = vunpack.c.h.b16 %v2528
    %v2740 = vunpack.c.l.b16 %v2529
    %v2741 = vunpack.c.l.b16 %v2530
    %v2742 = vunpack.c.h.b16 %v2530
    %v2743 = vunpack.c.l.b16 %v2531
    %v2744 = vunpack.c.h.b16 %v2531
    %v2745 = vunpack.c.l.b16 %v2532
    %v2746 = vunpack.c.l.b16 %v2533
    %v2747 = vunpack.c.h.b16 %v2533
    %v2748 = vunpack.c.l.b16 %v2534
    %v2749 = vunpack.c.h.b16 %v2534
    %v2750 = vunpack.c.l.b16 %v2535
    %v2751 = vunpack.c.l.b16 %v2536
    %v2752 = vunpack.c.h.b16 %v2536
    %v2753 = vunpack.c.l.b16 %v2537
    %v2754 = vunpack.c.h.b16 %v2537
    %v2755 = vunpack.c.l.b16 %v2538
    %v2756 = vunpack.c.l.b16 %v2539
    %v2757 = vunpack.c.h.b16 %v2539
    %v2758 = vunpack.c.l.b16 %v2540
    %v2759 = vunpack.c.h.b16 %v2540
    %v2760 = vunpack.c.l.b16 %v2541
    %v2761 = vpack.c.b16 %v2646, %v2641
    %v2762 = vpack.c.b16 %v2647, %v2642
    %v2763 = vpack.c.b16 %v2648, %v2643
    %v2764 = vpack.c.b16 %v2649, %v2644
    %v2765 = vpack.c.b16 %v2650, %v2645
    %v2766 = vpack.c.b16 %v2656, %v2651
    %v2767 = vpack.c.b16 %v2657, %v2652
    %v2768 = vpack.c.b16 %v2658, %v2653
    %v2769 = vpack.c.b16 %v2659, %v2654
    %v2770 = vpack.c.b16 %v2660, %v2655
    %v2771 = vpack.c.b16 %v2666, %v2661
    %v2772 = vpack.c.b16 %v2667, %v2662
    %v2773 = vpack.c.b16 %v2668, %v2663
    %v2774 = vpack.c.b16 %v2669, %v2664
    %v2775 = vpack.c.b16 %v2670, %v2665
    %v2776 = vpack.c.b16 %v2676, %v2671
    %v2777 = vpack.c.b16 %v2677, %v2672
    %v2778 = vpack.c.b16 %v2678, %v2673
    %v2779 = vpack.c.b16 %v2679, %v2674
    %v2780 = vpack.c.b16 %v2680, %v2675
    %v2781 = vpack.c.b16 %v2686, %v2681
    %v2782 = vpack.c.b16 %v2687, %v2682
    %v2783 = vpack.c.b16 %v2688, %v2683
    %v2784 = vpack.c.b16 %v2689, %v2684
    %v2785 = vpack.c.b16 %v2690, %v2685
    %v2786 = vpack.c.b16 %v2696, %v2691
    %v2787 = vpack.c.b16 %v2697, %v2692
    %v2788 = vpack.c.b16 %v2698, %v2693
    %v2789 = vpack.c.b16 %v2699, %v2694
    %v2790 = vpack.c.b16 %v2700, %v2695
    %v2791 = vpack.c.b16 %v2706, %v2701
    %v2792 = vpack.c.b16 %v2707, %v2702
    %v2793 = vpack.c.b16 %v2708, %v2703
    %v2794 = vpack.c.b16 %v2709, %v2704
    %v2795 = vpack.c.b16 %v2710, %v2705
    %v2796 = vpack.c.b16 %v2716, %v2711
    %v2797 = vpack.c.b16 %v2717, %v2712
    %v2798 = vpack.c.b16 %v2718, %v2713
    %v2799 = vpack.c.b16 %v2719, %v2714
    %v2800 = vpack.c.b16 %v2720, %v2715
    %v2801 = vpack.c.b16 %v2726, %v2721
    %v2802 = vpack.c.b16 %v2727, %v2722
    %v2803 = vpack.c.b16 %v2728, %v2723
    %v2804 = vpack.c.b16 %v2729, %v2724
    %v2805 = vpack.c.b16 %v2730, %v2725
    %v2806 = vpack.c.b16 %v2736, %v2731
    %v2807 = vpack.c.b16 %v2737, %v2732
    %v2808 = vpack.c.b16 %v2738, %v2733
    %v2809 = vpack.c.b16 %v2739, %v2734
    %v2810 = vpack.c.b16 %v2740, %v2735
    %v2811 = vpack.c.b16 %v2746, %v2741
    %v2812 = vpack.c.b16 %v2747, %v2742
    %v2813 = vpack.c.b16 %v2748, %v2743
    %v2814 = vpack.c.b16 %v2749, %v2744
    %v2815 = vpack.c.b16 %v2750, %v2745
    %v2816 = vpack.c.b16 %v2756, %v2751
    %v2817 = vpack.c.b16 %v2757, %v2752
    %v2818 = vpack.c.b16 %v2758, %v2753
    %v2819 = vpack.c.b16 %v2759, %v2754
    %v2820 = vpack.c.b16 %v2760, %v2755
    %v2882 = vsel %vm1051, %v2556, 0
    %v2885 = vsel %vm1051, %v2560, 0
    %v2888 = vsel %vm1051, %v2564, 0
    %v2891 = vsel %vm1051, %v2563, 0
    %2893 = vmatprep.subr.bf16.mxu0 %v2762
    %2894 = vmatpush1.bf16.msra.mxu0 %v2761
    %2895 = vmatprep.subr.bf16.mxu0 %v2767
    %2896 = vmatpush1.bf16.msra.mxu0 %v2766
    %2897 = vmatprep.subr.bf16.mxu0 %v2772
    %2898 = vmatpush1.bf16.msra.mxu0 %v2771
    %2899 = vmatprep.subr.bf16.mxu0 %v2777
    %2900 = vmatpush1.bf16.msra.mxu0 %v2776
    %2901 = vmatprep.subr.bf16.mxu0 %v2782
    %2902 = vmatpush1.bf16.msra.mxu0 %v2781
    %2903 = vmatprep.subr.bf16.mxu0 %v2787
    %2904 = vmatpush1.bf16.msra.mxu0 %v2786
    %2905 = vmatprep.subr.bf16.mxu0 %v2792
    %2906 = vmatpush1.bf16.msra.mxu0 %v2791
    %2907 = vmatprep.subr.bf16.mxu0 %v2797
    %2908 = vmatpush1.bf16.msra.mxu0 %v2796
    %2909 = vmatprep.subr.bf16.mxu0 %v2802
    %2910 = vmatpush1.bf16.msra.mxu0 %v2801
    %2911 = vmatprep.subr.bf16.mxu0 %v2807
    %2912 = vmatpush1.bf16.msra.mxu0 %v2806
    %2913 = vmatprep.subr.bf16.mxu0 %v2812
    %2914 = vmatpush1.bf16.msra.mxu0 %v2811
    %2915 = vmatprep.subr.bf16.mxu0 %v2817
    %2916 = vmatpush1.bf16.msra.mxu0 %v2816
    %2917 = vmatprep.subr.bf16.mxu0 0
    %2918 = vmatpush1.bf16.msra.mxu0 0
    %2919 = vmatprep.subr.bf16.mxu0 0
    %2920 = vmatpush1.bf16.msra.mxu0 0
    %2921 = vmatprep.subr.bf16.mxu0 0
    %2922 = vmatpush1.bf16.msra.mxu0 0
    %2923 = vmatprep.subr.bf16.mxu0 0
    %2924 = vmatpush1.bf16.msra.mxu0 0
    %2925 = vmatprep.mubr.bf16.mxu0 %v2882
    %2926 = vmatmul.mubr.bf16.gmra.mrb[0].mxu0 %v2553
    %v2927 = vpop.f32.mrb[0].mxu0
    %v2928 = vadd.f32 0.0, %v2927
    %v2929 = vpop.f32.mrb[0].mxu0
    %v2930 = vadd.f32 0.0, %v2929
    %v2931 = vpop.f32.mrb[0].mxu0
    %v2932 = vadd.f32 0.0, %v2931
    %v2933 = vpop.f32.mrb[0].mxu0
    %v2934 = vadd.f32 0.0, %v2933
    %2935 = vmatprep.mubr.bf16.mxu0 %v2885
    %2936 = vmatmul.mubr.bf16.gmra.mrb[0].mxu0 %v2558
    %v2937 = vpop.f32.mrb[0].mxu0
    %v2938 = vadd.f32 0.0, %v2937
    %v2939 = vpop.f32.mrb[0].mxu0
    %v2940 = vadd.f32 0.0, %v2939
    %v2941 = vpop.f32.mrb[0].mxu0
    %v2942 = vadd.f32 0.0, %v2941
    %v2943 = vpop.f32.mrb[0].mxu0
    %v2944 = vadd.f32 0.0, %v2943
    %2945 = vmatprep.mubr.bf16.mxu0 %v2888
    %2946 = vmatmul.mubr.bf16.gmra.mrb[0].mxu0 %v2562
    %v2947 = vpop.f32.mrb[0].mxu0
    %v2948 = vadd.f32 0.0, %v2947
    %v2949 = vpop.f32.mrb[0].mxu0
    %v2950 = vadd.f32 0.0, %v2949
    %v2951 = vpop.f32.mrb[0].mxu0
    %v2952 = vadd.f32 0.0, %v2951
    %v2953 = vpop.f32.mrb[0].mxu0
    %v2954 = vadd.f32 0.0, %v2953
    %2955 = vmatprep.mubr.bf16.mxu0 %v2891
    %2956 = vmatmul.mubr.bf16.gmra.mrb[0].mxu0 %v2561
    %v2957 = vpop.f32.mrb[0].mxu0
    %v2958 = vadd.f32 0.0, %v2957
    %v2959 = vpop.f32.mrb[0].mxu0
    %v2960 = vadd.f32 0.0, %v2959
    %v2961 = vpop.f32.mrb[0].mxu0
    %v2962 = vpop.f32.mrb[0].mxu0
    %2963 = vdwg.mxu0
    %2964 = vmatprep.subr.bf16.mxu0 %v2764
    %2965 = vmatpush1.bf16.msra.mxu0 %v2763
    %2966 = vmatprep.subr.bf16.mxu0 %v2769
    %2967 = vmatpush1.bf16.msra.mxu0 %v2768
    %2968 = vmatprep.subr.bf16.mxu0 %v2774
    %2969 = vmatpush1.bf16.msra.mxu0 %v2773
    %2970 = vmatprep.subr.bf16.mxu0 %v2779
    %2971 = vmatpush1.bf16.msra.mxu0 %v2778
    %2972 = vmatprep.subr.bf16.mxu0 %v2784
    %2973 = vmatpush1.bf16.msra.mxu0 %v2783
    %2974 = vmatprep.subr.bf16.mxu0 %v2789
    %2975 = vmatpush1.bf16.msra.mxu0 %v2788
    %2976 = vmatprep.subr.bf16.mxu0 %v2794
    %2977 = vmatpush1.bf16.msra.mxu0 %v2793
    %2978 = vmatprep.subr.bf16.mxu0 %v2799
    %2979 = vmatpush1.bf16.msra.mxu0 %v2798
    %2980 = vmatprep.subr.bf16.mxu0 %v2804
    %2981 = vmatpush1.bf16.msra.mxu0 %v2803
    %2982 = vmatprep.subr.bf16.mxu0 %v2809
    %2983 = vmatpush1.bf16.msra.mxu0 %v2808
    %2984 = vmatprep.subr.bf16.mxu0 %v2814
    %2985 = vmatpush1.bf16.msra.mxu0 %v2813
    %2986 = vmatprep.subr.bf16.mxu0 %v2819
    %2987 = vmatpush1.bf16.msra.mxu0 %v2818
    %2988 = vmatprep.subr.bf16.mxu0 0
    %2989 = vmatpush1.bf16.msra.mxu0 0
    %2990 = vmatprep.subr.bf16.mxu0 0
    %2991 = vmatpush1.bf16.msra.mxu0 0
    %2992 = vmatprep.subr.bf16.mxu0 0
    %2993 = vmatpush1.bf16.msra.mxu0 0
    %2994 = vmatprep.subr.bf16.mxu0 0
    %2995 = vmatpush1.bf16.msra.mxu0 0
    %2996 = vmatprep.mubr.bf16.mxu0 %v2882
    %2997 = vmatmul.mubr.bf16.gmra.mrb[0].mxu0 %v2553
    %v2998 = vpop.f32.mrb[0].mxu0
    %v2999 = vadd.f32 0.0, %v2998
    %v3000 = vpop.f32.mrb[0].mxu0
    %v3001 = vadd.f32 0.0, %v3000
    %v3002 = vpop.f32.mrb[0].mxu0
    %v3003 = vadd.f32 0.0, %v3002
    %v3004 = vpop.f32.mrb[0].mxu0
    %v3005 = vadd.f32 0.0, %v3004
    %3006 = vmatprep.mubr.bf16.mxu0 %v2885
    %3007 = vmatmul.mubr.bf16.gmra.mrb[0].mxu0 %v2558
    %v3008 = vpop.f32.mrb[0].mxu0
    %v3009 = vadd.f32 0.0, %v3008
    %v3010 = vpop.f32.mrb[0].mxu0
    %v3011 = vadd.f32 0.0, %v3010
    %v3012 = vpop.f32.mrb[0].mxu0
    %v3013 = vadd.f32 0.0, %v3012
    %v3014 = vpop.f32.mrb[0].mxu0
    %v3015 = vadd.f32 0.0, %v3014
    %3016 = vmatprep.mubr.bf16.mxu0 %v2888
    %3017 = vmatmul.mubr.bf16.gmra.mrb[0].mxu0 %v2562
    %v3018 = vpop.f32.mrb[0].mxu0
    %v3019 = vadd.f32 0.0, %v3018
    %v3020 = vpop.f32.mrb[0].mxu0
    %v3021 = vadd.f32 0.0, %v3020
    %v3022 = vpop.f32.mrb[0].mxu0
    %v3023 = vadd.f32 0.0, %v3022
    %v3024 = vpop.f32.mrb[0].mxu0
    %v3025 = vadd.f32 0.0, %v3024
    %3026 = vmatprep.mubr.bf16.mxu0 %v2891
    %3027 = vmatmul.mubr.bf16.gmra.mrb[0].mxu0 %v2561
    %v3028 = vpop.f32.mrb[0].mxu0
    %v3029 = vadd.f32 0.0, %v3028
    %v3030 = vpop.f32.mrb[0].mxu0
    %v3031 = vadd.f32 0.0, %v3030
    %v3032 = vpop.f32.mrb[0].mxu0
    %v3033 = vpop.f32.mrb[0].mxu0
    %3034 = vdwg.mxu0
    %3035 = vmatprep.subr.bf16.mxu0 0
    %3036 = vmatpush1.bf16.msra.mxu0 %v2765
    %3037 = vmatprep.subr.bf16.mxu0 0
    %3038 = vmatpush1.bf16.msra.mxu0 %v2770
    %3039 = vmatprep.subr.bf16.mxu0 0
    %3040 = vmatpush1.bf16.msra.mxu0 %v2775
    %3041 = vmatprep.subr.bf16.mxu0 0
    %3042 = vmatpush1.bf16.msra.mxu0 %v2780
    %3043 = vmatprep.subr.bf16.mxu0 0
    %3044 = vmatpush1.bf16.msra.mxu0 %v2785
    %3045 = vmatprep.subr.bf16.mxu0 0
    %3046 = vmatpush1.bf16.msra.mxu0 %v2790
    %3047 = vmatprep.subr.bf16.mxu0 0
    %3048 = vmatpush1.bf16.msra.mxu0 %v2795
    %3049 = vmatprep.subr.bf16.mxu0 0
    %3050 = vmatpush1.bf16.msra.mxu0 %v2800
    %3051 = vmatprep.subr.bf16.mxu0 0
    %3052 = vmatpush1.bf16.msra.mxu0 %v2805
    %3053 = vmatprep.subr.bf16.mxu0 0
    %3054 = vmatpush1.bf16.msra.mxu0 %v2810
    %3055 = vmatprep.subr.bf16.mxu0 0
    %3056 = vmatpush1.bf16.msra.mxu0 %v2815
    %3057 = vmatprep.subr.bf16.mxu0 0
    %3058 = vmatpush1.bf16.msra.mxu0 %v2820
    %3059 = vmatprep.subr.bf16.mxu0 0
    %3060 = vmatpush1.bf16.msra.mxu0 0
    %3061 = vmatprep.subr.bf16.mxu0 0
    %3062 = vmatpush1.bf16.msra.mxu0 0
    %3063 = vmatprep.subr.bf16.mxu0 0
    %3064 = vmatpush1.bf16.msra.mxu0 0
    %3065 = vmatprep.subr.bf16.mxu0 0
    %3066 = vmatpush1.bf16.msra.mxu0 0
    %3067 = vmatprep.mubr.bf16.mxu0 %v2882
    %3068 = vmatmul.mubr.bf16.gmra.mrb[0].mxu0 %v2553
    %v3069 = vpop.f32.mrb[0].mxu0
    %v3070 = vadd.f32 0.0, %v3069
    %v3071 = vpop.f32.mrb[0].mxu0
    %v3072 = vpop.f32.mrb[0].mxu0
    %v3073 = vadd.f32 0.0, %v3072
    %v3074 = vpop.f32.mrb[0].mxu0
    %3075 = vmatprep.mubr.bf16.mxu0 %v2885
    %3076 = vmatmul.mubr.bf16.gmra.mrb[0].mxu0 %v2558
    %v3077 = vpop.f32.mrb[0].mxu0
    %v3078 = vadd.f32 0.0, %v3077
    %v3079 = vpop.f32.mrb[0].mxu0
    %v3080 = vpop.f32.mrb[0].mxu0
    %v3081 = vadd.f32 0.0, %v3080
    %v3082 = vpop.f32.mrb[0].mxu0
    %3083 = vmatprep.mubr.bf16.mxu0 %v2888
    %3084 = vmatmul.mubr.bf16.gmra.mrb[0].mxu0 %v2562
    %v3085 = vpop.f32.mrb[0].mxu0
    %v3086 = vadd.f32 0.0, %v3085
    %v3087 = vpop.f32.mrb[0].mxu0
    %v3088 = vpop.f32.mrb[0].mxu0
    %v3089 = vadd.f32 0.0, %v3088
    %v3090 = vpop.f32.mrb[0].mxu0
    %3091 = vmatprep.mubr.bf16.mxu0 %v2891
    %3092 = vmatmul.mubr.bf16.gmra.mrb[0].mxu0 %v2561
    %v3093 = vpop.f32.mrb[0].mxu0
    %v3094 = vadd.f32 0.0, %v3093
    %v3095 = vpop.f32.mrb[0].mxu0
    %v3096 = vpop.f32.mrb[0].mxu0
    %v3097 = vpop.f32.mrb[0].mxu0
    %3098 = vdwg.mxu0
    %v3099 = vadd.f32 %v2434, %v2928
    %v3100 = vadd.f32 %v2435, %v2930
    %v3101 = vadd.f32 %v2436, %v2999
    %v3102 = vadd.f32 %v2437, %v3001
    %v3103 = vadd.f32 %v2438, %v3070
    %v3104 = vadd.f32 %v2439, %v2932
    %v3105 = vadd.f32 %v2440, %v2934
    %v3106 = vadd.f32 %v2441, %v3003
    %v3107 = vadd.f32 %v2442, %v3005
    %v3108 = vadd.f32 %v2443, %v3073
    %v3109 = vadd.f32 %v2444, %v2938
    %v3110 = vadd.f32 %v2445, %v2940
    %v3111 = vadd.f32 %v2446, %v3009
    %v3112 = vadd.f32 %v2447, %v3011
    %v3113 = vadd.f32 %v2448, %v3078
    %v3114 = vadd.f32 %v2449, %v2942
    %v3115 = vadd.f32 %v2450, %v2944
    %v3116 = vadd.f32 %v2451, %v3013
    %v3117 = vadd.f32 %v2452, %v3015
    %v3118 = vadd.f32 %v2453, %v3081
    %v3119 = vadd.f32 %v2454, %v2948
    %v3120 = vadd.f32 %v2455, %v2950
    %v3121 = vadd.f32 %v2456, %v3019
    %v3122 = vadd.f32 %v2457, %v3021
    %v3123 = vadd.f32 %v2458, %v3086
    %v3124 = vadd.f32 %v2459, %v2952
    %v3125 = vadd.f32 %v2460, %v2954
    %v3126 = vadd.f32 %v2461, %v3023
    %v3127 = vadd.f32 %v2462, %v3025
    %v3128 = vadd.f32 %v2463, %v3089
    %v3129 = vadd.f32 %v2464, %v2958
    %v3130 = vadd.f32 %v2465, %v2960
    %v3131 = vadd.f32 %v2466, %v3029
    %v3132 = vadd.f32 %v2467, %v3031
    %v3133 = vadd.f32 %v2468, %v3094
    %v3134 = vld [vmem:[%s5] sm:$0x1f]
    %v3136 = vlaneseq
    %v3137 = vshrl.u32 %v3136, 7
    %v3138 = vsub.s32 0, %v3137
    %v3139 = vrot.slane %v3134, %v3138
    %v3140 = vlaneseq
    %v3141 = vshrl.u32 %v3140, 7
    %v3142 = vsub.s32 1, %v3141
    %v3143 = vrot.slane %v3134, %v3142
    %v3144 = vlaneseq
    %v3145 = vshrl.u32 %v3144, 7
    %v3146 = vsub.s32 2, %v3145
    %v3147 = vrot.slane %v3134, %v3146
    %v3148 = vlaneseq
    %v3149 = vshrl.u32 %v3148, 7
    %v3150 = vsub.s32 3, %v3149
    %v3151 = vrot.slane %v3134, %v3150
    %v3152 = vlaneseq
    %v3153 = vshrl.u32 %v3152, 7
    %v3154 = vsub.s32 4, %v3153
    %v3155 = vrot.slane %v3134, %v3154
    %v3161 = vadd.f32 %v3099, %v3139
    %v3162 = vadd.f32 %v3100, %v3143
    %v3163 = vadd.f32 %v3101, %v3147
    %v3164 = vadd.f32 %v3102, %v3151
    %v3165 = vadd.f32 %v3103, %v3155
    %v3166 = vadd.f32 %v3104, %v3139
    %v3167 = vadd.f32 %v3105, %v3143
    %v3168 = vadd.f32 %v3106, %v3147
    %v3169 = vadd.f32 %v3107, %v3151
    %v3170 = vadd.f32 %v3108, %v3155
    %v3171 = vadd.f32 %v3109, %v3139
    %v3172 = vadd.f32 %v3110, %v3143
    %v3173 = vadd.f32 %v3111, %v3147
    %v3174 = vadd.f32 %v3112, %v3151
    %v3175 = vadd.f32 %v3113, %v3155
    %v3176 = vadd.f32 %v3114, %v3139
    %v3177 = vadd.f32 %v3115, %v3143
    %v3178 = vadd.f32 %v3116, %v3147
    %v3179 = vadd.f32 %v3117, %v3151
    %v3180 = vadd.f32 %v3118, %v3155
    %v3181 = vadd.f32 %v3119, %v3139
    %v3182 = vadd.f32 %v3120, %v3143
    %v3183 = vadd.f32 %v3121, %v3147
    %v3184 = vadd.f32 %v3122, %v3151
    %v3185 = vadd.f32 %v3123, %v3155
    %v3186 = vadd.f32 %v3124, %v3139
    %v3187 = vadd.f32 %v3125, %v3143
    %v3188 = vadd.f32 %v3126, %v3147
    %v3189 = vadd.f32 %v3127, %v3151
    %v3190 = vadd.f32 %v3128, %v3155
    %v3191 = vadd.f32 %v3129, %v3139
    %v3192 = vadd.f32 %v3130, %v3143
    %v3193 = vadd.f32 %v3131, %v3147
    %v3194 = vadd.f32 %v3132, %v3151
    %v3195 = vadd.f32 %v3133, %v3155
    %v3196 = vmax.f32 %v3161, 0.0
    %v3197 = vmax.f32 %v3162, 0.0
    %v3198 = vmax.f32 %v3163, 0.0
    %v3199 = vmax.f32 %v3164, 0.0
    %v3200 = vmax.f32 %v3165, 0.0
    %v3201 = vmax.f32 %v3166, 0.0
    %v3202 = vmax.f32 %v3167, 0.0
    %v3203 = vmax.f32 %v3168, 0.0
    %v3204 = vmax.f32 %v3169, 0.0
    %v3205 = vmax.f32 %v3170, 0.0
    %v3206 = vmax.f32 %v3171, 0.0
    %v3207 = vmax.f32 %v3172, 0.0
    %v3208 = vmax.f32 %v3173, 0.0
    %v3209 = vmax.f32 %v3174, 0.0
    %v3210 = vmax.f32 %v3175, 0.0
    %v3211 = vmax.f32 %v3176, 0.0
    %v3212 = vmax.f32 %v3177, 0.0
    %v3213 = vmax.f32 %v3178, 0.0
    %v3214 = vmax.f32 %v3179, 0.0
    %v3215 = vmax.f32 %v3180, 0.0
    %v3216 = vmax.f32 %v3181, 0.0
    %v3217 = vmax.f32 %v3182, 0.0
    %v3218 = vmax.f32 %v3183, 0.0
    %v3219 = vmax.f32 %v3184, 0.0
    %v3220 = vmax.f32 %v3185, 0.0
    %v3221 = vmax.f32 %v3186, 0.0
    %v3222 = vmax.f32 %v3187, 0.0
    %v3223 = vmax.f32 %v3188, 0.0
    %v3224 = vmax.f32 %v3189, 0.0
    %v3225 = vmax.f32 %v3190, 0.0
    %v3226 = vmax.f32 %v3191, 0.0
    %v3227 = vmax.f32 %v3192, 0.0
    %v3228 = vmax.f32 %v3193, 0.0
    %v3229 = vmax.f32 %v3194, 0.0
    %v3230 = vmax.f32 %v3195, 0.0
    %v3231 = vld [vmem:[%s6] sm:$0x3]
    %vm3232 = vcmask 408576
    %v3234 = vsel %vm3232, %v3231, 0
    %vm3236 = vcmask 1041408
    %v3238 = vsel %vm3236, %v3226, 0
    %v3241 = vsel %vm3236, %v3227, 0
    %v3244 = vsel %vm3236, %v3228, 0
    %v3247 = vsel %vm3236, %v3229, 0
    %v3250 = vsel %vm3236, %v3230, 0
    %3252 = vmatprep.subr.mxu0 %v3197
    %3253 = vmatpush1.msra.mxu0 %v3196
    %3254 = vmatprep.subr.mxu0 %v3202
    %3255 = vmatpush1.msra.mxu0 %v3201
    %3256 = vmatprep.subr.mxu0 %v3207
    %3257 = vmatpush1.msra.mxu0 %v3206
    %3258 = vmatprep.subr.mxu0 %v3212
    %3259 = vmatpush1.msra.mxu0 %v3211
    %3260 = vmatprep.subr.mxu0 %v3217
    %3261 = vmatpush1.msra.mxu0 %v3216
    %3262 = vmatprep.subr.mxu0 %v3222
    %3263 = vmatpush1.msra.mxu0 %v3221
    %3264 = vmatprep.subr.mxu0 %v3241
    %3265 = vmatpush1.msra.mxu0 %v3238
    %3266 = vmatprep.subr.mxu0 0.0
    %3267 = vmatpush1.msra.mxu0 0.0
    %3268 = vmatprep.subr.mxu0 0.0
    %3269 = vmatpush1.msra.mxu0 0.0
    %3270 = vmatprep.subr.mxu0 0.0
    %3271 = vmatpush1.msra.mxu0 0.0
    %3272 = vmatprep.subr.mxu0 0.0
    %3273 = vmatpush1.msra.mxu0 0.0
    %3274 = vmatprep.subr.mxu0 0.0
    %3275 = vmatpush1.msra.mxu0 0.0
    %3276 = vmatprep.subr.mxu0 0.0
    %3277 = vmatpush1.msra.mxu0 0.0
    %3278 = vmatprep.subr.mxu0 0.0
    %3279 = vmatpush1.msra.mxu0 0.0
    %3280 = vmatprep.subr.mxu0 0.0
    %3281 = vmatpush1.msra.mxu0 0.0
    %3282 = vmatprep.subr.mxu0 0.0
    %3283 = vmatpush1.msra.mxu0 0.0
    %3284 = vmatprep.subr.mxu0 0.0
    %3285 = vmatpush1.msra.mxu0 0.0
    %3286 = vmatprep.subr.mxu0 0.0
    %3287 = vmatpush1.msra.mxu0 0.0
    %3288 = vmatprep.subr.mxu0 0.0
    %3289 = vmatpush1.msra.mxu0 0.0
    %3290 = vmatprep.subr.mxu0 0.0
    %3291 = vmatpush1.msra.mxu0 0.0
    %3292 = vmatprep.subr.mxu0 0.0
    %3293 = vmatpush1.msra.mxu0 0.0
    %3294 = vmatprep.subr.mxu0 0.0
    %3295 = vmatpush1.msra.mxu0 0.0
    %3296 = vmatprep.subr.mxu0 0.0
    %3297 = vmatpush1.msra.mxu0 0.0
    %3298 = vmatprep.subr.mxu0 0.0
    %3299 = vmatpush1.msra.mxu0 0.0
    %3300 = vmatprep.subr.mxu0 0.0
    %3301 = vmatpush1.msra.mxu0 0.0
    %3302 = vmatprep.subr.mxu0 0.0
    %3303 = vmatpush1.msra.mxu0 0.0
    %3304 = vmatprep.subr.mxu0 0.0
    %3305 = vmatpush1.msra.mxu0 0.0
    %3306 = vmatprep.subr.mxu0 0.0
    %3307 = vmatpush1.msra.mxu0 0.0
    %3308 = vmatprep.subr.mxu0 0.0
    %3309 = vmatpush1.msra.mxu0 0.0
    %3310 = vmatprep.subr.mxu0 0.0
    %3311 = vmatpush1.msra.mxu0 0.0
    %3312 = vmatprep.subr.mxu0 0.0
    %3313 = vmatpush1.msra.mxu0 0.0
    %3314 = vmatprep.subr.mxu0 0.0
    %3315 = vmatpush1.msra.mxu0 0.0
    %3316 = vmatprep.mubr.f32.mxu0 0.0
    %3317 = vmatmul.mubr.f32.gmra.mrb[0].mxu0 %v3234
    %v3318 = vpop.f32.mrb[0].mxu0
    %v3319 = vadd.f32 0.0, %v3318
    %v3320 = vpop.f32.mrb[0].mxu0
    %v3321 = vadd.f32 0.0, %v3320
    %3322 = vdwg.mxu0
    %3323 = vmatprep.subr.mxu0 %v3199
    %3324 = vmatpush1.msra.mxu0 %v3198
    %3325 = vmatprep.subr.mxu0 %v3204
    %3326 = vmatpush1.msra.mxu0 %v3203
    %3327 = vmatprep.subr.mxu0 %v3209
    %3328 = vmatpush1.msra.mxu0 %v3208
    %3329 = vmatprep.subr.mxu0 %v3214
    %3330 = vmatpush1.msra.mxu0 %v3213
    %3331 = vmatprep.subr.mxu0 %v3219
    %3332 = vmatpush1.msra.mxu0 %v3218
    %3333 = vmatprep.subr.mxu0 %v3224
    %3334 = vmatpush1.msra.mxu0 %v3223
    %3335 = vmatprep.subr.mxu0 %v3247
    %3336 = vmatpush1.msra.mxu0 %v3244
    %3337 = vmatprep.subr.mxu0 0.0
    %3338 = vmatpush1.msra.mxu0 0.0
    %3339 = vmatprep.subr.mxu0 0.0
    %3340 = vmatpush1.msra.mxu0 0.0
    %3341 = vmatprep.subr.mxu0 0.0
    %3342 = vmatpush1.msra.mxu0 0.0
    %3343 = vmatprep.subr.mxu0 0.0
    %3344 = vmatpush1.msra.mxu0 0.0
    %3345 = vmatprep.subr.mxu0 0.0
    %3346 = vmatpush1.msra.mxu0 0.0
    %3347 = vmatprep.subr.mxu0 0.0
    %3348 = vmatpush1.msra.mxu0 0.0
    %3349 = vmatprep.subr.mxu0 0.0
    %3350 = vmatpush1.msra.mxu0 0.0
    %3351 = vmatprep.subr.mxu0 0.0
    %3352 = vmatpush1.msra.mxu0 0.0
    %3353 = vmatprep.subr.mxu0 0.0
    %3354 = vmatpush1.msra.mxu0 0.0
    %3355 = vmatprep.subr.mxu0 0.0
    %3356 = vmatpush1.msra.mxu0 0.0
    %3357 = vmatprep.subr.mxu0 0.0
    %3358 = vmatpush1.msra.mxu0 0.0
    %3359 = vmatprep.subr.mxu0 0.0
    %3360 = vmatpush1.msra.mxu0 0.0
    %3361 = vmatprep.subr.mxu0 0.0
    %3362 = vmatpush1.msra.mxu0 0.0
    %3363 = vmatprep.subr.mxu0 0.0
    %3364 = vmatpush1.msra.mxu0 0.0
    %3365 = vmatprep.subr.mxu0 0.0
    %3366 = vmatpush1.msra.mxu0 0.0
    %3367 = vmatprep.subr.mxu0 0.0
    %3368 = vmatpush1.msra.mxu0 0.0
    %3369 = vmatprep.subr.mxu0 0.0
    %3370 = vmatpush1.msra.mxu0 0.0
    %3371 = vmatprep.subr.mxu0 0.0
    %3372 = vmatpush1.msra.mxu0 0.0
    %3373 = vmatprep.subr.mxu0 0.0
    %3374 = vmatpush1.msra.mxu0 0.0
    %3375 = vmatprep.subr.mxu0 0.0
    %3376 = vmatpush1.msra.mxu0 0.0
    %3377 = vmatprep.subr.mxu0 0.0
    %3378 = vmatpush1.msra.mxu0 0.0
    %3379 = vmatprep.subr.mxu0 0.0
    %3380 = vmatpush1.msra.mxu0 0.0
    %3381 = vmatprep.subr.mxu0 0.0
    %3382 = vmatpush1.msra.mxu0 0.0
    %3383 = vmatprep.subr.mxu0 0.0
    %3384 = vmatpush1.msra.mxu0 0.0
    %3385 = vmatprep.subr.mxu0 0.0
    %3386 = vmatpush1.msra.mxu0 0.0
    %3387 = vmatprep.mubr.f32.mxu0 0.0
    %3388 = vmatmul.mubr.f32.gmra.mrb[0].mxu0 %v3234
    %v3389 = vpop.f32.mrb[0].mxu0
    %v3390 = vadd.f32 0.0, %v3389
    %v3391 = vpop.f32.mrb[0].mxu0
    %v3392 = vadd.f32 0.0, %v3391
    %3393 = vdwg.mxu0
    %3394 = vmatprep.subr.mxu0 0.0
    %3395 = vmatpush1.msra.mxu0 %v3200
    %3396 = vmatprep.subr.mxu0 0.0
    %3397 = vmatpush1.msra.mxu0 %v3205
    %3398 = vmatprep.subr.mxu0 0.0
    %3399 = vmatpush1.msra.mxu0 %v3210
    %3400 = vmatprep.subr.mxu0 0.0
    %3401 = vmatpush1.msra.mxu0 %v3215
    %3402 = vmatprep.subr.mxu0 0.0
    %3403 = vmatpush1.msra.mxu0 %v3220
    %3404 = vmatprep.subr.mxu0 0.0
    %3405 = vmatpush1.msra.mxu0 %v3225
    %3406 = vmatprep.subr.mxu0 0.0
    %3407 = vmatpush1.msra.mxu0 %v3250
    %3408 = vmatprep.subr.mxu0 0.0
    %3409 = vmatpush1.msra.mxu0 0.0
    %3410 = vmatprep.subr.mxu0 0.0
    %3411 = vmatpush1.msra.mxu0 0.0
    %3412 = vmatprep.subr.mxu0 0.0
    %3413 = vmatpush1.msra.mxu0 0.0
    %3414 = vmatprep.subr.mxu0 0.0
    %3415 = vmatpush1.msra.mxu0 0.0
    %3416 = vmatprep.subr.mxu0 0.0
    %3417 = vmatpush1.msra.mxu0 0.0
    %3418 = vmatprep.subr.mxu0 0.0
    %3419 = vmatpush1.msra.mxu0 0.0
    %3420 = vmatprep.subr.mxu0 0.0
    %3421 = vmatpush1.msra.mxu0 0.0
    %3422 = vmatprep.subr.mxu0 0.0
    %3423 = vmatpush1.msra.mxu0 0.0
    %3424 = vmatprep.subr.mxu0 0.0
    %3425 = vmatpush1.msra.mxu0 0.0
    %3426 = vmatprep.subr.mxu0 0.0
    %3427 = vmatpush1.msra.mxu0 0.0
    %3428 = vmatprep.subr.mxu0 0.0
    %3429 = vmatpush1.msra.mxu0 0.0
    %3430 = vmatprep.subr.mxu0 0.0
    %3431 = vmatpush1.msra.mxu0 0.0
    %3432 = vmatprep.subr.mxu0 0.0
    %3433 = vmatpush1.msra.mxu0 0.0
    %3434 = vmatprep.subr.mxu0 0.0
    %3435 = vmatpush1.msra.mxu0 0.0
    %3436 = vmatprep.subr.mxu0 0.0
    %3437 = vmatpush1.msra.mxu0 0.0
    %3438 = vmatprep.subr.mxu0 0.0
    %3439 = vmatpush1.msra.mxu0 0.0
    %3440 = vmatprep.subr.mxu0 0.0
    %3441 = vmatpush1.msra.mxu0 0.0
    %3442 = vmatprep.subr.mxu0 0.0
    %3443 = vmatpush1.msra.mxu0 0.0
    %3444 = vmatprep.subr.mxu0 0.0
    %3445 = vmatpush1.msra.mxu0 0.0
    %3446 = vmatprep.subr.mxu0 0.0
    %3447 = vmatpush1.msra.mxu0 0.0
    %3448 = vmatprep.subr.mxu0 0.0
    %3449 = vmatpush1.msra.mxu0 0.0
    %3450 = vmatprep.subr.mxu0 0.0
    %3451 = vmatpush1.msra.mxu0 0.0
    %3452 = vmatprep.subr.mxu0 0.0
    %3453 = vmatpush1.msra.mxu0 0.0
    %3454 = vmatprep.subr.mxu0 0.0
    %3455 = vmatpush1.msra.mxu0 0.0
    %3456 = vmatprep.subr.mxu0 0.0
    %3457 = vmatpush1.msra.mxu0 0.0
    %3458 = vmatprep.mubr.f32.mxu0 0.0
    %3459 = vmatmul.mubr.f32.gmra.mrb[0].mxu0 %v3234
    %v3460 = vpop.f32.mrb[0].mxu0
    %v3461 = vadd.f32 0.0, %v3460
    %v3462 = vpop.f32.mrb[0].mxu0
    %3463 = vdwg.mxu0
    %v3464 = vpack.c.bf16 %v3319, %v3319
    %v3465 = vpack.c.bf16 %v3321, %v3321
    %v3466 = vpack.c.bf16 %v3390, %v3390
    %v3467 = vpack.c.bf16 %v3392, %v3392
    %v3468 = vpack.c.bf16 %v3461, %v3461
    %v3469 = vld [vmem:[%s7] sm:$0xf]
    %v3470 = vld [vmem:[%s7 + $0x4] sm:$0xf]
    %v3471 = vld [vmem:[%s7 + $0x8] sm:$0xf]
    %v3472 = vld [vmem:[%s7 + $0xc] sm:$0xf]
    %v3473 = vld [vmem:[%s7 + $0x10] sm:$0xf]
    %v3474 = vld [vmem:[%s7 + $0x14] sm:$0xf]
    %v3475 = vld [vmem:[%s7 + $0x18] sm:$0xf]
    %v3476 = vld [vmem:[%s7 + $0x1c] sm:$0xf]
    %v3477 = vld [vmem:[%s7 + $0x20] sm:$0xf]
    %v3478 = vld [vmem:[%s7 + $0x24] sm:$0xf]
    %v3479 = vld [vmem:[%s7 + $0x28] sm:$0xf]
    %v3480 = vld [vmem:[%s7 + $0x2c] sm:$0xf]
    %v3481 = vld [vmem:[%s7 + $0x30] sm:$0xf]
    %v3482 = vld [vmem:[%s7 + $0x34] sm:$0xf]
    %v3483 = vld [vmem:[%s7 + $0x38] sm:$0xf]
    %v3484 = vld [vmem:[%s7 + $0x3c] sm:$0xf]
    %v3485 = vld [vmem:[%s7 + $0x40] sm:$0xf]
    %v3486 = vld [vmem:[%s7 + $0x44] sm:$0xf]
    %v3487 = vld [vmem:[%s7 + $0x48] sm:$0xf]
    %v3488 = vld [vmem:[%s7 + $0x4c] sm:$0xf]
    %v3489 = vld [vmem:[%s7 + $0x50] sm:$0xf]
    %v3490 = vld [vmem:[%s7 + $0x54] sm:$0xf]
    %v3491 = vld [vmem:[%s7 + $0x58] sm:$0xf]
    %v3492 = vld [vmem:[%s7 + $0x5c] sm:$0xf]
    %v3493 = vld [vmem:[%s7 + $0x60] sm:$0xf]
    %v3494 = vld [vmem:[%s7 + $0x64] sm:$0xf]
    %v3495 = vld [vmem:[%s7 + $0x68] sm:$0xf]
    %v3496 = vld [vmem:[%s7 + $0x6c] sm:$0xf]
    %v3497 = vld [vmem:[%s7 + $0x70] sm:$0xf]
    %v3498 = vld [vmem:[%s7 + $0x74] sm:$0xf]
    %v3499 = vld [vmem:[%s7 + $0x78] sm:$0xf]
    %v3500 = vld [vmem:[%s7 + $0x7c] sm:$0xf]
    %v3501 = vld [vmem:[%s7 + $0x80] sm:$0xf]
    %v3502 = vld [vmem:[%s7 + $0x84] sm:$0xf]
    %v3503 = vld [vmem:[%s7 + $0x88] sm:$0xf]
    %v3504 = vld [vmem:[%s7 + $0x8c] sm:$0xf]
    %v3505 = vld [vmem:[%s7 + $0x90] sm:$0xf]
    %v3506 = vld [vmem:[%s7 + $0x94] sm:$0xf]
    %v3507 = vld [vmem:[%s7 + $0x98] sm:$0xf]
    %v3508 = vld [vmem:[%s7 + $0x9c] sm:$0xf]
    %v3509 = vld [vmem:[%s7 + $0xa0] sm:$0xf]
    %v3510 = vld [vmem:[%s7 + $0xa4] sm:$0xf]
    %v3511 = vld [vmem:[%s7 + $0xa8] sm:$0xf]
    %v3512 = vld [vmem:[%s7 + $0xac] sm:$0xf]
    %v3513 = vld [vmem:[%s7 + $0xb0] sm:$0xf]
    %v3514 = vld [vmem:[%s7 + $0xb4] sm:$0xf]
    %v3515 = vld [vmem:[%s7 + $0xb8] sm:$0xf]
    %v3516 = vld [vmem:[%s7 + $0xbc] sm:$0xf]
    %v3517 = vld [vmem:[%s7 + $0xc0] sm:$0xf]
    %v3518 = vld [vmem:[%s7 + $0xc4] sm:$0xf]
    %v3519 = vld [vmem:[%s7 + $0xc8] sm:$0xf]
    %v3520 = vld [vmem:[%s7 + $0xcc] sm:$0xf]
    %v3521 = vld [vmem:[%s7 + $0xd0] sm:$0xf]
    %v3522 = vld [vmem:[%s7 + $0xd4] sm:$0xf]
    %v3523 = vld [vmem:[%s7 + $0xd8] sm:$0xf]
    %v3524 = vld [vmem:[%s7 + $0xdc] sm:$0xf]
    %v3525 = vld [vmem:[%s7 + $0xe0] sm:$0xf]
    %v3526 = vld [vmem:[%s7 + $0xe4] sm:$0xf]
    %v3527 = vld [vmem:[%s7 + $0xe8] sm:$0xf]
    %v3528 = vld [vmem:[%s7 + $0xec] sm:$0xf]
    %v3529 = vld [vmem:[%s7 + $0xf0] sm:$0xf]
    %v3530 = vld [vmem:[%s7 + $0xf4] sm:$0xf]
    %v3531 = vld [vmem:[%s7 + $0xf8] sm:$0xf]
    %v3532 = vld [vmem:[%s7 + $0xfc] sm:$0xf]
    %v3533 = vld [vmem:[%s7 + $0x100] sm:$0xf]
    %v3534 = vld [vmem:[%s7 + $0x104] sm:$0xf]
    %v3535 = vld [vmem:[%s7 + $0x108] sm:$0xf]
    %v3536 = vld [vmem:[%s7 + $0x10c] sm:$0xf]
    %v3537 = vld [vmem:[%s7 + $0x110] sm:$0xf]
    %v3538 = vld [vmem:[%s7 + $0x114] sm:$0xf]
    %v3539 = vld [vmem:[%s7 + $0x118] sm:$0xf]
    %v3540 = vld [vmem:[%s7 + $0x11c] sm:$0xf]
    %v3541 = vld [vmem:[%s8] sm:$0x1]
    %v3543 = vlaneseq
    %v3544 = vshrl.u32 %v3543, 7
    %v3545 = vsub.s32 0, %v3544
    %v3546 = vrot.slane %v3541, %v3545
    %v3620 = vunpack.c.l.b16 %v3469
    %v3621 = vunpack.c.l.b16 %v3470
    %v3622 = vunpack.c.l.b16 %v3471
    %v3623 = vunpack.c.l.b16 %v3472
    %v3624 = vunpack.c.l.b16 %v3473
    %v3625 = vunpack.c.l.b16 %v3474
    %v3626 = vunpack.c.l.b16 %v3475
    %v3627 = vunpack.c.l.b16 %v3476
    %v3628 = vunpack.c.l.b16 %v3477
    %v3629 = vunpack.c.l.b16 %v3478
    %v3630 = vunpack.c.l.b16 %v3479
    %v3631 = vunpack.c.l.b16 %v3480
    %v3632 = vunpack.c.l.b16 %v3481
    %v3633 = vunpack.c.l.b16 %v3482
    %v3634 = vunpack.c.l.b16 %v3483
    %v3635 = vunpack.c.l.b16 %v3484
    %v3636 = vunpack.c.l.b16 %v3485
    %v3637 = vunpack.c.l.b16 %v3486
    %v3638 = vunpack.c.l.b16 %v3487
    %v3639 = vunpack.c.l.b16 %v3488
    %v3640 = vunpack.c.l.b16 %v3489
    %v3641 = vunpack.c.l.b16 %v3490
    %v3642 = vunpack.c.l.b16 %v3491
    %v3643 = vunpack.c.l.b16 %v3492
    %v3644 = vunpack.c.l.b16 %v3493
    %v3645 = vunpack.c.l.b16 %v3494
    %v3646 = vunpack.c.l.b16 %v3495
    %v3647 = vunpack.c.l.b16 %v3496
    %v3648 = vunpack.c.l.b16 %v3497
    %v3649 = vunpack.c.l.b16 %v3498
    %v3650 = vunpack.c.l.b16 %v3499
    %v3651 = vunpack.c.l.b16 %v3500
    %v3652 = vunpack.c.l.b16 %v3501
    %v3653 = vunpack.c.l.b16 %v3502
    %v3654 = vunpack.c.l.b16 %v3503
    %v3655 = vunpack.c.l.b16 %v3504
    %v3656 = vunpack.c.l.b16 %v3505
    %v3657 = vunpack.c.l.b16 %v3506
    %v3658 = vunpack.c.l.b16 %v3507
    %v3659 = vunpack.c.l.b16 %v3508
    %v3660 = vunpack.c.l.b16 %v3509
    %v3661 = vunpack.c.l.b16 %v3510
    %v3662 = vunpack.c.l.b16 %v3511
    %v3663 = vunpack.c.l.b16 %v3512
    %v3664 = vunpack.c.l.b16 %v3513
    %v3665 = vunpack.c.l.b16 %v3514
    %v3666 = vunpack.c.l.b16 %v3515
    %v3667 = vunpack.c.l.b16 %v3516
    %v3668 = vunpack.c.l.b16 %v3517
    %v3669 = vunpack.c.l.b16 %v3518
    %v3670 = vunpack.c.l.b16 %v3519
    %v3671 = vunpack.c.l.b16 %v3520
    %v3672 = vunpack.c.l.b16 %v3521
    %v3673 = vunpack.c.l.b16 %v3522
    %v3674 = vunpack.c.l.b16 %v3523
    %v3675 = vunpack.c.l.b16 %v3524
    %v3676 = vunpack.c.l.b16 %v3525
    %v3677 = vunpack.c.l.b16 %v3526
    %v3678 = vunpack.c.l.b16 %v3527
    %v3679 = vunpack.c.l.b16 %v3528
    %v3680 = vunpack.c.l.b16 %v3529
    %v3681 = vunpack.c.l.b16 %v3530
    %v3682 = vunpack.c.l.b16 %v3531
    %v3683 = vunpack.c.l.b16 %v3532
    %v3684 = vunpack.c.l.b16 %v3533
    %v3685 = vunpack.c.l.b16 %v3534
    %v3686 = vunpack.c.l.b16 %v3535
    %v3687 = vunpack.c.l.b16 %v3536
    %v3688 = vunpack.c.l.b16 %v3537
    %v3689 = vunpack.c.l.b16 %v3538
    %v3690 = vunpack.c.l.b16 %v3539
    %v3691 = vunpack.c.l.b16 %v3540
    %v3692 = vpack.c.b16 %v3621, %v3620
    %v3693 = vpack.c.b16 %v3623, %v3622
    %v3694 = vpack.c.b16 %v3625, %v3624
    %v3695 = vpack.c.b16 %v3627, %v3626
    %v3696 = vpack.c.b16 %v3629, %v3628
    %v3697 = vpack.c.b16 %v3631, %v3630
    %v3698 = vpack.c.b16 %v3633, %v3632
    %v3699 = vpack.c.b16 %v3635, %v3634
    %v3700 = vpack.c.b16 %v3637, %v3636
    %v3701 = vpack.c.b16 %v3639, %v3638
    %v3702 = vpack.c.b16 %v3641, %v3640
    %v3703 = vpack.c.b16 %v3643, %v3642
    %v3704 = vpack.c.b16 %v3645, %v3644
    %v3705 = vpack.c.b16 %v3647, %v3646
    %v3706 = vpack.c.b16 %v3649, %v3648
    %v3707 = vpack.c.b16 %v3651, %v3650
    %v3708 = vpack.c.b16 %v3653, %v3652
    %v3709 = vpack.c.b16 %v3655, %v3654
    %v3710 = vpack.c.b16 %v3657, %v3656
    %v3711 = vpack.c.b16 %v3659, %v3658
    %v3712 = vpack.c.b16 %v3661, %v3660
    %v3713 = vpack.c.b16 %v3663, %v3662
    %v3714 = vpack.c.b16 %v3665, %v3664
    %v3715 = vpack.c.b16 %v3667, %v3666
    %v3716 = vpack.c.b16 %v3669, %v3668
    %v3717 = vpack.c.b16 %v3671, %v3670
    %v3718 = vpack.c.b16 %v3673, %v3672
    %v3719 = vpack.c.b16 %v3675, %v3674
    %v3720 = vpack.c.b16 %v3677, %v3676
    %v3721 = vpack.c.b16 %v3679, %v3678
    %v3722 = vpack.c.b16 %v3681, %v3680
    %v3723 = vpack.c.b16 %v3683, %v3682
    %v3724 = vpack.c.b16 %v3685, %v3684
    %v3725 = vpack.c.b16 %v3687, %v3686
    %v3726 = vpack.c.b16 %v3689, %v3688
    %v3727 = vpack.c.b16 %v3691, %v3690
    %v3765 = vsel %vm1051, %v3468, 0
    %3767 = vmatprep.subr.bf16.mxu0 0
    %3768 = vmatpush1.bf16.msra.mxu0 %v3692
    %3769 = vmatprep.subr.bf16.mxu0 0
    %3770 = vmatpush1.bf16.msra.mxu0 %v3693
    %3771 = vmatprep.subr.bf16.mxu0 0
    %3772 = vmatpush1.bf16.msra.mxu0 %v3694
    %3773 = vmatprep.subr.bf16.mxu0 0
    %3774 = vmatpush1.bf16.msra.mxu0 %v3695
    %3775 = vmatprep.subr.bf16.mxu0 0
    %3776 = vmatpush1.bf16.msra.mxu0 %v3696
    %3777 = vmatprep.subr.bf16.mxu0 0
    %3778 = vmatpush1.bf16.msra.mxu0 %v3697
    %3779 = vmatprep.subr.bf16.mxu0 0
    %3780 = vmatpush1.bf16.msra.mxu0 %v3698
    %3781 = vmatprep.subr.bf16.mxu0 0
    %3782 = vmatpush1.bf16.msra.mxu0 %v3699
    %3783 = vmatprep.subr.bf16.mxu0 0
    %3784 = vmatpush1.bf16.msra.mxu0 %v3700
    %3785 = vmatprep.subr.bf16.mxu0 0
    %3786 = vmatpush1.bf16.msra.mxu0 %v3701
    %3787 = vmatprep.subr.bf16.mxu0 0
    %3788 = vmatpush1.bf16.msra.mxu0 %v3702
    %3789 = vmatprep.subr.bf16.mxu0 0
    %3790 = vmatpush1.bf16.msra.mxu0 %v3703
    %3791 = vmatprep.subr.bf16.mxu0 0
    %3792 = vmatpush1.bf16.msra.mxu0 %v3704
    %3793 = vmatprep.subr.bf16.mxu0 0
    %3794 = vmatpush1.bf16.msra.mxu0 %v3705
    %3795 = vmatprep.subr.bf16.mxu0 0
    %3796 = vmatpush1.bf16.msra.mxu0 %v3706
    %3797 = vmatprep.subr.bf16.mxu0 0
    %3798 = vmatpush1.bf16.msra.mxu0 %v3707
    %3799 = vmatprep.mubr.bf16.mxu0 %v3465
    %3800 = vmatmul.mubr.bf16.gmra.mrb[0].mxu0 %v3464
    %v3801 = vpop.f32.mrb[0].mxu0
    %v3802 = vadd.f32 %v3546, %v3801
    %v3803 = vpop.f32.mrb[0].mxu0
    %v3804 = vpop.f32.mrb[0].mxu0
    %v3805 = vpop.f32.mrb[0].mxu0
    %3806 = vdwg.mxu0
    %3807 = vmatprep.subr.bf16.mxu0 0
    %3808 = vmatpush1.bf16.msra.mxu0 %v3708
    %3809 = vmatprep.subr.bf16.mxu0 0
    %3810 = vmatpush1.bf16.msra.mxu0 %v3709
    %3811 = vmatprep.subr.bf16.mxu0 0
    %3812 = vmatpush1.bf16.msra.mxu0 %v3710
    %3813 = vmatprep.subr.bf16.mxu0 0
    %3814 = vmatpush1.bf16.msra.mxu0 %v3711
    %3815 = vmatprep.subr.bf16.mxu0 0
    %3816 = vmatpush1.bf16.msra.mxu0 %v3712
    %3817 = vmatprep.subr.bf16.mxu0 0
    %3818 = vmatpush1.bf16.msra.mxu0 %v3713
    %3819 = vmatprep.subr.bf16.mxu0 0
    %3820 = vmatpush1.bf16.msra.mxu0 %v3714
    %3821 = vmatprep.subr.bf16.mxu0 0
    %3822 = vmatpush1.bf16.msra.mxu0 %v3715
    %3823 = vmatprep.subr.bf16.mxu0 0
    %3824 = vmatpush1.bf16.msra.mxu0 %v3716
    %3825 = vmatprep.subr.bf16.mxu0 0
    %3826 = vmatpush1.bf16.msra.mxu0 %v3717
    %3827 = vmatprep.subr.bf16.mxu0 0
    %3828 = vmatpush1.bf16.msra.mxu0 %v3718
    %3829 = vmatprep.subr.bf16.mxu0 0
    %3830 = vmatpush1.bf16.msra.mxu0 %v3719
    %3831 = vmatprep.subr.bf16.mxu0 0
    %3832 = vmatpush1.bf16.msra.mxu0 %v3720
    %3833 = vmatprep.subr.bf16.mxu0 0
    %3834 = vmatpush1.bf16.msra.mxu0 %v3721
    %3835 = vmatprep.subr.bf16.mxu0 0
    %3836 = vmatpush1.bf16.msra.mxu0 %v3722
    %3837 = vmatprep.subr.bf16.mxu0 0
    %3838 = vmatpush1.bf16.msra.mxu0 %v3723
    %3839 = vmatprep.mubr.bf16.mxu0 %v3467
    %3840 = vmatmul.mubr.bf16.gmra.mrb[0].mxu0 %v3466
    %v3841 = vpop.f32.mrb[0].mxu0
    %v3842 = vadd.f32 %v3802, %v3841
    %v3843 = vpop.f32.mrb[0].mxu0
    %v3844 = vpop.f32.mrb[0].mxu0
    %v3845 = vpop.f32.mrb[0].mxu0
    %3846 = vdwg.mxu0
    %3847 = vmatprep.subr.bf16.mxu0 0
    %3848 = vmatpush1.bf16.msra.mxu0 %v3724
    %3849 = vmatprep.subr.bf16.mxu0 0
    %3850 = vmatpush1.bf16.msra.mxu0 %v3725
    %3851 = vmatprep.subr.bf16.mxu0 0
    %3852 = vmatpush1.bf16.msra.mxu0 %v3726
    %3853 = vmatprep.subr.bf16.mxu0 0
    %3854 = vmatpush1.bf16.msra.mxu0 %v3727
    %3855 = vmatprep.subr.bf16.mxu0 0
    %3856 = vmatpush1.bf16.msra.mxu0 0
    %3857 = vmatprep.subr.bf16.mxu0 0
    %3858 = vmatpush1.bf16.msra.mxu0 0
    %3859 = vmatprep.subr.bf16.mxu0 0
    %3860 = vmatpush1.bf16.msra.mxu0 0
    %3861 = vmatprep.subr.bf16.mxu0 0
    %3862 = vmatpush1.bf16.msra.mxu0 0
    %3863 = vmatprep.subr.bf16.mxu0 0
    %3864 = vmatpush1.bf16.msra.mxu0 0
    %3865 = vmatprep.subr.bf16.mxu0 0
    %3866 = vmatpush1.bf16.msra.mxu0 0
    %3867 = vmatprep.subr.bf16.mxu0 0
    %3868 = vmatpush1.bf16.msra.mxu0 0
    %3869 = vmatprep.subr.bf16.mxu0 0
    %3870 = vmatpush1.bf16.msra.mxu0 0
    %3871 = vmatprep.subr.bf16.mxu0 0
    %3872 = vmatpush1.bf16.msra.mxu0 0
    %3873 = vmatprep.subr.bf16.mxu0 0
    %3874 = vmatpush1.bf16.msra.mxu0 0
    %3875 = vmatprep.subr.bf16.mxu0 0
    %3876 = vmatpush1.bf16.msra.mxu0 0
    %3877 = vmatprep.subr.bf16.mxu0 0
    %3878 = vmatpush1.bf16.msra.mxu0 0
    %3879 = vmatprep.mubr.bf16.mxu0 0
    %3880 = vmatmul.mubr.bf16.gmra.mrb[0].mxu0 %v3765
    %v3881 = vpop.f32.mrb[0].mxu0
    %v3882 = vadd.f32 %v3842, %v3881
    %v3883 = vpop.f32.mrb[0].mxu0
    %v3884 = vpop.f32.mrb[0].mxu0
    %v3885 = vpop.f32.mrb[0].mxu0
    %3886 = vdwg.mxu0
    %vm3887 = vcmask 74752
    %3888 = vst.msk [vmem:[#allocation2] sm:$0x3] %vm3887, %v3882
    // Predicated region
    $region38: #{auxiliary_head_forward.1} parent=1 // pred_check
      _
    $region39: #{auxiliary_head_forward.1} parent=1 // pred_check_branch
      %3890 = sbr.rel (0) target = $region41
    $region40: #{auxiliary_head_forward.1} parent=1 // pred_region
      %s3892 = ssub.s32 32, 32
      %3893 = vsyncadd [#allocation3], %s3892
      %s3895 = sshll.u32 [#allocation2], 4
      %s3896 = int_to_ptr.vmem [resolvable:$true] %s3895
      %3898 = dma.vmem_to_hbm [thread:$0]  %s3896, 32, %s9, [#allocation3]
    $region41: #{auxiliary_head_forward.1} parent=1 // pred_fallthru
      _
    // Predicated region
    $region42: #{auxiliary_head_forward.1} parent=1 // pred_check
      _
    $region43: #{auxiliary_head_forward.1} parent=1 // pred_check_branch
      %3900 = sbr.rel (0) target = $region45
    $region44: #{auxiliary_head_forward.1} parent=1 // pred_region
      %3901 = dma.done [#allocation3], 32
    $region45: #{auxiliary_head_forward.1} parent=1 // pred_fallthru
      _
    %3902 = vsyncpa [#allocation3], 1

</llo_original>
